<compile_context>
chip_gen: v6e
topology: v6e:2x2x1
jax: 0.10.0
libtpu: 0.0.40
codegen_flags: <defaults>
</compile_context>

<pallas_src>
import functools

import jax
import jax.numpy as jnp
from jax import lax
from jax.experimental import pallas as pl
from jax.experimental.pallas import tpu as pltpu

COS_EPS = 1e-8  # F.cosine_similarity default eps


# ------------------------------ Pallas kernel ------------------------------ #
def _temblock_kernel(patches_ref, w1_ref, b1_ref, w2_ref, b2_ref,
                     w3_ref, b3_ref, w4_ref, b4_ref, o_ref,
                     add1_scr, mm1_scr, *, n_batch, hw, eps):
    C = w4_ref.shape[1]
    step = pl.program_id(0)

    # -------- Phase 0 (grid step 0): conv1 -> GAP -> conv2/3 -> gating -> mm1
    @pl.when(step == 0)
    def _phase0():
        # conv1 (3x3, stride 1, pad 1) for ALL batches as one bf16 GEMM
        # with f32 accumulation: [N*HW, Kpad] @ [Kpad, C] + bias.
        conv1_all = (jnp.dot(patches_ref[...], w1_ref[...],
                             preferred_element_type=jnp.float32)
                     + b1_ref[...])                               # [N*HW, C] f32

        # Batched GAP over spatial -> [N, C]; ONE matmul each for conv2/conv3.
        gap1 = jnp.concatenate(
            [jnp.mean(conv1_all[n * hw:(n + 1) * hw, :], axis=0, keepdims=True)
             for n in range(n_batch)], axis=0)                    # [N, C] f32
        conv2 = (jnp.dot(gap1.astype(jnp.bfloat16), w2_ref[...],
                         preferred_element_type=jnp.float32) + b2_ref[...])
        conv3 = (jnp.dot(conv2.astype(jnp.bfloat16), w3_ref[...],
                         preferred_element_type=jnp.float32) + b3_ref[...])  # [N, C]

        for n in range(n_batch):                 # N is tiny & static: unrolled
            conv1_n = conv1_all[n * hw:(n + 1) * hw, :]           # [HW, C] f32
            g = conv3[n:n + 1, :]                                 # [1, C]
            add1 = conv1_n + conv1_n * g                          # [HW, C] f32
            add1_scr[n] = add1.astype(jnp.bfloat16)               # stage for epilogue

            gap2 = jnp.mean(add1, axis=0, keepdims=True)          # [1, C]
            # Cosine similarity along channels (lanes); rsqrt -> EUP slot.
            num = jnp.sum(add1 * gap2, axis=-1, keepdims=True)    # [HW, 1]
            na2 = jnp.sum(add1 * add1, axis=-1, keepdims=True)
            nb2 = jnp.sum(gap2 * gap2, axis=-1, keepdims=True)
            cos = num * lax.rsqrt(jnp.maximum(na2 * nb2, eps * eps))  # [HW, 1]

            # mm1 += cos @ cos.T  (rank-1 update, kept in f32).
            outer = lax.dot_general(cos, cos, (((1,), (1,)), ((), ())),
                                    preferred_element_type=jnp.float32)
            if n == 0:
                mm1_scr[...] = outer
            else:
                mm1_scr[...] += outer

    # -------- Epilogue (every grid step): conv4 + mm2 for batch == step ----
    b = step
    add1_b = add1_scr[b]                                          # [HW, C] bf16
    conv4 = (jnp.dot(add1_b, w4_ref[...],
                     preferred_element_type=jnp.float32) + b4_ref[...])  # [HW, C] f32
    # torch: conv4.permute(0,2,3,1).reshape(N, C, H*W).  Per batch this is a
    # row-major reinterpretation of the [HW, C] matrix as [C, HW]; identity on
    # the raw buffer when HW == C (H=W=16, C=256, the exercised config).
    if hw == C:
        r2 = conv4
    else:
        # TODO(synk): HW != C path is an in-kernel row-major relayout; only the
        # HW == C configuration is exercised.
        r2 = conv4.reshape(C, hw)
    mm2 = jnp.dot(r2.astype(jnp.bfloat16), mm1_scr[...].astype(jnp.bfloat16),
                  preferred_element_type=jnp.float32)             # [C, HW]
    o_ref[0] = mm2.astype(o_ref.dtype)


# --------------------------------- Wrapper --------------------------------- #
def _im2col_3x3_s1_p1(x_nhwc):
    """[N,H,W,Cin] -> [N*H*W, 9*Cin] patches (3x3, stride 1, pad 1)."""
    N, H, W, Cin = x_nhwc.shape
    xp = jnp.pad(x_nhwc, ((0, 0), (1, 1), (1, 1), (0, 0)))
    cols = [xp[:, i:i + H, j:j + W, :] for i in range(3) for j in range(3)]
    patches = jnp.stack(cols, axis=3)                 # [N, H, W, 9, Cin]
    return patches.reshape(N * H * W, 9 * Cin)


def prepare_params(params):
    """PyTorch-layout params -> kernel layout (bf16 weights, padded w1). Once."""
    w1, b1, w2, b2, w3, b3, w4, b4 = params
    cout, cin, kh, kw = w1.shape
    k = kh * kw * cin
    kpad = ((k + 127) // 128) * 128                    # lane-dense K for conv1 GEMM
    w1m = jnp.transpose(w1, (2, 3, 1, 0)).reshape(k, cout)
    w1m = jnp.pad(w1m, ((0, kpad - k), (0, 0))).astype(jnp.bfloat16)
    mat = lambda w: jnp.transpose(w[:, :, 0, 0], (1, 0)).astype(jnp.bfloat16)
    row = lambda b: b.reshape(1, -1).astype(jnp.float32)   # biases stay f32
    return (w1m, row(b1), mat(w2), row(b2), mat(w3), row(b3), mat(w4), row(b4))


@jax.jit
def temblock_forward(x_nchw, prepared):
    """Full TemBlock forward; returns NCHW [N, 256, H, W] like PyTorch."""
    w1m, b1r, w2m, b2r, w3m, b3r, w4m, b4r = prepared
    N, _, H, W = x_nchw.shape
    C = w1m.shape[1]
    HW = H * W
    kpad = w1m.shape[0]

    patches = _im2col_3x3_s1_p1(jnp.transpose(x_nchw, (0, 2, 3, 1)))
    patches = jnp.pad(patches, ((0, 0), (0, kpad - patches.shape[1])))
    patches = patches.astype(jnp.bfloat16)             # lane-dense bf16 GEMM LHS

    def full(shape):                                    # full-array, resident block
        return pl.BlockSpec(shape, lambda n: (0,) * len(shape))

    args = (patches, w1m, b1r, w2m, b2r, w3m, b3r, w4m, b4r)
    out = pl.pallas_call(
        functools.partial(_temblock_kernel, n_batch=N, hw=HW, eps=COS_EPS),
        out_shape=jax.ShapeDtypeStruct((N, C, HW), jnp.float32),
        grid=(N,),
        in_specs=[full(a.shape) for a in args],
        out_specs=pl.BlockSpec((1, C, HW), lambda n: (n, 0, 0)),
        scratch_shapes=[pltpu.VMEM((N, HW, C), jnp.bfloat16),   # staged add1
                        pltpu.VMEM((HW, HW), jnp.float32)],      # mm1 accumulator
        compiler_params=pltpu.CompilerParams(
            dimension_semantics=("arbitrary",)),        # scratch carried across steps
    )(*args)
    # reshape3 / permute2: [N, C, HW] -> [N, C, H, W] (free, row-major)
    return out.reshape(N, C, H, W)


# ----------------------------- Pure-JAX reference --------------------------- #
def _conv_nchw(x, w, b, pad):
    y = lax.conv_general_dilated(
        x, w, window_strides=(1, 1),
        padding=((pad, pad), (pad, pad)),
        dimension_numbers=("NCHW", "OIHW", "NCHW"),
        precision=lax.Precision.HIGHEST)
    return y + b[None, :, None, None]


def _ref_forward(x, params):
    w1, b1, w2, b2, w3, b3, w4, b4 = params
    conv1 = _conv_nchw(x, w1, b1, 1)
    gap1 = jnp.mean(conv1, axis=(2, 3), keepdims=True)
    conv2 = _conv_nchw(gap1, w2, b2, 0)
    conv3 = _conv_nchw(conv2, w3, b3, 0)
    add1 = conv1 + conv1 * conv3
    gap2 = jnp.mean(add1, axis=(2, 3), keepdims=True)
    num = jnp.sum(gap2 * add1, axis=1)
    na = jnp.sqrt(jnp.sum(add1 * add1, axis=1))
    nb = jnp.sqrt(jnp.sum(gap2 * gap2, axis=1))
    cos = num / jnp.maximum(na * nb, COS_EPS)                   # [N, H, W]
    reshape1 = cos.reshape(cos.shape[0], -1)                    # [N, HW]
    mm1 = jnp.matmul(reshape1.T, reshape1, precision=lax.Precision.HIGHEST)
    conv4 = _conv_nchw(add1, w4, b4, 0)
    permute1 = jnp.transpose(conv4, (0, 2, 3, 1))               # [N, H, W, C]
    Nb, H, W, _ = permute1.shape
    reshape2 = permute1.reshape(Nb, -1, H * W)                  # [N, C, HW]
    mm2 = jnp.matmul(reshape2, mm1, precision=lax.Precision.HIGHEST)
    return mm2.reshape(Nb, -1, H, W)


def init_temblock_params(key, in_channels, c=256):
    ks = jax.random.split(key, 8)
    w1 = 0.1 * jax.random.normal(ks[0], (c, in_channels, 3, 3), jnp.float32)
    b1 = 0.1 * jax.random.normal(ks[1], (c,), jnp.float32)
    w2 = 0.05 * jax.random.normal(ks[2], (c, c, 1, 1), jnp.float32)
    b2 = 0.05 * jax.random.normal(ks[3], (c,), jnp.float32)
    w3 = 0.05 * jax.random.normal(ks[4], (c, c, 1, 1), jnp.float32)
    b3 = 0.05 * jax.random.normal(ks[5], (c,), jnp.float32)
    w4 = 0.05 * jax.random.normal(ks[6], (c, c, 1, 1), jnp.float32)
    b4 = 0.05 * jax.random.normal(ks[7], (c,), jnp.float32)
    return (w1, b1, w2, b2, w3, b3, w4, b4)


if __name__ == "__main__":
    key = jax.random.PRNGKey(0)
    kx, kp = jax.random.split(key)

    N, Cin, H, W, C = 2, 4, 16, 16, 256
    x = jax.random.normal(kx, (N, Cin, H, W), jnp.float32)      # NCHW like PyTorch
    params = init_temblock_params(kp, Cin, C)
    prepared = prepare_params(params)

    out = jax.block_until_ready(temblock_forward(x, prepared))
    assert out.shape == (N, C, H, W)

    ref = _ref_forward(x, params)
    assert jnp.allclose(out, ref, rtol=2e-2, atol=2e-2), "mismatch vs reference"

    print("KERNEL_OK")
</pallas_src>

<mosaic_0001>
module attributes {stable_mosaic.version = 11 : i64} {
  func.func @_temblock_kernel(%arg0: i32, %arg1: memref<512x128xbf16, #tpu.memory_space<vmem>>, %arg2: memref<128x256xbf16, #tpu.memory_space<vmem>>, %arg3: memref<1x256xf32, #tpu.memory_space<vmem>>, %arg4: memref<256x256xbf16, #tpu.memory_space<vmem>>, %arg5: memref<1x256xf32, #tpu.memory_space<vmem>>, %arg6: memref<256x256xbf16, #tpu.memory_space<vmem>>, %arg7: memref<1x256xf32, #tpu.memory_space<vmem>>, %arg8: memref<256x256xbf16, #tpu.memory_space<vmem>>, %arg9: memref<1x256xf32, #tpu.memory_space<vmem>>, %arg10: memref<1x256x256xf32, #tpu.memory_space<vmem>>, %arg11: memref<2x256x256xbf16, #tpu.memory_space<vmem>>, %arg12: memref<256x256xf32, #tpu.memory_space<vmem>>) attributes {dimension_semantics = [#tpu.dimension_semantics<arbitrary>], iteration_bounds = array<i64: 2>, scalar_prefetch = 0 : i64, scratch_operands = 2 : i64, tpu.core_type = #tpu.core_type<tc>, window_params = [{pipeline_mode = #tpu.pipeline_mode<synchronous>, transform_indices = @transform_0, window_bounds = array<i64: 512, 128>}, {pipeline_mode = #tpu.pipeline_mode<synchronous>, transform_indices = @transform_1, window_bounds = array<i64: 128, 256>}, {pipeline_mode = #tpu.pipeline_mode<synchronous>, transform_indices = @transform_2, window_bounds = array<i64: 1, 256>}, {pipeline_mode = #tpu.pipeline_mode<synchronous>, transform_indices = @transform_3, window_bounds = array<i64: 256, 256>}, {pipeline_mode = #tpu.pipeline_mode<synchronous>, transform_indices = @transform_4, window_bounds = array<i64: 1, 256>}, {pipeline_mode = #tpu.pipeline_mode<synchronous>, transform_indices = @transform_5, window_bounds = array<i64: 256, 256>}, {pipeline_mode = #tpu.pipeline_mode<synchronous>, transform_indices = @transform_6, window_bounds = array<i64: 1, 256>}, {pipeline_mode = #tpu.pipeline_mode<synchronous>, transform_indices = @transform_7, window_bounds = array<i64: 256, 256>}, {pipeline_mode = #tpu.pipeline_mode<synchronous>, transform_indices = @transform_8, window_bounds = array<i64: 1, 256>}, {transform_indices = @transform_9, window_bounds = array<i64: 1, 256, 256>}]} {
    %c0_i32 = arith.constant 0 : i32
    %0 = arith.cmpi eq, %arg0, %c0_i32 : i32
    %1 = arith.extui %0 : i1 to i32
    %c0_i32_0 = arith.constant 0 : i32
    %2 = arith.cmpi ne, %1, %c0_i32_0 : i32
    scf.if %2 {
      %c0_12 = arith.constant 0 : index
      %c0_13 = arith.constant 0 : index
      %18 = vector.load %arg1[%c0_12, %c0_13] : memref<512x128xbf16, #tpu.memory_space<vmem>>, vector<512x128xbf16>
      %c0_14 = arith.constant 0 : index
      %c0_15 = arith.constant 0 : index
      %19 = vector.load %arg2[%c0_14, %c0_15] : memref<128x256xbf16, #tpu.memory_space<vmem>>, vector<128x256xbf16>
      %cst_16 = arith.constant dense<0.000000e+00> : vector<512x256xf32>
      %20 = tpu.matmul %18, %19, %cst_16 {dimension_numbers = #tpu.dot_dimension_numbers<[1], [0], [0], [1], [0, 0, 1, 1], [], []>} : vector<512x128xbf16>, vector<128x256xbf16>, vector<512x256xf32> -> vector<512x256xf32>
      %c0_17 = arith.constant 0 : index
      %c0_18 = arith.constant 0 : index
      %21 = vector.load %arg3[%c0_17, %c0_18] : memref<1x256xf32, #tpu.memory_space<vmem>>, vector<1x256xf32>
      %22 = vector.broadcast %21 : vector<1x256xf32> to vector<512x256xf32>
      %23 = arith.addf %20, %22 : vector<512x256xf32>
      %24 = vector.extract_strided_slice %23 {offsets = [0, 0], sizes = [256, 256], strides = [1, 1]} : vector<512x256xf32> to vector<256x256xf32>
      %cst_19 = arith.constant dense<0.000000e+00> : vector<256xf32>
      %25 = vector.multi_reduction <add>, %24, %cst_19 [0] : vector<256x256xf32> to vector<256xf32>
      %26 = vector.shape_cast %25 : vector<256xf32> to vector<1x256xf32>
      %cst_20 = arith.constant 2.560000e+02 : f32
      %27 = vector.broadcast %cst_20 : f32 to vector<1x256xf32>
      %28 = arith.divf %26, %27 : vector<1x256xf32>
      %29 = vector.extract_strided_slice %23 {offsets = [256, 0], sizes = [256, 256], strides = [1, 1]} : vector<512x256xf32> to vector<256x256xf32>
      %cst_21 = arith.constant dense<0.000000e+00> : vector<256xf32>
      %30 = vector.multi_reduction <add>, %29, %cst_21 [0] : vector<256x256xf32> to vector<256xf32>
      %31 = vector.shape_cast %30 : vector<256xf32> to vector<1x256xf32>
      %cst_22 = arith.constant 2.560000e+02 : f32
      %32 = vector.broadcast %cst_22 : f32 to vector<1x256xf32>
      %33 = arith.divf %31, %32 : vector<1x256xf32>
      %34 = tpu.concatenate %28, %33 in 0 : vector<1x256xf32>, vector<1x256xf32> -> vector<2x256xf32>
      %35 = arith.truncf %34 : vector<2x256xf32> to vector<2x256xbf16>
      %c0_23 = arith.constant 0 : index
      %c0_24 = arith.constant 0 : index
      %36 = vector.load %arg4[%c0_23, %c0_24] : memref<256x256xbf16, #tpu.memory_space<vmem>>, vector<256x256xbf16>
      %cst_25 = arith.constant dense<0.000000e+00> : vector<2x256xf32>
      %37 = tpu.matmul %35, %36, %cst_25 {dimension_numbers = #tpu.dot_dimension_numbers<[1], [0], [0], [1], [0, 0, 1, 1], [], []>} : vector<2x256xbf16>, vector<256x256xbf16>, vector<2x256xf32> -> vector<2x256xf32>
      %c0_26 = arith.constant 0 : index
      %c0_27 = arith.constant 0 : index
      %38 = vector.load %arg5[%c0_26, %c0_27] : memref<1x256xf32, #tpu.memory_space<vmem>>, vector<1x256xf32>
      %39 = vector.broadcast %38 : vector<1x256xf32> to vector<2x256xf32>
      %40 = arith.addf %37, %39 : vector<2x256xf32>
      %41 = arith.truncf %40 : vector<2x256xf32> to vector<2x256xbf16>
      %c0_28 = arith.constant 0 : index
      %c0_29 = arith.constant 0 : index
      %42 = vector.load %arg6[%c0_28, %c0_29] : memref<256x256xbf16, #tpu.memory_space<vmem>>, vector<256x256xbf16>
      %cst_30 = arith.constant dense<0.000000e+00> : vector<2x256xf32>
      %43 = tpu.matmul %41, %42, %cst_30 {dimension_numbers = #tpu.dot_dimension_numbers<[1], [0], [0], [1], [0, 0, 1, 1], [], []>} : vector<2x256xbf16>, vector<256x256xbf16>, vector<2x256xf32> -> vector<2x256xf32>
      %c0_31 = arith.constant 0 : index
      %c0_32 = arith.constant 0 : index
      %44 = vector.load %arg7[%c0_31, %c0_32] : memref<1x256xf32, #tpu.memory_space<vmem>>, vector<1x256xf32>
      %45 = vector.broadcast %44 : vector<1x256xf32> to vector<2x256xf32>
      %46 = arith.addf %43, %45 : vector<2x256xf32>
      %47 = vector.extract_strided_slice %23 {offsets = [0, 0], sizes = [256, 256], strides = [1, 1]} : vector<512x256xf32> to vector<256x256xf32>
      %48 = vector.extract_strided_slice %46 {offsets = [0, 0], sizes = [1, 256], strides = [1, 1]} : vector<2x256xf32> to vector<1x256xf32>
      %49 = vector.broadcast %48 : vector<1x256xf32> to vector<256x256xf32>
      %50 = arith.mulf %47, %49 : vector<256x256xf32>
      %51 = arith.addf %47, %50 : vector<256x256xf32>
      %52 = arith.truncf %51 : vector<256x256xf32> to vector<256x256xbf16>
      %c0_33 = arith.constant 0 : index
      %c0_34 = arith.constant 0 : index
      %c0_35 = arith.constant 0 : index
      %53 = vector.load %arg11[%c0_33, %c0_34, %c0_35] : memref<2x256x256xbf16, #tpu.memory_space<vmem>>, vector<1x256x256xbf16>
      %54 = vector.shape_cast %53 : vector<1x256x256xbf16> to vector<256x256xbf16>
      %55 = vector.shape_cast %52 : vector<256x256xbf16> to vector<1x256x256xbf16>
      tpu.vector_store %arg11[%c0_33, %c0_34, %c0_35], %55 {strides = array<i32>} : memref<2x256x256xbf16, #tpu.memory_space<vmem>>, vector<1x256x256xbf16>,
      %cst_36 = arith.constant dense<0.000000e+00> : vector<256xf32>
      %56 = vector.multi_reduction <add>, %51, %cst_36 [0] : vector<256x256xf32> to vector<256xf32>
      %57 = vector.shape_cast %56 : vector<256xf32> to vector<1x256xf32>
      %cst_37 = arith.constant 2.560000e+02 : f32
      %58 = vector.broadcast %cst_37 : f32 to vector<1x256xf32>
      %59 = arith.divf %57, %58 : vector<1x256xf32>
      %60 = vector.broadcast %59 : vector<1x256xf32> to vector<256x256xf32>
      %61 = arith.mulf %51, %60 : vector<256x256xf32>
      %cst_38 = arith.constant dense<0.000000e+00> : vector<256xf32>
      %62 = vector.multi_reduction <add>, %61, %cst_38 [1] : vector<256x256xf32> to vector<256xf32>
      %63 = vector.shape_cast %62 : vector<256xf32> to vector<256x1xf32>
      %64 = arith.mulf %51, %51 : vector<256x256xf32>
      %cst_39 = arith.constant dense<0.000000e+00> : vector<256xf32>
      %65 = vector.multi_reduction <add>, %64, %cst_39 [1] : vector<256x256xf32> to vector<256xf32>
      %66 = vector.shape_cast %65 : vector<256xf32> to vector<256x1xf32>
      %67 = arith.mulf %59, %59 : vector<1x256xf32>
      %cst_40 = arith.constant dense<0.000000e+00> : vector<1xf32>
      %68 = vector.multi_reduction <add>, %67, %cst_40 [1] : vector<1x256xf32> to vector<1xf32>
      %69 = vector.shape_cast %68 : vector<1xf32> to vector<1x1xf32>
      %70 = vector.broadcast %69 : vector<1x1xf32> to vector<256x1xf32>
      %71 = arith.mulf %66, %70 : vector<256x1xf32>
      %cst_41 = arith.constant 1.000000e-16 : f32
      %72 = vector.broadcast %cst_41 : f32 to vector<256x1xf32>
      %73 = arith.maximumf %71, %72 : vector<256x1xf32>
      %74 = math.rsqrt %73 : vector<256x1xf32>
      %75 = arith.mulf %63, %74 : vector<256x1xf32>
      %cst_42 = arith.constant dense<0.000000e+00> : vector<256x256xf32>
      %76 = tpu.matmul %75, %75, %cst_42 {dimension_numbers = #tpu.dot_dimension_numbers<[1], [1], [0], [0], [0, 0, 1, 0], [], []>} : vector<256x1xf32>, vector<256x1xf32>, vector<256x256xf32> -> vector<256x256xf32>
      %c0_43 = arith.constant 0 : index
      %c0_44 = arith.constant 0 : index
      %77 = vector.load %arg12[%c0_43, %c0_44] : memref<256x256xf32, #tpu.memory_space<vmem>>, vector<256x256xf32>
      tpu.vector_store %arg12[%c0_43, %c0_44], %76 {strides = array<i32>} : memref<256x256xf32, #tpu.memory_space<vmem>>, vector<256x256xf32>,
      %78 = vector.extract_strided_slice %23 {offsets = [256, 0], sizes = [256, 256], strides = [1, 1]} : vector<512x256xf32> to vector<256x256xf32>
      %79 = vector.extract_strided_slice %46 {offsets = [1, 0], sizes = [1, 256], strides = [1, 1]} : vector<2x256xf32> to vector<1x256xf32>
      %80 = vector.broadcast %79 : vector<1x256xf32> to vector<256x256xf32>
      %81 = arith.mulf %78, %80 : vector<256x256xf32>
      %82 = arith.addf %78, %81 : vector<256x256xf32>
      %83 = arith.truncf %82 : vector<256x256xf32> to vector<256x256xbf16>
      %c1 = arith.constant 1 : index
      %c0_45 = arith.constant 0 : index
      %c0_46 = arith.constant 0 : index
      %84 = vector.load %arg11[%c1, %c0_45, %c0_46] : memref<2x256x256xbf16, #tpu.memory_space<vmem>>, vector<1x256x256xbf16>
      %85 = vector.shape_cast %84 : vector<1x256x256xbf16> to vector<256x256xbf16>
      %86 = vector.shape_cast %83 : vector<256x256xbf16> to vector<1x256x256xbf16>
      tpu.vector_store %arg11[%c1, %c0_45, %c0_46], %86 {strides = array<i32>} : memref<2x256x256xbf16, #tpu.memory_space<vmem>>, vector<1x256x256xbf16>,
      %cst_47 = arith.constant dense<0.000000e+00> : vector<256xf32>
      %87 = vector.multi_reduction <add>, %82, %cst_47 [0] : vector<256x256xf32> to vector<256xf32>
      %88 = vector.shape_cast %87 : vector<256xf32> to vector<1x256xf32>
      %cst_48 = arith.constant 2.560000e+02 : f32
      %89 = vector.broadcast %cst_48 : f32 to vector<1x256xf32>
      %90 = arith.divf %88, %89 : vector<1x256xf32>
      %91 = vector.broadcast %90 : vector<1x256xf32> to vector<256x256xf32>
      %92 = arith.mulf %82, %91 : vector<256x256xf32>
      %cst_49 = arith.constant dense<0.000000e+00> : vector<256xf32>
      %93 = vector.multi_reduction <add>, %92, %cst_49 [1] : vector<256x256xf32> to vector<256xf32>
      %94 = vector.shape_cast %93 : vector<256xf32> to vector<256x1xf32>
      %95 = arith.mulf %82, %82 : vector<256x256xf32>
      %cst_50 = arith.constant dense<0.000000e+00> : vector<256xf32>
      %96 = vector.multi_reduction <add>, %95, %cst_50 [1] : vector<256x256xf32> to vector<256xf32>
      %97 = vector.shape_cast %96 : vector<256xf32> to vector<256x1xf32>
      %98 = arith.mulf %90, %90 : vector<1x256xf32>
      %cst_51 = arith.constant dense<0.000000e+00> : vector<1xf32>
      %99 = vector.multi_reduction <add>, %98, %cst_51 [1] : vector<1x256xf32> to vector<1xf32>
      %100 = vector.shape_cast %99 : vector<1xf32> to vector<1x1xf32>
      %101 = vector.broadcast %100 : vector<1x1xf32> to vector<256x1xf32>
      %102 = arith.mulf %97, %101 : vector<256x1xf32>
      %cst_52 = arith.constant 1.000000e-16 : f32
      %103 = vector.broadcast %cst_52 : f32 to vector<256x1xf32>
      %104 = arith.maximumf %102, %103 : vector<256x1xf32>
      %105 = math.rsqrt %104 : vector<256x1xf32>
      %106 = arith.mulf %94, %105 : vector<256x1xf32>
      %cst_53 = arith.constant dense<0.000000e+00> : vector<256x256xf32>
      %107 = tpu.matmul %106, %106, %cst_53 {dimension_numbers = #tpu.dot_dimension_numbers<[1], [1], [0], [0], [0, 0, 1, 0], [], []>} : vector<256x1xf32>, vector<256x1xf32>, vector<256x256xf32> -> vector<256x256xf32>
      %c0_54 = arith.constant 0 : index
      %c0_55 = arith.constant 0 : index
      %108 = vector.load %arg12[%c0_54, %c0_55] : memref<256x256xf32, #tpu.memory_space<vmem>>, vector<256x256xf32>
      %109 = arith.addf %108, %107 : vector<256x256xf32>
      %c0_56 = arith.constant 0 : index
      %c0_57 = arith.constant 0 : index
      %110 = vector.load %arg12[%c0_56, %c0_57] : memref<256x256xf32, #tpu.memory_space<vmem>>, vector<256x256xf32>
      tpu.vector_store %arg12[%c0_56, %c0_57], %109 {strides = array<i32>} : memref<256x256xf32, #tpu.memory_space<vmem>>, vector<256x256xf32>,
    } else {
    }
    %3 = arith.index_cast %arg0 : i32 to index
    %c0 = arith.constant 0 : index
    %c0_1 = arith.constant 0 : index
    %4 = vector.load %arg11[%3, %c0, %c0_1] : memref<2x256x256xbf16, #tpu.memory_space<vmem>>, vector<1x256x256xbf16>
    %5 = vector.shape_cast %4 : vector<1x256x256xbf16> to vector<256x256xbf16>
    %c0_2 = arith.constant 0 : index
    %c0_3 = arith.constant 0 : index
    %6 = vector.load %arg8[%c0_2, %c0_3] : memref<256x256xbf16, #tpu.memory_space<vmem>>, vector<256x256xbf16>
    %cst = arith.constant dense<0.000000e+00> : vector<256x256xf32>
    %7 = tpu.matmul %5, %6, %cst {dimension_numbers = #tpu.dot_dimension_numbers<[1], [0], [0], [1], [0, 0, 1, 1], [], []>} : vector<256x256xbf16>, vector<256x256xbf16>, vector<256x256xf32> -> vector<256x256xf32>
    %c0_4 = arith.constant 0 : index
    %c0_5 = arith.constant 0 : index
    %8 = vector.load %arg9[%c0_4, %c0_5] : memref<1x256xf32, #tpu.memory_space<vmem>>, vector<1x256xf32>
    %9 = vector.broadcast %8 : vector<1x256xf32> to vector<256x256xf32>
    %10 = arith.addf %7, %9 : vector<256x256xf32>
    %11 = arith.truncf %10 : vector<256x256xf32> to vector<256x256xbf16>
    %c0_6 = arith.constant 0 : index
    %c0_7 = arith.constant 0 : index
    %12 = vector.load %arg12[%c0_6, %c0_7] : memref<256x256xf32, #tpu.memory_space<vmem>>, vector<256x256xf32>
    %13 = arith.truncf %12 : vector<256x256xf32> to vector<256x256xbf16>
    %cst_8 = arith.constant dense<0.000000e+00> : vector<256x256xf32>
    %14 = tpu.matmul %11, %13, %cst_8 {dimension_numbers = #tpu.dot_dimension_numbers<[1], [0], [0], [1], [0, 0, 1, 1], [], []>} : vector<256x256xbf16>, vector<256x256xbf16>, vector<256x256xf32> -> vector<256x256xf32>
    %c0_9 = arith.constant 0 : index
    %c0_10 = arith.constant 0 : index
    %c0_11 = arith.constant 0 : index
    %15 = vector.load %arg10[%c0_9, %c0_10, %c0_11] : memref<1x256x256xf32, #tpu.memory_space<vmem>>, vector<1x256x256xf32>
    %16 = vector.shape_cast %15 : vector<1x256x256xf32> to vector<256x256xf32>
    %17 = vector.shape_cast %14 : vector<256x256xf32> to vector<1x256x256xf32>
    tpu.vector_store %arg10[%c0_9, %c0_10, %c0_11], %17 {strides = array<i32>} : memref<1x256x256xf32, #tpu.memory_space<vmem>>, vector<1x256x256xf32>,
    return
  }
  func.func @transform_0(%arg0: i32) -> (i32, i32) {
    %c0_i32 = arith.constant 0 : i32
    %c0_i32_0 = arith.constant 0 : i32
    %c0_i32_1 = arith.constant 0 : i32
    return %c0_i32, %c0_i32_0 : i32, i32
  }
  func.func @transform_1(%arg0: i32) -> (i32, i32) {
    %c0_i32 = arith.constant 0 : i32
    %c0_i32_0 = arith.constant 0 : i32
    %c0_i32_1 = arith.constant 0 : i32
    return %c0_i32, %c0_i32_0 : i32, i32
  }
  func.func @transform_2(%arg0: i32) -> (i32, i32) {
    %c0_i32 = arith.constant 0 : i32
    %c0_i32_0 = arith.constant 0 : i32
    %c0_i32_1 = arith.constant 0 : i32
    return %c0_i32, %c0_i32_0 : i32, i32
  }
  func.func @transform_3(%arg0: i32) -> (i32, i32) {
    %c0_i32 = arith.constant 0 : i32
    %c0_i32_0 = arith.constant 0 : i32
    %c0_i32_1 = arith.constant 0 : i32
    return %c0_i32, %c0_i32_0 : i32, i32
  }
  func.func @transform_4(%arg0: i32) -> (i32, i32) {
    %c0_i32 = arith.constant 0 : i32
    %c0_i32_0 = arith.constant 0 : i32
    %c0_i32_1 = arith.constant 0 : i32
    return %c0_i32, %c0_i32_0 : i32, i32
  }
  func.func @transform_5(%arg0: i32) -> (i32, i32) {
    %c0_i32 = arith.constant 0 : i32
    %c0_i32_0 = arith.constant 0 : i32
    %c0_i32_1 = arith.constant 0 : i32
    return %c0_i32, %c0_i32_0 : i32, i32
  }
  func.func @transform_6(%arg0: i32) -> (i32, i32) {
    %c0_i32 = arith.constant 0 : i32
    %c0_i32_0 = arith.constant 0 : i32
    %c0_i32_1 = arith.constant 0 : i32
    return %c0_i32, %c0_i32_0 : i32, i32
  }
  func.func @transform_7(%arg0: i32) -> (i32, i32) {
    %c0_i32 = arith.constant 0 : i32
    %c0_i32_0 = arith.constant 0 : i32
    %c0_i32_1 = arith.constant 0 : i32
    return %c0_i32, %c0_i32_0 : i32, i32
  }
  func.func @transform_8(%arg0: i32) -> (i32, i32) {
    %c0_i32 = arith.constant 0 : i32
    %c0_i32_0 = arith.constant 0 : i32
    %c0_i32_1 = arith.constant 0 : i32
    return %c0_i32, %c0_i32_0 : i32, i32
  }
  func.func @transform_9(%arg0: i32) -> (i32, i32, i32) {
    %c0_i32 = arith.constant 0 : i32
    %c0_i32_0 = arith.constant 0 : i32
    %c0_i32_1 = arith.constant 0 : i32
    return %arg0, %c0_i32, %c0_i32_0 : i32, i32, i32
  }
}

</mosaic_0001>

<llo_original>
// kernel: temblock_forward.1
$region0: #{temblock_forward.1}
  #allocation0 [shape = 'u32[]', space=smem, size = 0x4, offset = 0x4, fixed_abs, tag = 'smem constant byte address 0x4 - core index']
  #allocation1 [shape = 'u32[144,128]{1,0:T(1,128)}', space=vmem, size = 0x12000, scoped, tag = 'internal scratch']
  #allocation2 [shape = 'bf16[2,256,256]{2,1,0:T(8,128)(2,1)}', space=vmem, size = 0x40000, scoped, tag = 'scratch operand']
  #allocation3 [shape = 'f32[256,256]{1,0:T(8,128)}', space=vmem, size = 0x40000, scoped, tag = 'scratch operand']
  %s0 = inlined_call_operand.vmem [shape: bf16[512,128], index: 0, kind: input, shape index: {}]
  %s1 = inlined_call_operand.vmem [shape: bf16[128,256], index: 1, kind: input, shape index: {}]
  %s2 = inlined_call_operand.vmem [shape: f32[1,256], index: 2, kind: input, shape index: {}]
  %s3 = inlined_call_operand.vmem [shape: bf16[256,256], index: 3, kind: input, shape index: {}]
  %s4 = inlined_call_operand.vmem [shape: f32[1,256], index: 4, kind: input, shape index: {}]
  %s5 = inlined_call_operand.vmem [shape: bf16[256,256], index: 5, kind: input, shape index: {}]
  %s6 = inlined_call_operand.vmem [shape: f32[1,256], index: 6, kind: input, shape index: {}]
  %s7 = inlined_call_operand.vmem [shape: bf16[256,256], index: 7, kind: input, shape index: {}]
  %s8 = inlined_call_operand.vmem [shape: f32[1,256], index: 8, kind: input, shape index: {}]
  %s9 = inlined_call_operand.vmem [shape: f32[2,256,256], index: 9, kind: output, shape index: {}]
  %s10 = sld [smem:[#allocation0]]
  $region73: #{temblock_forward.1} parent=0
    _
  %s12 = ssub.s32 1, %s10
  %s13 = scalar_select 0, %s12, %s10
  loop: start=0, step=1, limit=4
  $region2: #{temblock_forward.1} parent=0 // loop_pre_header
    _
  $region3: #{temblock_forward.1} parent=0 // loop_header
    %s15 = sphi 0, %s19
    %p16 = scmp.ge.s32.totalorder %s15, 4
    %s23 = sphi 0, %s23
    %s25 = sphi 0, %s23
    %s26 = sphi 0, %s25
    %s40 = sphi 0, %s26
    %s44 = sphi 0, %s44
    %s46 = sphi 0, %s44
    %s47 = sphi 0, %s46
    %s61 = sphi 0, %s47
    %s65 = sphi 0, %s65
    %s67 = sphi 0, %s65
    %s68 = sphi 0, %s67
    %s82 = sphi 0, %s68
    %s86 = sphi 0, %s86
    %s88 = sphi 0, %s86
    %s89 = sphi 0, %s88
    %s103 = sphi 0, %s89
    %s107 = sphi 0, %s107
    %s109 = sphi 0, %s107
    %s110 = sphi 0, %s109
    %s124 = sphi 0, %s110
    %s128 = sphi 0, %s128
    %s130 = sphi 0, %s128
    %s131 = sphi 0, %s130
    %s145 = sphi 0, %s131
    %s149 = sphi 0, %s149
    %s151 = sphi 0, %s149
    %s152 = sphi 0, %s151
    %s166 = sphi 0, %s152
    %s170 = sphi 0, %s170
    %s172 = sphi 0, %s170
    %s173 = sphi 0, %s172
    %s187 = sphi 0, %s173
    %s191 = sphi 0, %s191
    %s193 = sphi 0, %s191
    %s194 = sphi 0, %s193
    %s208 = sphi 0, %s194
    %s214 = sphi 0, %s216
    %s217 = sphi 0, %s214
    %s218 = sphi 0, %s217
    %s234 = sphi 0, %s218
  $region4: #{temblock_forward.1} parent=0 // loop_header_branch
    %18 = sbr.rel (%p16) target = $region8
  $region5: #{temblock_forward.1} parent=0 // loop_body
    %s20 = ssub.s32 %s15, 1
    %s21 = ssub.s32 %s15, 2
    %s22 = sadd.s32 %s15, 1
    %s24 = sadd.s32 %s23, 1
    %p27 = scmp.eq.s32.totalorder %s15, 1
    %p28 = scmp.ne.s32.totalorder %s23, %s25
    %p29 = scmp.eq.s32.totalorder %s15, 0
    %p30 = por %p28, %p29
    %p31 = scmp.ne.s32.totalorder %s23, %s25
    %p32 = scmp.eq.s32.totalorder %s20, 1
    %p33 = por %p31, %p32
    %p34 = scmp.ne.s32.totalorder %s25, %s26
    %p35 = scmp.eq.s32.totalorder %s20, 0
    %p36 = por %p34, %p35
    %p37 = scmp.ne.s32.totalorder %s25, %s26
    %p38 = scmp.eq.s32.totalorder %s21, 1
    %p39 = por %p37, %p38
    %p41 = scmp.ne.s32.totalorder %s26, %s40
    %p42 = scmp.eq.s32.totalorder %s21, 0
    %p43 = por %p41, %p42
    %s45 = sadd.s32 %s44, 1
    %p48 = scmp.eq.s32.totalorder %s15, 1
    %p49 = scmp.ne.s32.totalorder %s44, %s46
    %p50 = scmp.eq.s32.totalorder %s15, 0
    %p51 = por %p49, %p50
    %p52 = scmp.ne.s32.totalorder %s44, %s46
    %p53 = scmp.eq.s32.totalorder %s20, 1
    %p54 = por %p52, %p53
    %p55 = scmp.ne.s32.totalorder %s46, %s47
    %p56 = scmp.eq.s32.totalorder %s20, 0
    %p57 = por %p55, %p56
    %p58 = scmp.ne.s32.totalorder %s46, %s47
    %p59 = scmp.eq.s32.totalorder %s21, 1
    %p60 = por %p58, %p59
    %p62 = scmp.ne.s32.totalorder %s47, %s61
    %p63 = scmp.eq.s32.totalorder %s21, 0
    %p64 = por %p62, %p63
    %s66 = sadd.s32 %s65, 1
    %p69 = scmp.eq.s32.totalorder %s15, 1
    %p70 = scmp.ne.s32.totalorder %s65, %s67
    %p71 = scmp.eq.s32.totalorder %s15, 0
    %p72 = por %p70, %p71
    %p73 = scmp.ne.s32.totalorder %s65, %s67
    %p74 = scmp.eq.s32.totalorder %s20, 1
    %p75 = por %p73, %p74
    %p76 = scmp.ne.s32.totalorder %s67, %s68
    %p77 = scmp.eq.s32.totalorder %s20, 0
    %p78 = por %p76, %p77
    %p79 = scmp.ne.s32.totalorder %s67, %s68
    %p80 = scmp.eq.s32.totalorder %s21, 1
    %p81 = por %p79, %p80
    %p83 = scmp.ne.s32.totalorder %s68, %s82
    %p84 = scmp.eq.s32.totalorder %s21, 0
    %p85 = por %p83, %p84
    %s87 = sadd.s32 %s86, 1
    %p90 = scmp.eq.s32.totalorder %s15, 1
    %p91 = scmp.ne.s32.totalorder %s86, %s88
    %p92 = scmp.eq.s32.totalorder %s15, 0
    %p93 = por %p91, %p92
    %p94 = scmp.ne.s32.totalorder %s86, %s88
    %p95 = scmp.eq.s32.totalorder %s20, 1
    %p96 = por %p94, %p95
    %p97 = scmp.ne.s32.totalorder %s88, %s89
    %p98 = scmp.eq.s32.totalorder %s20, 0
    %p99 = por %p97, %p98
    %p100 = scmp.ne.s32.totalorder %s88, %s89
    %p101 = scmp.eq.s32.totalorder %s21, 1
    %p102 = por %p100, %p101
    %p104 = scmp.ne.s32.totalorder %s89, %s103
    %p105 = scmp.eq.s32.totalorder %s21, 0
    %p106 = por %p104, %p105
    %s108 = sadd.s32 %s107, 1
    %p111 = scmp.eq.s32.totalorder %s15, 1
    %p112 = scmp.ne.s32.totalorder %s107, %s109
    %p113 = scmp.eq.s32.totalorder %s15, 0
    %p114 = por %p112, %p113
    %p115 = scmp.ne.s32.totalorder %s107, %s109
    %p116 = scmp.eq.s32.totalorder %s20, 1
    %p117 = por %p115, %p116
    %p118 = scmp.ne.s32.totalorder %s109, %s110
    %p119 = scmp.eq.s32.totalorder %s20, 0
    %p120 = por %p118, %p119
    %p121 = scmp.ne.s32.totalorder %s109, %s110
    %p122 = scmp.eq.s32.totalorder %s21, 1
    %p123 = por %p121, %p122
    %p125 = scmp.ne.s32.totalorder %s110, %s124
    %p126 = scmp.eq.s32.totalorder %s21, 0
    %p127 = por %p125, %p126
    %s129 = sadd.s32 %s128, 1
    %p132 = scmp.eq.s32.totalorder %s15, 1
    %p133 = scmp.ne.s32.totalorder %s128, %s130
    %p134 = scmp.eq.s32.totalorder %s15, 0
    %p135 = por %p133, %p134
    %p136 = scmp.ne.s32.totalorder %s128, %s130
    %p137 = scmp.eq.s32.totalorder %s20, 1
    %p138 = por %p136, %p137
    %p139 = scmp.ne.s32.totalorder %s130, %s131
    %p140 = scmp.eq.s32.totalorder %s20, 0
    %p141 = por %p139, %p140
    %p142 = scmp.ne.s32.totalorder %s130, %s131
    %p143 = scmp.eq.s32.totalorder %s21, 1
    %p144 = por %p142, %p143
    %p146 = scmp.ne.s32.totalorder %s131, %s145
    %p147 = scmp.eq.s32.totalorder %s21, 0
    %p148 = por %p146, %p147
    %s150 = sadd.s32 %s149, 1
    %p153 = scmp.eq.s32.totalorder %s15, 1
    %p154 = scmp.ne.s32.totalorder %s149, %s151
    %p155 = scmp.eq.s32.totalorder %s15, 0
    %p156 = por %p154, %p155
    %p157 = scmp.ne.s32.totalorder %s149, %s151
    %p158 = scmp.eq.s32.totalorder %s20, 1
    %p159 = por %p157, %p158
    %p160 = scmp.ne.s32.totalorder %s151, %s152
    %p161 = scmp.eq.s32.totalorder %s20, 0
    %p162 = por %p160, %p161
    %p163 = scmp.ne.s32.totalorder %s151, %s152
    %p164 = scmp.eq.s32.totalorder %s21, 1
    %p165 = por %p163, %p164
    %p167 = scmp.ne.s32.totalorder %s152, %s166
    %p168 = scmp.eq.s32.totalorder %s21, 0
    %p169 = por %p167, %p168
    %s171 = sadd.s32 %s170, 1
    %p174 = scmp.eq.s32.totalorder %s15, 1
    %p175 = scmp.ne.s32.totalorder %s170, %s172
    %p176 = scmp.eq.s32.totalorder %s15, 0
    %p177 = por %p175, %p176
    %p178 = scmp.ne.s32.totalorder %s170, %s172
    %p179 = scmp.eq.s32.totalorder %s20, 1
    %p180 = por %p178, %p179
    %p181 = scmp.ne.s32.totalorder %s172, %s173
    %p182 = scmp.eq.s32.totalorder %s20, 0
    %p183 = por %p181, %p182
    %p184 = scmp.ne.s32.totalorder %s172, %s173
    %p185 = scmp.eq.s32.totalorder %s21, 1
    %p186 = por %p184, %p185
    %p188 = scmp.ne.s32.totalorder %s173, %s187
    %p189 = scmp.eq.s32.totalorder %s21, 0
    %p190 = por %p188, %p189
    %s192 = sadd.s32 %s191, 1
    %p195 = scmp.eq.s32.totalorder %s15, 1
    %p196 = scmp.ne.s32.totalorder %s191, %s193
    %p197 = scmp.eq.s32.totalorder %s15, 0
    %p198 = por %p196, %p197
    %p199 = scmp.ne.s32.totalorder %s191, %s193
    %p200 = scmp.eq.s32.totalorder %s20, 1
    %p201 = por %p199, %p200
    %p202 = scmp.ne.s32.totalorder %s193, %s194
    %p203 = scmp.eq.s32.totalorder %s20, 0
    %p204 = por %p202, %p203
    %p205 = scmp.ne.s32.totalorder %s193, %s194
    %p206 = scmp.eq.s32.totalorder %s21, 1
    %p207 = por %p205, %p206
    %p209 = scmp.ne.s32.totalorder %s194, %s208
    %p210 = scmp.eq.s32.totalorder %s21, 0
    %p211 = por %p209, %p210
    %s212 = ssub.s32 %s15, %s22
    %p213 = scmp.eq.s32.totalorder %s212, 0
    %s215 = sadd.s32 %s214, 1
    %s216 = scalar_select %p213, %s214, %s215
    %p219 = pneg %p213
    %p220 = scmp.eq.s32.totalorder %s15, 1
    %p221 = por %p219, %p220
    %p222 = scmp.ne.s32.totalorder %s214, %s217
    %p223 = scmp.eq.s32.totalorder %s15, 0
    %p224 = por %p222, %p223
    %p225 = scmp.ne.s32.totalorder %s214, %s217
    %p226 = scmp.eq.s32.totalorder %s20, 1
    %p227 = por %p225, %p226
    %p228 = scmp.ne.s32.totalorder %s217, %s218
    %p229 = scmp.eq.s32.totalorder %s20, 0
    %p230 = por %p228, %p229
    %p231 = scmp.ne.s32.totalorder %s217, %s218
    %p232 = scmp.eq.s32.totalorder %s21, 1
    %p233 = por %p231, %p232
    %p235 = scmp.ne.s32.totalorder %s218, %s234
    %p236 = scmp.eq.s32.totalorder %s21, 0
    %p237 = por %p235, %p236
    %p238 = scmp.le.s32.totalorder 1, %s15
    %p239 = scmp.lt.s32.totalorder %s15, 3
    %p240 = pnand %p238, %p239
    %p241 = pneg %p240
    // Predicated region
    $region9: #{temblock_forward.1} parent=5 // pred_check
      _
    $region10: #{temblock_forward.1} parent=5 // pred_check_branch
      %243 = sbr.rel (%p240) target = $region12
    $region11: #{temblock_forward.1} parent=5 // pred_region
      %s244 = ssub.s32 %s15, 1
      // Predicated region
      $region13: #{temblock_forward.1} parent=11 // pred_check
        %p245 = pneg %p36
      $region14: #{temblock_forward.1} parent=11 // pred_check_branch
        %247 = sbr.rel (%p245) target = $region16
      $region15: #{temblock_forward.1} parent=11 // pred_region
        _
      $region16: #{temblock_forward.1} parent=11 // pred_fallthru
        _
      // Predicated region
      $region17: #{temblock_forward.1} parent=11 // pred_check
        %p248 = pneg %p57
      $region18: #{temblock_forward.1} parent=11 // pred_check_branch
        %250 = sbr.rel (%p248) target = $region20
      $region19: #{temblock_forward.1} parent=11 // pred_region
        _
      $region20: #{temblock_forward.1} parent=11 // pred_fallthru
        _
      // Predicated region
      $region21: #{temblock_forward.1} parent=11 // pred_check
        %p251 = pneg %p78
      $region22: #{temblock_forward.1} parent=11 // pred_check_branch
        %253 = sbr.rel (%p251) target = $region24
      $region23: #{temblock_forward.1} parent=11 // pred_region
        _
      $region24: #{temblock_forward.1} parent=11 // pred_fallthru
        _
      // Predicated region
      $region25: #{temblock_forward.1} parent=11 // pred_check
        %p254 = pneg %p99
      $region26: #{temblock_forward.1} parent=11 // pred_check_branch
        %256 = sbr.rel (%p254) target = $region28
      $region27: #{temblock_forward.1} parent=11 // pred_region
        _
      $region28: #{temblock_forward.1} parent=11 // pred_fallthru
        _
      // Predicated region
      $region29: #{temblock_forward.1} parent=11 // pred_check
        %p257 = pneg %p120
      $region30: #{temblock_forward.1} parent=11 // pred_check_branch
        %259 = sbr.rel (%p257) target = $region32
      $region31: #{temblock_forward.1} parent=11 // pred_region
        _
      $region32: #{temblock_forward.1} parent=11 // pred_fallthru
        _
      // Predicated region
      $region33: #{temblock_forward.1} parent=11 // pred_check
        %p260 = pneg %p141
      $region34: #{temblock_forward.1} parent=11 // pred_check_branch
        %262 = sbr.rel (%p260) target = $region36
      $region35: #{temblock_forward.1} parent=11 // pred_region
        _
      $region36: #{temblock_forward.1} parent=11 // pred_fallthru
        _
      // Predicated region
      $region37: #{temblock_forward.1} parent=11 // pred_check
        %p263 = pneg %p162
      $region38: #{temblock_forward.1} parent=11 // pred_check_branch
        %265 = sbr.rel (%p263) target = $region40
      $region39: #{temblock_forward.1} parent=11 // pred_region
        _
      $region40: #{temblock_forward.1} parent=11 // pred_fallthru
        _
      // Predicated region
      $region41: #{temblock_forward.1} parent=11 // pred_check
        %p266 = pneg %p183
      $region42: #{temblock_forward.1} parent=11 // pred_check_branch
        %268 = sbr.rel (%p266) target = $region44
      $region43: #{temblock_forward.1} parent=11 // pred_region
        _
      $region44: #{temblock_forward.1} parent=11 // pred_fallthru
        _
      // Predicated region
      $region45: #{temblock_forward.1} parent=11 // pred_check
        %p269 = pneg %p204
      $region46: #{temblock_forward.1} parent=11 // pred_check_branch
        %271 = sbr.rel (%p269) target = $region48
      $region47: #{temblock_forward.1} parent=11 // pred_region
        _
      $region48: #{temblock_forward.1} parent=11 // pred_fallthru
        _
    $region12: #{temblock_forward.1} parent=5 // pred_fallthru
      _
    %p272 = scmp.lt.s32.totalorder %s15, 2
    // Predicated region
    $region49: #{temblock_forward.1} parent=5 // pred_check
      %p273 = pneg %p272
    $region50: #{temblock_forward.1} parent=5 // pred_check_branch
      %275 = sbr.rel (%p273) target = $region52
    $region51: #{temblock_forward.1} parent=5 // pred_region
      _
    $region52: #{temblock_forward.1} parent=5 // pred_fallthru
      _
    %p276 = scmp.le.s32.totalorder 1, %s15
    %p277 = scmp.lt.s32.totalorder %s15, 3
    %p278 = pnand %p276, %p277
    %p279 = pneg %p278
    // Predicated region
    $region53: #{temblock_forward.1} parent=5 // pred_check
      _
    $region54: #{temblock_forward.1} parent=5 // pred_check_branch
      %281 = sbr.rel (%p278) target = $region56
    $region55: #{temblock_forward.1} parent=5 // pred_region
      %s282 = ssub.s32 %s15, 1
      %p283 = pneg %p36
      %p284 = pneg %p33
      %p285 = pneg %p57
      %p286 = pneg %p54
      %p287 = pneg %p78
      %p288 = pneg %p75
      %p289 = pneg %p99
      %p290 = pneg %p96
      %p291 = pneg %p120
      %p292 = pneg %p117
      %p293 = pneg %p141
      %p294 = pneg %p138
      %p295 = pneg %p162
      %p296 = pneg %p159
      %p297 = pneg %p183
      %p298 = pneg %p180
      %p299 = pneg %p204
      %p300 = pneg %p201
      %p301 = pneg %p230
      %p302 = pneg %p227
      %p303 = scmp.lt.s32.totalorder %s20, 1
      %s304 = scalar_select %p303, %s20, 1
      %s305 = smul.addr %s304, 64
      %s306 = smul.addr %s305, 8
      %s307 = scalar_lea.vmem %s9, %s306
      %p308 = scmp.lt.s32.totalorder %s20, 1
      %s309 = scalar_select %p308, %s20, 1
      %s310 = smul.addr %s309, 64
      %s311 = smul.addr %s310, 8
      %s312 = scalar_lea.vmem %s9, %s311
      %p314 = scmp.eq.s32.totalorder %s20, 0
      // Predicated region
      $region57: #{temblock_forward.1} parent=55 // pred_check
        %p315 = pneg %p314
      $region58: #{temblock_forward.1} parent=55 // pred_check_branch
        %317 = sbr.rel (%p315) target = $region60
      $region59: #{temblock_forward.1} parent=55 // pred_region
        %v318 = vld [vmem:[%s0] sm:$0xf]
        %v319 = vld [vmem:[%s0 + $0x4] sm:$0xf]
        %v320 = vld [vmem:[%s0 + $0x8] sm:$0xf]
        %v321 = vld [vmem:[%s0 + $0xc] sm:$0xf]
        %v322 = vld [vmem:[%s0 + $0x10] sm:$0xf]
        %v323 = vld [vmem:[%s0 + $0x14] sm:$0xf]
        %v324 = vld [vmem:[%s0 + $0x18] sm:$0xf]
        %v325 = vld [vmem:[%s0 + $0x1c] sm:$0xf]
        %v326 = vld [vmem:[%s0 + $0x20] sm:$0xf]
        %v327 = vld [vmem:[%s0 + $0x24] sm:$0xf]
        %v328 = vld [vmem:[%s0 + $0x28] sm:$0xf]
        %v329 = vld [vmem:[%s0 + $0x2c] sm:$0xf]
        %v330 = vld [vmem:[%s0 + $0x30] sm:$0xf]
        %v331 = vld [vmem:[%s0 + $0x34] sm:$0xf]
        %v332 = vld [vmem:[%s0 + $0x38] sm:$0xf]
        %v333 = vld [vmem:[%s0 + $0x3c] sm:$0xf]
        %v334 = vld [vmem:[%s0 + $0x40] sm:$0xf]
        %v335 = vld [vmem:[%s0 + $0x44] sm:$0xf]
        %v336 = vld [vmem:[%s0 + $0x48] sm:$0xf]
        %v337 = vld [vmem:[%s0 + $0x4c] sm:$0xf]
        %v338 = vld [vmem:[%s0 + $0x50] sm:$0xf]
        %v339 = vld [vmem:[%s0 + $0x54] sm:$0xf]
        %v340 = vld [vmem:[%s0 + $0x58] sm:$0xf]
        %v341 = vld [vmem:[%s0 + $0x5c] sm:$0xf]
        %v342 = vld [vmem:[%s0 + $0x60] sm:$0xf]
        %v343 = vld [vmem:[%s0 + $0x64] sm:$0xf]
        %v344 = vld [vmem:[%s0 + $0x68] sm:$0xf]
        %v345 = vld [vmem:[%s0 + $0x6c] sm:$0xf]
        %v346 = vld [vmem:[%s0 + $0x70] sm:$0xf]
        %v347 = vld [vmem:[%s0 + $0x74] sm:$0xf]
        %v348 = vld [vmem:[%s0 + $0x78] sm:$0xf]
        %v349 = vld [vmem:[%s0 + $0x7c] sm:$0xf]
        %v350 = vld [vmem:[%s0 + $0x80] sm:$0xf]
        %v351 = vld [vmem:[%s0 + $0x84] sm:$0xf]
        %v352 = vld [vmem:[%s0 + $0x88] sm:$0xf]
        %v353 = vld [vmem:[%s0 + $0x8c] sm:$0xf]
        %v354 = vld [vmem:[%s0 + $0x90] sm:$0xf]
        %v355 = vld [vmem:[%s0 + $0x94] sm:$0xf]
        %v356 = vld [vmem:[%s0 + $0x98] sm:$0xf]
        %v357 = vld [vmem:[%s0 + $0x9c] sm:$0xf]
        %v358 = vld [vmem:[%s0 + $0xa0] sm:$0xf]
        %v359 = vld [vmem:[%s0 + $0xa4] sm:$0xf]
        %v360 = vld [vmem:[%s0 + $0xa8] sm:$0xf]
        %v361 = vld [vmem:[%s0 + $0xac] sm:$0xf]
        %v362 = vld [vmem:[%s0 + $0xb0] sm:$0xf]
        %v363 = vld [vmem:[%s0 + $0xb4] sm:$0xf]
        %v364 = vld [vmem:[%s0 + $0xb8] sm:$0xf]
        %v365 = vld [vmem:[%s0 + $0xbc] sm:$0xf]
        %v366 = vld [vmem:[%s0 + $0xc0] sm:$0xf]
        %v367 = vld [vmem:[%s0 + $0xc4] sm:$0xf]
        %v368 = vld [vmem:[%s0 + $0xc8] sm:$0xf]
        %v369 = vld [vmem:[%s0 + $0xcc] sm:$0xf]
        %v370 = vld [vmem:[%s0 + $0xd0] sm:$0xf]
        %v371 = vld [vmem:[%s0 + $0xd4] sm:$0xf]
        %v372 = vld [vmem:[%s0 + $0xd8] sm:$0xf]
        %v373 = vld [vmem:[%s0 + $0xdc] sm:$0xf]
        %v374 = vld [vmem:[%s0 + $0xe0] sm:$0xf]
        %v375 = vld [vmem:[%s0 + $0xe4] sm:$0xf]
        %v376 = vld [vmem:[%s0 + $0xe8] sm:$0xf]
        %v377 = vld [vmem:[%s0 + $0xec] sm:$0xf]
        %v378 = vld [vmem:[%s0 + $0xf0] sm:$0xf]
        %v379 = vld [vmem:[%s0 + $0xf4] sm:$0xf]
        %v380 = vld [vmem:[%s0 + $0xf8] sm:$0xf]
        %v381 = vld [vmem:[%s0 + $0xfc] sm:$0xf]
        %v382 = vld [vmem:[%s1] sm:$0xff]
        %v383 = vld [vmem:[%s1 + $0x8] sm:$0xff]
        %v384 = vld [vmem:[%s1 + $0x10] sm:$0xff]
        %v385 = vld [vmem:[%s1 + $0x18] sm:$0xff]
        %v386 = vld [vmem:[%s1 + $0x20] sm:$0xff]
        %v387 = vld [vmem:[%s1 + $0x28] sm:$0xff]
        %v388 = vld [vmem:[%s1 + $0x30] sm:$0xff]
        %v389 = vld [vmem:[%s1 + $0x38] sm:$0xff]
        %v390 = vld [vmem:[%s1 + $0x40] sm:$0xff]
        %v391 = vld [vmem:[%s1 + $0x48] sm:$0xff]
        %v392 = vld [vmem:[%s1 + $0x50] sm:$0xff]
        %v393 = vld [vmem:[%s1 + $0x58] sm:$0xff]
        %v394 = vld [vmem:[%s1 + $0x60] sm:$0xff]
        %v395 = vld [vmem:[%s1 + $0x68] sm:$0xff]
        %v396 = vld [vmem:[%s1 + $0x70] sm:$0xff]
        %v397 = vld [vmem:[%s1 + $0x78] sm:$0xff]
        %v398 = vld [vmem:[%s2] sm:$0x3]
        %v400 = vlaneseq
        %v401 = vshrl.u32 %v400, 7
        %v402 = vsub.s32 0, %v401
        %v403 = vrot.slane %v398, %v402
        %v404 = vlaneseq
        %v405 = vshrl.u32 %v404, 7
        %v406 = vsub.s32 1, %v405
        %v407 = vrot.slane %v398, %v406
        %v474 = vunpack.c.l.b16 %v318
        %v475 = vunpack.c.l.b16 %v319
        %v476 = vunpack.c.l.b16 %v320
        %v477 = vunpack.c.l.b16 %v321
        %v478 = vunpack.c.l.b16 %v322
        %v479 = vunpack.c.l.b16 %v323
        %v480 = vunpack.c.l.b16 %v324
        %v481 = vunpack.c.l.b16 %v325
        %v482 = vunpack.c.l.b16 %v326
        %v483 = vunpack.c.l.b16 %v327
        %v484 = vunpack.c.l.b16 %v328
        %v485 = vunpack.c.l.b16 %v329
        %v486 = vunpack.c.l.b16 %v330
        %v487 = vunpack.c.l.b16 %v331
        %v488 = vunpack.c.l.b16 %v332
        %v489 = vunpack.c.l.b16 %v333
        %v490 = vunpack.c.l.b16 %v334
        %v491 = vunpack.c.l.b16 %v335
        %v492 = vunpack.c.l.b16 %v336
        %v493 = vunpack.c.l.b16 %v337
        %v494 = vunpack.c.l.b16 %v338
        %v495 = vunpack.c.l.b16 %v339
        %v496 = vunpack.c.l.b16 %v340
        %v497 = vunpack.c.l.b16 %v341
        %v498 = vunpack.c.l.b16 %v342
        %v499 = vunpack.c.l.b16 %v343
        %v500 = vunpack.c.l.b16 %v344
        %v501 = vunpack.c.l.b16 %v345
        %v502 = vunpack.c.l.b16 %v346
        %v503 = vunpack.c.l.b16 %v347
        %v504 = vunpack.c.l.b16 %v348
        %v505 = vunpack.c.l.b16 %v349
        %v506 = vunpack.c.l.b16 %v350
        %v507 = vunpack.c.l.b16 %v351
        %v508 = vunpack.c.l.b16 %v352
        %v509 = vunpack.c.l.b16 %v353
        %v510 = vunpack.c.l.b16 %v354
        %v511 = vunpack.c.l.b16 %v355
        %v512 = vunpack.c.l.b16 %v356
        %v513 = vunpack.c.l.b16 %v357
        %v514 = vunpack.c.l.b16 %v358
        %v515 = vunpack.c.l.b16 %v359
        %v516 = vunpack.c.l.b16 %v360
        %v517 = vunpack.c.l.b16 %v361
        %v518 = vunpack.c.l.b16 %v362
        %v519 = vunpack.c.l.b16 %v363
        %v520 = vunpack.c.l.b16 %v364
        %v521 = vunpack.c.l.b16 %v365
        %v522 = vunpack.c.l.b16 %v366
        %v523 = vunpack.c.l.b16 %v367
        %v524 = vunpack.c.l.b16 %v368
        %v525 = vunpack.c.l.b16 %v369
        %v526 = vunpack.c.l.b16 %v370
        %v527 = vunpack.c.l.b16 %v371
        %v528 = vunpack.c.l.b16 %v372
        %v529 = vunpack.c.l.b16 %v373
        %v530 = vunpack.c.l.b16 %v374
        %v531 = vunpack.c.l.b16 %v375
        %v532 = vunpack.c.l.b16 %v376
        %v533 = vunpack.c.l.b16 %v377
        %v534 = vunpack.c.l.b16 %v378
        %v535 = vunpack.c.l.b16 %v379
        %v536 = vunpack.c.l.b16 %v380
        %v537 = vunpack.c.l.b16 %v381
        %v538 = vpack.c.b16 %v475, %v474
        %v539 = vpack.c.b16 %v477, %v476
        %v540 = vpack.c.b16 %v479, %v478
        %v541 = vpack.c.b16 %v481, %v480
        %v542 = vpack.c.b16 %v483, %v482
        %v543 = vpack.c.b16 %v485, %v484
        %v544 = vpack.c.b16 %v487, %v486
        %v545 = vpack.c.b16 %v489, %v488
        %v546 = vpack.c.b16 %v491, %v490
        %v547 = vpack.c.b16 %v493, %v492
        %v548 = vpack.c.b16 %v495, %v494
        %v549 = vpack.c.b16 %v497, %v496
        %v550 = vpack.c.b16 %v499, %v498
        %v551 = vpack.c.b16 %v501, %v500
        %v552 = vpack.c.b16 %v503, %v502
        %v553 = vpack.c.b16 %v505, %v504
        %v554 = vpack.c.b16 %v507, %v506
        %v555 = vpack.c.b16 %v509, %v508
        %v556 = vpack.c.b16 %v511, %v510
        %v557 = vpack.c.b16 %v513, %v512
        %v558 = vpack.c.b16 %v515, %v514
        %v559 = vpack.c.b16 %v517, %v516
        %v560 = vpack.c.b16 %v519, %v518
        %v561 = vpack.c.b16 %v521, %v520
        %v562 = vpack.c.b16 %v523, %v522
        %v563 = vpack.c.b16 %v525, %v524
        %v564 = vpack.c.b16 %v527, %v526
        %v565 = vpack.c.b16 %v529, %v528
        %v566 = vpack.c.b16 %v531, %v530
        %v567 = vpack.c.b16 %v533, %v532
        %v568 = vpack.c.b16 %v535, %v534
        %v569 = vpack.c.b16 %v537, %v536
        %v618 = vunpack.c.l.b16 %v382
        %v619 = vunpack.c.h.b16 %v382
        %v620 = vunpack.c.l.b16 %v383
        %v621 = vunpack.c.h.b16 %v383
        %v622 = vunpack.c.l.b16 %v384
        %v623 = vunpack.c.h.b16 %v384
        %v624 = vunpack.c.l.b16 %v385
        %v625 = vunpack.c.h.b16 %v385
        %v626 = vunpack.c.l.b16 %v386
        %v627 = vunpack.c.h.b16 %v386
        %v628 = vunpack.c.l.b16 %v387
        %v629 = vunpack.c.h.b16 %v387
        %v630 = vunpack.c.l.b16 %v388
        %v631 = vunpack.c.h.b16 %v388
        %v632 = vunpack.c.l.b16 %v389
        %v633 = vunpack.c.h.b16 %v389
        %v634 = vunpack.c.l.b16 %v390
        %v635 = vunpack.c.h.b16 %v390
        %v636 = vunpack.c.l.b16 %v391
        %v637 = vunpack.c.h.b16 %v391
        %v638 = vunpack.c.l.b16 %v392
        %v639 = vunpack.c.h.b16 %v392
        %v640 = vunpack.c.l.b16 %v393
        %v641 = vunpack.c.h.b16 %v393
        %v642 = vunpack.c.l.b16 %v394
        %v643 = vunpack.c.h.b16 %v394
        %v644 = vunpack.c.l.b16 %v395
        %v645 = vunpack.c.h.b16 %v395
        %v646 = vunpack.c.l.b16 %v396
        %v647 = vunpack.c.h.b16 %v396
        %v648 = vunpack.c.l.b16 %v397
        %v649 = vunpack.c.h.b16 %v397
        %v650 = vpack.c.b16 %v620, %v618
        %v651 = vpack.c.b16 %v621, %v619
        %v652 = vpack.c.b16 %v624, %v622
        %v653 = vpack.c.b16 %v625, %v623
        %v654 = vpack.c.b16 %v628, %v626
        %v655 = vpack.c.b16 %v629, %v627
        %v656 = vpack.c.b16 %v632, %v630
        %v657 = vpack.c.b16 %v633, %v631
        %v658 = vpack.c.b16 %v636, %v634
        %v659 = vpack.c.b16 %v637, %v635
        %v660 = vpack.c.b16 %v640, %v638
        %v661 = vpack.c.b16 %v641, %v639
        %v662 = vpack.c.b16 %v644, %v642
        %v663 = vpack.c.b16 %v645, %v643
        %v664 = vpack.c.b16 %v648, %v646
        %v665 = vpack.c.b16 %v649, %v647
        %682 = vmatprep.subr.bf16.mxu0 %v665
        %683 = vmatpush1.bf16.msra.mxu0 %v664
        %684 = vmatprep.subr.bf16.mxu0 %v663
        %685 = vmatpush1.bf16.msra.mxu0 %v662
        %686 = vmatprep.subr.bf16.mxu0 %v661
        %687 = vmatpush1.bf16.msra.mxu0 %v660
        %688 = vmatprep.subr.bf16.mxu0 %v659
        %689 = vmatpush1.bf16.msra.mxu0 %v658
        %690 = vmatprep.subr.bf16.mxu0 %v657
        %691 = vmatpush1.bf16.msra.mxu0 %v656
        %692 = vmatprep.subr.bf16.mxu0 %v655
        %693 = vmatpush1.bf16.msra.mxu0 %v654
        %694 = vmatprep.subr.bf16.mxu0 %v653
        %695 = vmatpush1.bf16.msra.mxu0 %v652
        %696 = vmatprep.subr.bf16.mxu0 %v651
        %697 = vmatpush1.bf16.msra.mxu0 %v650
        %698 = vmatprep.subr.bf16.mxu0 0
        %699 = vmatpush2.bf16.msra.mxu0 0
        %700 = vmatprep.subr.bf16.mxu0 0
        %701 = vmatpush2.bf16.msra.mxu0 0
        %702 = vmatprep.subr.bf16.mxu0 0
        %703 = vmatpush2.bf16.msra.mxu0 0
        %704 = vmatprep.subr.bf16.mxu0 0
        %705 = vmatpush2.bf16.msra.mxu0 0
        %706 = vmatprep.subr.bf16.mxu0 0
        %707 = vmatpush2.bf16.msra.mxu0 0
        %708 = vmatprep.subr.bf16.mxu0 0
        %709 = vmatpush2.bf16.msra.mxu0 0
        %710 = vmatprep.subr.bf16.mxu0 0
        %711 = vmatpush2.bf16.msra.mxu0 0
        %712 = vmatprep.subr.bf16.mxu0 0
        %713 = vmatpush2.bf16.msra.mxu0 0
        %714 = vmatprep.mubr.bf16.mxu0 0
        %715 = vmatmul.mubr.bf16.gmra.mxu0 %v538
        %v716 = vpop.f32.mrf.mxu0
        %v717 = vadd.f32 %v403, %v716
        %v718 = vpop.f32.mrf.mxu0
        %v719 = vadd.f32 %v407, %v718
        %v720 = vpop.f32.mrf.mxu0
        %v721 = vadd.f32 %v403, %v720
        %v722 = vpop.f32.mrf.mxu0
        %v723 = vadd.f32 %v407, %v722
        %724 = vmatprep.mubr.bf16.mxu0 0
        %725 = vmatmul.mubr.bf16.gmra.mxu0 %v539
        %v726 = vpop.f32.mrf.mxu0
        %v727 = vadd.f32 %v403, %v726
        %v728 = vpop.f32.mrf.mxu0
        %v729 = vadd.f32 %v407, %v728
        %v730 = vpop.f32.mrf.mxu0
        %v731 = vadd.f32 %v403, %v730
        %v732 = vpop.f32.mrf.mxu0
        %v733 = vadd.f32 %v407, %v732
        %734 = vmatprep.mubr.bf16.mxu0 0
        %735 = vmatmul.mubr.bf16.gmra.mxu0 %v540
        %v736 = vpop.f32.mrf.mxu0
        %v737 = vadd.f32 %v403, %v736
        %v738 = vpop.f32.mrf.mxu0
        %v739 = vadd.f32 %v407, %v738
        %v740 = vpop.f32.mrf.mxu0
        %v741 = vadd.f32 %v403, %v740
        %v742 = vpop.f32.mrf.mxu0
        %v743 = vadd.f32 %v407, %v742
        %744 = vmatprep.mubr.bf16.mxu0 0
        %745 = vmatmul.mubr.bf16.gmra.mxu0 %v541
        %v746 = vpop.f32.mrf.mxu0
        %v747 = vadd.f32 %v403, %v746
        %v748 = vpop.f32.mrf.mxu0
        %v749 = vadd.f32 %v407, %v748
        %v750 = vpop.f32.mrf.mxu0
        %v751 = vadd.f32 %v403, %v750
        %v752 = vpop.f32.mrf.mxu0
        %v753 = vadd.f32 %v407, %v752
        %754 = vmatprep.mubr.bf16.mxu0 0
        %755 = vmatmul.mubr.bf16.gmra.mxu0 %v542
        %v756 = vpop.f32.mrf.mxu0
        %v757 = vadd.f32 %v403, %v756
        %v758 = vpop.f32.mrf.mxu0
        %v759 = vadd.f32 %v407, %v758
        %v760 = vpop.f32.mrf.mxu0
        %v761 = vadd.f32 %v403, %v760
        %v762 = vpop.f32.mrf.mxu0
        %v763 = vadd.f32 %v407, %v762
        %764 = vmatprep.mubr.bf16.mxu0 0
        %765 = vmatmul.mubr.bf16.gmra.mxu0 %v543
        %v766 = vpop.f32.mrf.mxu0
        %v767 = vadd.f32 %v403, %v766
        %v768 = vpop.f32.mrf.mxu0
        %v769 = vadd.f32 %v407, %v768
        %v770 = vpop.f32.mrf.mxu0
        %v771 = vadd.f32 %v403, %v770
        %v772 = vpop.f32.mrf.mxu0
        %v773 = vadd.f32 %v407, %v772
        %774 = vmatprep.mubr.bf16.mxu0 0
        %775 = vmatmul.mubr.bf16.gmra.mxu0 %v544
        %v776 = vpop.f32.mrf.mxu0
        %v777 = vadd.f32 %v403, %v776
        %v778 = vpop.f32.mrf.mxu0
        %v779 = vadd.f32 %v407, %v778
        %v780 = vpop.f32.mrf.mxu0
        %v781 = vadd.f32 %v403, %v780
        %v782 = vpop.f32.mrf.mxu0
        %v783 = vadd.f32 %v407, %v782
        %784 = vmatprep.mubr.bf16.mxu0 0
        %785 = vmatmul.mubr.bf16.gmra.mxu0 %v545
        %v786 = vpop.f32.mrf.mxu0
        %v787 = vadd.f32 %v403, %v786
        %v788 = vpop.f32.mrf.mxu0
        %v789 = vadd.f32 %v407, %v788
        %v790 = vpop.f32.mrf.mxu0
        %v791 = vadd.f32 %v403, %v790
        %v792 = vpop.f32.mrf.mxu0
        %v793 = vadd.f32 %v407, %v792
        %794 = vmatprep.mubr.bf16.mxu0 0
        %795 = vmatmul.mubr.bf16.gmra.mxu0 %v546
        %v796 = vpop.f32.mrf.mxu0
        %v797 = vadd.f32 %v403, %v796
        %v798 = vpop.f32.mrf.mxu0
        %v799 = vadd.f32 %v407, %v798
        %v800 = vpop.f32.mrf.mxu0
        %v801 = vadd.f32 %v403, %v800
        %v802 = vpop.f32.mrf.mxu0
        %v803 = vadd.f32 %v407, %v802
        %804 = vmatprep.mubr.bf16.mxu0 0
        %805 = vmatmul.mubr.bf16.gmra.mxu0 %v547
        %v806 = vpop.f32.mrf.mxu0
        %v807 = vadd.f32 %v403, %v806
        %v808 = vpop.f32.mrf.mxu0
        %v809 = vadd.f32 %v407, %v808
        %v810 = vpop.f32.mrf.mxu0
        %v811 = vadd.f32 %v403, %v810
        %v812 = vpop.f32.mrf.mxu0
        %v813 = vadd.f32 %v407, %v812
        %814 = vmatprep.mubr.bf16.mxu0 0
        %815 = vmatmul.mubr.bf16.gmra.mxu0 %v548
        %v816 = vpop.f32.mrf.mxu0
        %v817 = vadd.f32 %v403, %v816
        %v818 = vpop.f32.mrf.mxu0
        %v819 = vadd.f32 %v407, %v818
        %v820 = vpop.f32.mrf.mxu0
        %v821 = vadd.f32 %v403, %v820
        %v822 = vpop.f32.mrf.mxu0
        %v823 = vadd.f32 %v407, %v822
        %824 = vmatprep.mubr.bf16.mxu0 0
        %825 = vmatmul.mubr.bf16.gmra.mxu0 %v549
        %v826 = vpop.f32.mrf.mxu0
        %v827 = vadd.f32 %v403, %v826
        %v828 = vpop.f32.mrf.mxu0
        %v829 = vadd.f32 %v407, %v828
        %v830 = vpop.f32.mrf.mxu0
        %v831 = vadd.f32 %v403, %v830
        %v832 = vpop.f32.mrf.mxu0
        %v833 = vadd.f32 %v407, %v832
        %834 = vmatprep.mubr.bf16.mxu0 0
        %835 = vmatmul.mubr.bf16.gmra.mxu0 %v550
        %v836 = vpop.f32.mrf.mxu0
        %v837 = vadd.f32 %v403, %v836
        %v838 = vpop.f32.mrf.mxu0
        %v839 = vadd.f32 %v407, %v838
        %v840 = vpop.f32.mrf.mxu0
        %v841 = vadd.f32 %v403, %v840
        %v842 = vpop.f32.mrf.mxu0
        %v843 = vadd.f32 %v407, %v842
        %844 = vmatprep.mubr.bf16.mxu0 0
        %845 = vmatmul.mubr.bf16.gmra.mxu0 %v551
        %v846 = vpop.f32.mrf.mxu0
        %v847 = vadd.f32 %v403, %v846
        %v848 = vpop.f32.mrf.mxu0
        %v849 = vadd.f32 %v407, %v848
        %v850 = vpop.f32.mrf.mxu0
        %v851 = vadd.f32 %v403, %v850
        %v852 = vpop.f32.mrf.mxu0
        %v853 = vadd.f32 %v407, %v852
        %854 = vmatprep.mubr.bf16.mxu0 0
        %855 = vmatmul.mubr.bf16.gmra.mxu0 %v552
        %v856 = vpop.f32.mrf.mxu0
        %v857 = vadd.f32 %v403, %v856
        %v858 = vpop.f32.mrf.mxu0
        %v859 = vadd.f32 %v407, %v858
        %v860 = vpop.f32.mrf.mxu0
        %v861 = vadd.f32 %v403, %v860
        %v862 = vpop.f32.mrf.mxu0
        %v863 = vadd.f32 %v407, %v862
        %864 = vmatprep.mubr.bf16.mxu0 0
        %865 = vmatmul.mubr.bf16.gmra.mxu0 %v553
        %v866 = vpop.f32.mrf.mxu0
        %v867 = vadd.f32 %v403, %v866
        %v868 = vpop.f32.mrf.mxu0
        %v869 = vadd.f32 %v407, %v868
        %v870 = vpop.f32.mrf.mxu0
        %v871 = vadd.f32 %v403, %v870
        %v872 = vpop.f32.mrf.mxu0
        %v873 = vadd.f32 %v407, %v872
        %874 = vmatprep.mubr.bf16.mxu0 0
        %875 = vmatmul.mubr.bf16.gmra.mxu0 %v554
        %v876 = vpop.f32.mrf.mxu0
        %v877 = vadd.f32 %v403, %v876
        %v878 = vpop.f32.mrf.mxu0
        %v879 = vadd.f32 %v407, %v878
        %v880 = vpop.f32.mrf.mxu0
        %v881 = vadd.f32 %v403, %v880
        %v882 = vpop.f32.mrf.mxu0
        %v883 = vadd.f32 %v407, %v882
        %884 = vmatprep.mubr.bf16.mxu0 0
        %885 = vmatmul.mubr.bf16.gmra.mxu0 %v555
        %v886 = vpop.f32.mrf.mxu0
        %v887 = vadd.f32 %v403, %v886
        %v888 = vpop.f32.mrf.mxu0
        %v889 = vadd.f32 %v407, %v888
        %v890 = vpop.f32.mrf.mxu0
        %v891 = vadd.f32 %v403, %v890
        %v892 = vpop.f32.mrf.mxu0
        %v893 = vadd.f32 %v407, %v892
        %894 = vmatprep.mubr.bf16.mxu0 0
        %895 = vmatmul.mubr.bf16.gmra.mxu0 %v556
        %v896 = vpop.f32.mrf.mxu0
        %v897 = vadd.f32 %v403, %v896
        %v898 = vpop.f32.mrf.mxu0
        %v899 = vadd.f32 %v407, %v898
        %v900 = vpop.f32.mrf.mxu0
        %v901 = vadd.f32 %v403, %v900
        %v902 = vpop.f32.mrf.mxu0
        %v903 = vadd.f32 %v407, %v902
        %904 = vmatprep.mubr.bf16.mxu0 0
        %905 = vmatmul.mubr.bf16.gmra.mxu0 %v557
        %v906 = vpop.f32.mrf.mxu0
        %v907 = vadd.f32 %v403, %v906
        %v908 = vpop.f32.mrf.mxu0
        %v909 = vadd.f32 %v407, %v908
        %v910 = vpop.f32.mrf.mxu0
        %v911 = vadd.f32 %v403, %v910
        %v912 = vpop.f32.mrf.mxu0
        %v913 = vadd.f32 %v407, %v912
        %914 = vmatprep.mubr.bf16.mxu0 0
        %915 = vmatmul.mubr.bf16.gmra.mxu0 %v558
        %v916 = vpop.f32.mrf.mxu0
        %v917 = vadd.f32 %v403, %v916
        %v918 = vpop.f32.mrf.mxu0
        %v919 = vadd.f32 %v407, %v918
        %v920 = vpop.f32.mrf.mxu0
        %v921 = vadd.f32 %v403, %v920
        %v922 = vpop.f32.mrf.mxu0
        %v923 = vadd.f32 %v407, %v922
        %924 = vmatprep.mubr.bf16.mxu0 0
        %925 = vmatmul.mubr.bf16.gmra.mxu0 %v559
        %v926 = vpop.f32.mrf.mxu0
        %v927 = vadd.f32 %v403, %v926
        %v928 = vpop.f32.mrf.mxu0
        %v929 = vadd.f32 %v407, %v928
        %v930 = vpop.f32.mrf.mxu0
        %v931 = vadd.f32 %v403, %v930
        %v932 = vpop.f32.mrf.mxu0
        %v933 = vadd.f32 %v407, %v932
        %934 = vmatprep.mubr.bf16.mxu0 0
        %935 = vmatmul.mubr.bf16.gmra.mxu0 %v560
        %v936 = vpop.f32.mrf.mxu0
        %v937 = vadd.f32 %v403, %v936
        %v938 = vpop.f32.mrf.mxu0
        %v939 = vadd.f32 %v407, %v938
        %v940 = vpop.f32.mrf.mxu0
        %v941 = vadd.f32 %v403, %v940
        %v942 = vpop.f32.mrf.mxu0
        %v943 = vadd.f32 %v407, %v942
        %944 = vmatprep.mubr.bf16.mxu0 0
        %945 = vmatmul.mubr.bf16.gmra.mxu0 %v561
        %v946 = vpop.f32.mrf.mxu0
        %v947 = vadd.f32 %v403, %v946
        %v948 = vpop.f32.mrf.mxu0
        %v949 = vadd.f32 %v407, %v948
        %v950 = vpop.f32.mrf.mxu0
        %v951 = vadd.f32 %v403, %v950
        %v952 = vpop.f32.mrf.mxu0
        %v953 = vadd.f32 %v407, %v952
        %954 = vmatprep.mubr.bf16.mxu0 0
        %955 = vmatmul.mubr.bf16.gmra.mxu0 %v562
        %v956 = vpop.f32.mrf.mxu0
        %v957 = vadd.f32 %v403, %v956
        %v958 = vpop.f32.mrf.mxu0
        %v959 = vadd.f32 %v407, %v958
        %v960 = vpop.f32.mrf.mxu0
        %v961 = vadd.f32 %v403, %v960
        %v962 = vpop.f32.mrf.mxu0
        %v963 = vadd.f32 %v407, %v962
        %964 = vmatprep.mubr.bf16.mxu0 0
        %965 = vmatmul.mubr.bf16.gmra.mxu0 %v563
        %v966 = vpop.f32.mrf.mxu0
        %v967 = vadd.f32 %v403, %v966
        %v968 = vpop.f32.mrf.mxu0
        %v969 = vadd.f32 %v407, %v968
        %v970 = vpop.f32.mrf.mxu0
        %v971 = vadd.f32 %v403, %v970
        %v972 = vpop.f32.mrf.mxu0
        %v973 = vadd.f32 %v407, %v972
        %974 = vmatprep.mubr.bf16.mxu0 0
        %975 = vmatmul.mubr.bf16.gmra.mxu0 %v564
        %v976 = vpop.f32.mrf.mxu0
        %v977 = vadd.f32 %v403, %v976
        %v978 = vpop.f32.mrf.mxu0
        %v979 = vadd.f32 %v407, %v978
        %v980 = vpop.f32.mrf.mxu0
        %v981 = vadd.f32 %v403, %v980
        %v982 = vpop.f32.mrf.mxu0
        %v983 = vadd.f32 %v407, %v982
        %984 = vmatprep.mubr.bf16.mxu0 0
        %985 = vmatmul.mubr.bf16.gmra.mxu0 %v565
        %v986 = vpop.f32.mrf.mxu0
        %v987 = vadd.f32 %v403, %v986
        %v988 = vpop.f32.mrf.mxu0
        %v989 = vadd.f32 %v407, %v988
        %v990 = vpop.f32.mrf.mxu0
        %v991 = vadd.f32 %v403, %v990
        %v992 = vpop.f32.mrf.mxu0
        %v993 = vadd.f32 %v407, %v992
        %994 = vmatprep.mubr.bf16.mxu0 0
        %995 = vmatmul.mubr.bf16.gmra.mxu0 %v566
        %v996 = vpop.f32.mrf.mxu0
        %v997 = vadd.f32 %v403, %v996
        %v998 = vpop.f32.mrf.mxu0
        %v999 = vadd.f32 %v407, %v998
        %v1000 = vpop.f32.mrf.mxu0
        %v1001 = vadd.f32 %v403, %v1000
        %v1002 = vpop.f32.mrf.mxu0
        %v1003 = vadd.f32 %v407, %v1002
        %1004 = vmatprep.mubr.bf16.mxu0 0
        %1005 = vmatmul.mubr.bf16.gmra.mxu0 %v567
        %v1006 = vpop.f32.mrf.mxu0
        %v1007 = vadd.f32 %v403, %v1006
        %v1008 = vpop.f32.mrf.mxu0
        %v1009 = vadd.f32 %v407, %v1008
        %v1010 = vpop.f32.mrf.mxu0
        %v1011 = vadd.f32 %v403, %v1010
        %v1012 = vpop.f32.mrf.mxu0
        %v1013 = vadd.f32 %v407, %v1012
        %1014 = vmatprep.mubr.bf16.mxu0 0
        %1015 = vmatmul.mubr.bf16.gmra.mxu0 %v568
        %v1016 = vpop.f32.mrf.mxu0
        %v1017 = vadd.f32 %v403, %v1016
        %v1018 = vpop.f32.mrf.mxu0
        %v1019 = vadd.f32 %v407, %v1018
        %v1020 = vpop.f32.mrf.mxu0
        %v1021 = vadd.f32 %v403, %v1020
        %v1022 = vpop.f32.mrf.mxu0
        %v1023 = vadd.f32 %v407, %v1022
        %1024 = vmatprep.mubr.bf16.mxu0 0
        %1025 = vmatmul.mubr.bf16.gmra.mxu0 %v569
        %v1026 = vpop.f32.mrf.mxu0
        %v1027 = vadd.f32 %v403, %v1026
        %v1028 = vpop.f32.mrf.mxu0
        %v1029 = vadd.f32 %v407, %v1028
        %v1030 = vpop.f32.mrf.mxu0
        %v1031 = vadd.f32 %v403, %v1030
        %v1032 = vpop.f32.mrf.mxu0
        %v1033 = vadd.f32 %v407, %v1032
        %1034 = vdwg.mxu0
        %v1035 = vadd.f32 %v717, %v721
        %v1036 = vadd.f32 %v1035, %v727
        %v1037 = vadd.f32 %v1036, %v731
        %v1038 = vadd.f32 %v1037, %v737
        %v1039 = vadd.f32 %v1038, %v741
        %v1040 = vadd.f32 %v1039, %v747
        %v1041 = vadd.f32 %v1040, %v751
        %v1042 = vadd.f32 %v1041, %v757
        %v1043 = vadd.f32 %v1042, %v761
        %v1044 = vadd.f32 %v1043, %v767
        %v1045 = vadd.f32 %v1044, %v771
        %v1046 = vadd.f32 %v1045, %v777
        %v1047 = vadd.f32 %v1046, %v781
        %v1048 = vadd.f32 %v1047, %v787
        %v1049 = vadd.f32 %v1048, %v791
        %v1050 = vadd.f32 %v1049, %v797
        %v1051 = vadd.f32 %v1050, %v801
        %v1052 = vadd.f32 %v1051, %v807
        %v1053 = vadd.f32 %v1052, %v811
        %v1054 = vadd.f32 %v1053, %v817
        %v1055 = vadd.f32 %v1054, %v821
        %v1056 = vadd.f32 %v1055, %v827
        %v1057 = vadd.f32 %v1056, %v831
        %v1058 = vadd.f32 %v1057, %v837
        %v1059 = vadd.f32 %v1058, %v841
        %v1060 = vadd.f32 %v1059, %v847
        %v1061 = vadd.f32 %v1060, %v851
        %v1062 = vadd.f32 %v1061, %v857
        %v1063 = vadd.f32 %v1062, %v861
        %v1064 = vadd.f32 %v1063, %v867
        %v1065 = vadd.f32 %v1064, %v871
        %v1066 = vrot.slane %v1065, 4
        %v1067 = vadd.f32 %v1065, %v1066
        %v1068 = vrot.slane %v1067, 2
        %v1069 = vadd.f32 %v1067, %v1068
        %v1070 = vrot.slane %v1069, 1
        %v1071 = vadd.f32 %v1069, %v1070
        %v1072 = vadd.f32 %v719, %v723
        %v1073 = vadd.f32 %v1072, %v729
        %v1074 = vadd.f32 %v1073, %v733
        %v1075 = vadd.f32 %v1074, %v739
        %v1076 = vadd.f32 %v1075, %v743
        %v1077 = vadd.f32 %v1076, %v749
        %v1078 = vadd.f32 %v1077, %v753
        %v1079 = vadd.f32 %v1078, %v759
        %v1080 = vadd.f32 %v1079, %v763
        %v1081 = vadd.f32 %v1080, %v769
        %v1082 = vadd.f32 %v1081, %v773
        %v1083 = vadd.f32 %v1082, %v779
        %v1084 = vadd.f32 %v1083, %v783
        %v1085 = vadd.f32 %v1084, %v789
        %v1086 = vadd.f32 %v1085, %v793
        %v1087 = vadd.f32 %v1086, %v799
        %v1088 = vadd.f32 %v1087, %v803
        %v1089 = vadd.f32 %v1088, %v809
        %v1090 = vadd.f32 %v1089, %v813
        %v1091 = vadd.f32 %v1090, %v819
        %v1092 = vadd.f32 %v1091, %v823
        %v1093 = vadd.f32 %v1092, %v829
        %v1094 = vadd.f32 %v1093, %v833
        %v1095 = vadd.f32 %v1094, %v839
        %v1096 = vadd.f32 %v1095, %v843
        %v1097 = vadd.f32 %v1096, %v849
        %v1098 = vadd.f32 %v1097, %v853
        %v1099 = vadd.f32 %v1098, %v859
        %v1100 = vadd.f32 %v1099, %v863
        %v1101 = vadd.f32 %v1100, %v869
        %v1102 = vadd.f32 %v1101, %v873
        %v1103 = vrot.slane %v1102, 4
        %v1104 = vadd.f32 %v1102, %v1103
        %v1105 = vrot.slane %v1104, 2
        %v1106 = vadd.f32 %v1104, %v1105
        %v1107 = vrot.slane %v1106, 1
        %v1108 = vadd.f32 %v1106, %v1107
        %v1109 = vrcp.pop 256.0
        %v1110 = vmul.f32 %v1071, %v1109
        %v1111 = vmul.f32 %v1108, %v1109
        %v1112 = vadd.f32 %v877, %v881
        %v1113 = vadd.f32 %v1112, %v887
        %v1114 = vadd.f32 %v1113, %v891
        %v1115 = vadd.f32 %v1114, %v897
        %v1116 = vadd.f32 %v1115, %v901
        %v1117 = vadd.f32 %v1116, %v907
        %v1118 = vadd.f32 %v1117, %v911
        %v1119 = vadd.f32 %v1118, %v917
        %v1120 = vadd.f32 %v1119, %v921
        %v1121 = vadd.f32 %v1120, %v927
        %v1122 = vadd.f32 %v1121, %v931
        %v1123 = vadd.f32 %v1122, %v937
        %v1124 = vadd.f32 %v1123, %v941
        %v1125 = vadd.f32 %v1124, %v947
        %v1126 = vadd.f32 %v1125, %v951
        %v1127 = vadd.f32 %v1126, %v957
        %v1128 = vadd.f32 %v1127, %v961
        %v1129 = vadd.f32 %v1128, %v967
        %v1130 = vadd.f32 %v1129, %v971
        %v1131 = vadd.f32 %v1130, %v977
        %v1132 = vadd.f32 %v1131, %v981
        %v1133 = vadd.f32 %v1132, %v987
        %v1134 = vadd.f32 %v1133, %v991
        %v1135 = vadd.f32 %v1134, %v997
        %v1136 = vadd.f32 %v1135, %v1001
        %v1137 = vadd.f32 %v1136, %v1007
        %v1138 = vadd.f32 %v1137, %v1011
        %v1139 = vadd.f32 %v1138, %v1017
        %v1140 = vadd.f32 %v1139, %v1021
        %v1141 = vadd.f32 %v1140, %v1027
        %v1142 = vadd.f32 %v1141, %v1031
        %v1143 = vrot.slane %v1142, 4
        %v1144 = vadd.f32 %v1142, %v1143
        %v1145 = vrot.slane %v1144, 2
        %v1146 = vadd.f32 %v1144, %v1145
        %v1147 = vrot.slane %v1146, 1
        %v1148 = vadd.f32 %v1146, %v1147
        %v1149 = vadd.f32 %v879, %v883
        %v1150 = vadd.f32 %v1149, %v889
        %v1151 = vadd.f32 %v1150, %v893
        %v1152 = vadd.f32 %v1151, %v899
        %v1153 = vadd.f32 %v1152, %v903
        %v1154 = vadd.f32 %v1153, %v909
        %v1155 = vadd.f32 %v1154, %v913
        %v1156 = vadd.f32 %v1155, %v919
        %v1157 = vadd.f32 %v1156, %v923
        %v1158 = vadd.f32 %v1157, %v929
        %v1159 = vadd.f32 %v1158, %v933
        %v1160 = vadd.f32 %v1159, %v939
        %v1161 = vadd.f32 %v1160, %v943
        %v1162 = vadd.f32 %v1161, %v949
        %v1163 = vadd.f32 %v1162, %v953
        %v1164 = vadd.f32 %v1163, %v959
        %v1165 = vadd.f32 %v1164, %v963
        %v1166 = vadd.f32 %v1165, %v969
        %v1167 = vadd.f32 %v1166, %v973
        %v1168 = vadd.f32 %v1167, %v979
        %v1169 = vadd.f32 %v1168, %v983
        %v1170 = vadd.f32 %v1169, %v989
        %v1171 = vadd.f32 %v1170, %v993
        %v1172 = vadd.f32 %v1171, %v999
        %v1173 = vadd.f32 %v1172, %v1003
        %v1174 = vadd.f32 %v1173, %v1009
        %v1175 = vadd.f32 %v1174, %v1013
        %v1176 = vadd.f32 %v1175, %v1019
        %v1177 = vadd.f32 %v1176, %v1023
        %v1178 = vadd.f32 %v1177, %v1029
        %v1179 = vadd.f32 %v1178, %v1033
        %v1180 = vrot.slane %v1179, 4
        %v1181 = vadd.f32 %v1179, %v1180
        %v1182 = vrot.slane %v1181, 2
        %v1183 = vadd.f32 %v1181, %v1182
        %v1184 = vrot.slane %v1183, 1
        %v1185 = vadd.f32 %v1183, %v1184
        %v1186 = vmul.f32 %v1148, %v1109
        %v1187 = vmul.f32 %v1185, %v1109
        %vm1188 = vcmask 1040384
        %v1189 = vsel %vm1188, %v1110, %v1186
        %v1190 = vsel %vm1188, %v1111, %v1187
        %v1191 = vpack.c.bf16 %v1189, %v1189
        %v1192 = vpack.c.bf16 %v1190, %v1190
        %v1193 = vld [vmem:[%s3] sm:$0xff]
        %v1194 = vld [vmem:[%s3 + $0x8] sm:$0xff]
        %v1195 = vld [vmem:[%s3 + $0x10] sm:$0xff]
        %v1196 = vld [vmem:[%s3 + $0x18] sm:$0xff]
        %v1197 = vld [vmem:[%s3 + $0x20] sm:$0xff]
        %v1198 = vld [vmem:[%s3 + $0x28] sm:$0xff]
        %v1199 = vld [vmem:[%s3 + $0x30] sm:$0xff]
        %v1200 = vld [vmem:[%s3 + $0x38] sm:$0xff]
        %v1201 = vld [vmem:[%s3 + $0x40] sm:$0xff]
        %v1202 = vld [vmem:[%s3 + $0x48] sm:$0xff]
        %v1203 = vld [vmem:[%s3 + $0x50] sm:$0xff]
        %v1204 = vld [vmem:[%s3 + $0x58] sm:$0xff]
        %v1205 = vld [vmem:[%s3 + $0x60] sm:$0xff]
        %v1206 = vld [vmem:[%s3 + $0x68] sm:$0xff]
        %v1207 = vld [vmem:[%s3 + $0x70] sm:$0xff]
        %v1208 = vld [vmem:[%s3 + $0x78] sm:$0xff]
        %v1209 = vld [vmem:[%s3 + $0x80] sm:$0xff]
        %v1210 = vld [vmem:[%s3 + $0x88] sm:$0xff]
        %v1211 = vld [vmem:[%s3 + $0x90] sm:$0xff]
        %v1212 = vld [vmem:[%s3 + $0x98] sm:$0xff]
        %v1213 = vld [vmem:[%s3 + $0xa0] sm:$0xff]
        %v1214 = vld [vmem:[%s3 + $0xa8] sm:$0xff]
        %v1215 = vld [vmem:[%s3 + $0xb0] sm:$0xff]
        %v1216 = vld [vmem:[%s3 + $0xb8] sm:$0xff]
        %v1217 = vld [vmem:[%s3 + $0xc0] sm:$0xff]
        %v1218 = vld [vmem:[%s3 + $0xc8] sm:$0xff]
        %v1219 = vld [vmem:[%s3 + $0xd0] sm:$0xff]
        %v1220 = vld [vmem:[%s3 + $0xd8] sm:$0xff]
        %v1221 = vld [vmem:[%s3 + $0xe0] sm:$0xff]
        %v1222 = vld [vmem:[%s3 + $0xe8] sm:$0xff]
        %v1223 = vld [vmem:[%s3 + $0xf0] sm:$0xff]
        %v1224 = vld [vmem:[%s3 + $0xf8] sm:$0xff]
        %v1225 = vld [vmem:[%s4] sm:$0x3]
        %v1227 = vlaneseq
        %v1228 = vshrl.u32 %v1227, 7
        %v1229 = vsub.s32 0, %v1228
        %v1230 = vrot.slane %v1225, %v1229
        %v1231 = vlaneseq
        %v1232 = vshrl.u32 %v1231, 7
        %v1233 = vsub.s32 1, %v1232
        %v1234 = vrot.slane %v1225, %v1233
        %v1269 = vunpack.c.l.b16 %v1193
        %v1270 = vunpack.c.h.b16 %v1193
        %v1271 = vunpack.c.l.b16 %v1194
        %v1272 = vunpack.c.h.b16 %v1194
        %v1273 = vunpack.c.l.b16 %v1195
        %v1274 = vunpack.c.h.b16 %v1195
        %v1275 = vunpack.c.l.b16 %v1196
        %v1276 = vunpack.c.h.b16 %v1196
        %v1277 = vunpack.c.l.b16 %v1197
        %v1278 = vunpack.c.h.b16 %v1197
        %v1279 = vunpack.c.l.b16 %v1198
        %v1280 = vunpack.c.h.b16 %v1198
        %v1281 = vunpack.c.l.b16 %v1199
        %v1282 = vunpack.c.h.b16 %v1199
        %v1283 = vunpack.c.l.b16 %v1200
        %v1284 = vunpack.c.h.b16 %v1200
        %v1285 = vunpack.c.l.b16 %v1201
        %v1286 = vunpack.c.h.b16 %v1201
        %v1287 = vunpack.c.l.b16 %v1202
        %v1288 = vunpack.c.h.b16 %v1202
        %v1289 = vunpack.c.l.b16 %v1203
        %v1290 = vunpack.c.h.b16 %v1203
        %v1291 = vunpack.c.l.b16 %v1204
        %v1292 = vunpack.c.h.b16 %v1204
        %v1293 = vunpack.c.l.b16 %v1205
        %v1294 = vunpack.c.h.b16 %v1205
        %v1295 = vunpack.c.l.b16 %v1206
        %v1296 = vunpack.c.h.b16 %v1206
        %v1297 = vunpack.c.l.b16 %v1207
        %v1298 = vunpack.c.h.b16 %v1207
        %v1299 = vunpack.c.l.b16 %v1208
        %v1300 = vunpack.c.h.b16 %v1208
        %v1301 = vunpack.c.l.b16 %v1209
        %v1302 = vunpack.c.h.b16 %v1209
        %v1303 = vunpack.c.l.b16 %v1210
        %v1304 = vunpack.c.h.b16 %v1210
        %v1305 = vunpack.c.l.b16 %v1211
        %v1306 = vunpack.c.h.b16 %v1211
        %v1307 = vunpack.c.l.b16 %v1212
        %v1308 = vunpack.c.h.b16 %v1212
        %v1309 = vunpack.c.l.b16 %v1213
        %v1310 = vunpack.c.h.b16 %v1213
        %v1311 = vunpack.c.l.b16 %v1214
        %v1312 = vunpack.c.h.b16 %v1214
        %v1313 = vunpack.c.l.b16 %v1215
        %v1314 = vunpack.c.h.b16 %v1215
        %v1315 = vunpack.c.l.b16 %v1216
        %v1316 = vunpack.c.h.b16 %v1216
        %v1317 = vunpack.c.l.b16 %v1217
        %v1318 = vunpack.c.h.b16 %v1217
        %v1319 = vunpack.c.l.b16 %v1218
        %v1320 = vunpack.c.h.b16 %v1218
        %v1321 = vunpack.c.l.b16 %v1219
        %v1322 = vunpack.c.h.b16 %v1219
        %v1323 = vunpack.c.l.b16 %v1220
        %v1324 = vunpack.c.h.b16 %v1220
        %v1325 = vunpack.c.l.b16 %v1221
        %v1326 = vunpack.c.h.b16 %v1221
        %v1327 = vunpack.c.l.b16 %v1222
        %v1328 = vunpack.c.h.b16 %v1222
        %v1329 = vunpack.c.l.b16 %v1223
        %v1330 = vunpack.c.h.b16 %v1223
        %v1331 = vunpack.c.l.b16 %v1224
        %v1332 = vunpack.c.h.b16 %v1224
        %v1333 = vpack.c.b16 %v1271, %v1269
        %v1334 = vpack.c.b16 %v1272, %v1270
        %v1335 = vpack.c.b16 %v1275, %v1273
        %v1336 = vpack.c.b16 %v1276, %v1274
        %v1337 = vpack.c.b16 %v1279, %v1277
        %v1338 = vpack.c.b16 %v1280, %v1278
        %v1339 = vpack.c.b16 %v1283, %v1281
        %v1340 = vpack.c.b16 %v1284, %v1282
        %v1341 = vpack.c.b16 %v1287, %v1285
        %v1342 = vpack.c.b16 %v1288, %v1286
        %v1343 = vpack.c.b16 %v1291, %v1289
        %v1344 = vpack.c.b16 %v1292, %v1290
        %v1345 = vpack.c.b16 %v1295, %v1293
        %v1346 = vpack.c.b16 %v1296, %v1294
        %v1347 = vpack.c.b16 %v1299, %v1297
        %v1348 = vpack.c.b16 %v1300, %v1298
        %v1349 = vpack.c.b16 %v1303, %v1301
        %v1350 = vpack.c.b16 %v1304, %v1302
        %v1351 = vpack.c.b16 %v1307, %v1305
        %v1352 = vpack.c.b16 %v1308, %v1306
        %v1353 = vpack.c.b16 %v1311, %v1309
        %v1354 = vpack.c.b16 %v1312, %v1310
        %v1355 = vpack.c.b16 %v1315, %v1313
        %v1356 = vpack.c.b16 %v1316, %v1314
        %v1357 = vpack.c.b16 %v1319, %v1317
        %v1358 = vpack.c.b16 %v1320, %v1318
        %v1359 = vpack.c.b16 %v1323, %v1321
        %v1360 = vpack.c.b16 %v1324, %v1322
        %v1361 = vpack.c.b16 %v1327, %v1325
        %v1362 = vpack.c.b16 %v1328, %v1326
        %v1363 = vpack.c.b16 %v1331, %v1329
        %v1364 = vpack.c.b16 %v1332, %v1330
        %1397 = vmatprep.subr.bf16.mxu0 %v1348
        %1398 = vmatpush1.bf16.msra.mxu0 %v1347
        %1399 = vmatprep.subr.bf16.mxu0 %v1346
        %1400 = vmatpush1.bf16.msra.mxu0 %v1345
        %1401 = vmatprep.subr.bf16.mxu0 %v1344
        %1402 = vmatpush1.bf16.msra.mxu0 %v1343
        %1403 = vmatprep.subr.bf16.mxu0 %v1342
        %1404 = vmatpush1.bf16.msra.mxu0 %v1341
        %1405 = vmatprep.subr.bf16.mxu0 %v1340
        %1406 = vmatpush1.bf16.msra.mxu0 %v1339
        %1407 = vmatprep.subr.bf16.mxu0 %v1338
        %1408 = vmatpush1.bf16.msra.mxu0 %v1337
        %1409 = vmatprep.subr.bf16.mxu0 %v1336
        %1410 = vmatpush1.bf16.msra.mxu0 %v1335
        %1411 = vmatprep.subr.bf16.mxu0 %v1334
        %1412 = vmatpush1.bf16.msra.mxu0 %v1333
        %1413 = vmatprep.subr.bf16.mxu0 %v1364
        %1414 = vmatpush2.bf16.msra.mxu0 %v1363
        %1415 = vmatprep.subr.bf16.mxu0 %v1362
        %1416 = vmatpush2.bf16.msra.mxu0 %v1361
        %1417 = vmatprep.subr.bf16.mxu0 %v1360
        %1418 = vmatpush2.bf16.msra.mxu0 %v1359
        %1419 = vmatprep.subr.bf16.mxu0 %v1358
        %1420 = vmatpush2.bf16.msra.mxu0 %v1357
        %1421 = vmatprep.subr.bf16.mxu0 %v1356
        %1422 = vmatpush2.bf16.msra.mxu0 %v1355
        %1423 = vmatprep.subr.bf16.mxu0 %v1354
        %1424 = vmatpush2.bf16.msra.mxu0 %v1353
        %1425 = vmatprep.subr.bf16.mxu0 %v1352
        %1426 = vmatpush2.bf16.msra.mxu0 %v1351
        %1427 = vmatprep.subr.bf16.mxu0 %v1350
        %1428 = vmatpush2.bf16.msra.mxu0 %v1349
        %1429 = vmatprep.mubr.bf16.mxu0 %v1192
        %1430 = vmatmul.mubr.bf16.gmra.mxu0 %v1191
        %v1431 = vpop.f32.mrf.mxu0
        %v1432 = vadd.f32 %v1230, %v1431
        %v1433 = vpop.f32.mrf.mxu0
        %v1434 = vadd.f32 %v1234, %v1433
        %v1435 = vpop.f32.mrf.mxu0
        %v1436 = vpop.f32.mrf.mxu0
        %1437 = vdwg.mxu0
        %v1438 = vpack.c.bf16 %v1432, %v1432
        %v1439 = vpack.c.bf16 %v1434, %v1434
        %v1440 = vld [vmem:[%s5] sm:$0xff]
        %v1441 = vld [vmem:[%s5 + $0x8] sm:$0xff]
        %v1442 = vld [vmem:[%s5 + $0x10] sm:$0xff]
        %v1443 = vld [vmem:[%s5 + $0x18] sm:$0xff]
        %v1444 = vld [vmem:[%s5 + $0x20] sm:$0xff]
        %v1445 = vld [vmem:[%s5 + $0x28] sm:$0xff]
        %v1446 = vld [vmem:[%s5 + $0x30] sm:$0xff]
        %v1447 = vld [vmem:[%s5 + $0x38] sm:$0xff]
        %v1448 = vld [vmem:[%s5 + $0x40] sm:$0xff]
        %v1449 = vld [vmem:[%s5 + $0x48] sm:$0xff]
        %v1450 = vld [vmem:[%s5 + $0x50] sm:$0xff]
        %v1451 = vld [vmem:[%s5 + $0x58] sm:$0xff]
        %v1452 = vld [vmem:[%s5 + $0x60] sm:$0xff]
        %v1453 = vld [vmem:[%s5 + $0x68] sm:$0xff]
        %v1454 = vld [vmem:[%s5 + $0x70] sm:$0xff]
        %v1455 = vld [vmem:[%s5 + $0x78] sm:$0xff]
        %v1456 = vld [vmem:[%s5 + $0x80] sm:$0xff]
        %v1457 = vld [vmem:[%s5 + $0x88] sm:$0xff]
        %v1458 = vld [vmem:[%s5 + $0x90] sm:$0xff]
        %v1459 = vld [vmem:[%s5 + $0x98] sm:$0xff]
        %v1460 = vld [vmem:[%s5 + $0xa0] sm:$0xff]
        %v1461 = vld [vmem:[%s5 + $0xa8] sm:$0xff]
        %v1462 = vld [vmem:[%s5 + $0xb0] sm:$0xff]
        %v1463 = vld [vmem:[%s5 + $0xb8] sm:$0xff]
        %v1464 = vld [vmem:[%s5 + $0xc0] sm:$0xff]
        %v1465 = vld [vmem:[%s5 + $0xc8] sm:$0xff]
        %v1466 = vld [vmem:[%s5 + $0xd0] sm:$0xff]
        %v1467 = vld [vmem:[%s5 + $0xd8] sm:$0xff]
        %v1468 = vld [vmem:[%s5 + $0xe0] sm:$0xff]
        %v1469 = vld [vmem:[%s5 + $0xe8] sm:$0xff]
        %v1470 = vld [vmem:[%s5 + $0xf0] sm:$0xff]
        %v1471 = vld [vmem:[%s5 + $0xf8] sm:$0xff]
        %v1472 = vld [vmem:[%s6] sm:$0x3]
        %v1474 = vlaneseq
        %v1475 = vshrl.u32 %v1474, 7
        %v1476 = vsub.s32 0, %v1475
        %v1477 = vrot.slane %v1472, %v1476
        %v1478 = vlaneseq
        %v1479 = vshrl.u32 %v1478, 7
        %v1480 = vsub.s32 1, %v1479
        %v1481 = vrot.slane %v1472, %v1480
        %v1516 = vunpack.c.l.b16 %v1440
        %v1517 = vunpack.c.h.b16 %v1440
        %v1518 = vunpack.c.l.b16 %v1441
        %v1519 = vunpack.c.h.b16 %v1441
        %v1520 = vunpack.c.l.b16 %v1442
        %v1521 = vunpack.c.h.b16 %v1442
        %v1522 = vunpack.c.l.b16 %v1443
        %v1523 = vunpack.c.h.b16 %v1443
        %v1524 = vunpack.c.l.b16 %v1444
        %v1525 = vunpack.c.h.b16 %v1444
        %v1526 = vunpack.c.l.b16 %v1445
        %v1527 = vunpack.c.h.b16 %v1445
        %v1528 = vunpack.c.l.b16 %v1446
        %v1529 = vunpack.c.h.b16 %v1446
        %v1530 = vunpack.c.l.b16 %v1447
        %v1531 = vunpack.c.h.b16 %v1447
        %v1532 = vunpack.c.l.b16 %v1448
        %v1533 = vunpack.c.h.b16 %v1448
        %v1534 = vunpack.c.l.b16 %v1449
        %v1535 = vunpack.c.h.b16 %v1449
        %v1536 = vunpack.c.l.b16 %v1450
        %v1537 = vunpack.c.h.b16 %v1450
        %v1538 = vunpack.c.l.b16 %v1451
        %v1539 = vunpack.c.h.b16 %v1451
        %v1540 = vunpack.c.l.b16 %v1452
        %v1541 = vunpack.c.h.b16 %v1452
        %v1542 = vunpack.c.l.b16 %v1453
        %v1543 = vunpack.c.h.b16 %v1453
        %v1544 = vunpack.c.l.b16 %v1454
        %v1545 = vunpack.c.h.b16 %v1454
        %v1546 = vunpack.c.l.b16 %v1455
        %v1547 = vunpack.c.h.b16 %v1455
        %v1548 = vunpack.c.l.b16 %v1456
        %v1549 = vunpack.c.h.b16 %v1456
        %v1550 = vunpack.c.l.b16 %v1457
        %v1551 = vunpack.c.h.b16 %v1457
        %v1552 = vunpack.c.l.b16 %v1458
        %v1553 = vunpack.c.h.b16 %v1458
        %v1554 = vunpack.c.l.b16 %v1459
        %v1555 = vunpack.c.h.b16 %v1459
        %v1556 = vunpack.c.l.b16 %v1460
        %v1557 = vunpack.c.h.b16 %v1460
        %v1558 = vunpack.c.l.b16 %v1461
        %v1559 = vunpack.c.h.b16 %v1461
        %v1560 = vunpack.c.l.b16 %v1462
        %v1561 = vunpack.c.h.b16 %v1462
        %v1562 = vunpack.c.l.b16 %v1463
        %v1563 = vunpack.c.h.b16 %v1463
        %v1564 = vunpack.c.l.b16 %v1464
        %v1565 = vunpack.c.h.b16 %v1464
        %v1566 = vunpack.c.l.b16 %v1465
        %v1567 = vunpack.c.h.b16 %v1465
        %v1568 = vunpack.c.l.b16 %v1466
        %v1569 = vunpack.c.h.b16 %v1466
        %v1570 = vunpack.c.l.b16 %v1467
        %v1571 = vunpack.c.h.b16 %v1467
        %v1572 = vunpack.c.l.b16 %v1468
        %v1573 = vunpack.c.h.b16 %v1468
        %v1574 = vunpack.c.l.b16 %v1469
        %v1575 = vunpack.c.h.b16 %v1469
        %v1576 = vunpack.c.l.b16 %v1470
        %v1577 = vunpack.c.h.b16 %v1470
        %v1578 = vunpack.c.l.b16 %v1471
        %v1579 = vunpack.c.h.b16 %v1471
        %v1580 = vpack.c.b16 %v1518, %v1516
        %v1581 = vpack.c.b16 %v1519, %v1517
        %v1582 = vpack.c.b16 %v1522, %v1520
        %v1583 = vpack.c.b16 %v1523, %v1521
        %v1584 = vpack.c.b16 %v1526, %v1524
        %v1585 = vpack.c.b16 %v1527, %v1525
        %v1586 = vpack.c.b16 %v1530, %v1528
        %v1587 = vpack.c.b16 %v1531, %v1529
        %v1588 = vpack.c.b16 %v1534, %v1532
        %v1589 = vpack.c.b16 %v1535, %v1533
        %v1590 = vpack.c.b16 %v1538, %v1536
        %v1591 = vpack.c.b16 %v1539, %v1537
        %v1592 = vpack.c.b16 %v1542, %v1540
        %v1593 = vpack.c.b16 %v1543, %v1541
        %v1594 = vpack.c.b16 %v1546, %v1544
        %v1595 = vpack.c.b16 %v1547, %v1545
        %v1596 = vpack.c.b16 %v1550, %v1548
        %v1597 = vpack.c.b16 %v1551, %v1549
        %v1598 = vpack.c.b16 %v1554, %v1552
        %v1599 = vpack.c.b16 %v1555, %v1553
        %v1600 = vpack.c.b16 %v1558, %v1556
        %v1601 = vpack.c.b16 %v1559, %v1557
        %v1602 = vpack.c.b16 %v1562, %v1560
        %v1603 = vpack.c.b16 %v1563, %v1561
        %v1604 = vpack.c.b16 %v1566, %v1564
        %v1605 = vpack.c.b16 %v1567, %v1565
        %v1606 = vpack.c.b16 %v1570, %v1568
        %v1607 = vpack.c.b16 %v1571, %v1569
        %v1608 = vpack.c.b16 %v1574, %v1572
        %v1609 = vpack.c.b16 %v1575, %v1573
        %v1610 = vpack.c.b16 %v1578, %v1576
        %v1611 = vpack.c.b16 %v1579, %v1577
        %1644 = vmatprep.subr.bf16.mxu0 %v1595
        %1645 = vmatpush1.bf16.msra.mxu0 %v1594
        %1646 = vmatprep.subr.bf16.mxu0 %v1593
        %1647 = vmatpush1.bf16.msra.mxu0 %v1592
        %1648 = vmatprep.subr.bf16.mxu0 %v1591
        %1649 = vmatpush1.bf16.msra.mxu0 %v1590
        %1650 = vmatprep.subr.bf16.mxu0 %v1589
        %1651 = vmatpush1.bf16.msra.mxu0 %v1588
        %1652 = vmatprep.subr.bf16.mxu0 %v1587
        %1653 = vmatpush1.bf16.msra.mxu0 %v1586
        %1654 = vmatprep.subr.bf16.mxu0 %v1585
        %1655 = vmatpush1.bf16.msra.mxu0 %v1584
        %1656 = vmatprep.subr.bf16.mxu0 %v1583
        %1657 = vmatpush1.bf16.msra.mxu0 %v1582
        %1658 = vmatprep.subr.bf16.mxu0 %v1581
        %1659 = vmatpush1.bf16.msra.mxu0 %v1580
        %1660 = vmatprep.subr.bf16.mxu0 %v1611
        %1661 = vmatpush2.bf16.msra.mxu0 %v1610
        %1662 = vmatprep.subr.bf16.mxu0 %v1609
        %1663 = vmatpush2.bf16.msra.mxu0 %v1608
        %1664 = vmatprep.subr.bf16.mxu0 %v1607
        %1665 = vmatpush2.bf16.msra.mxu0 %v1606
        %1666 = vmatprep.subr.bf16.mxu0 %v1605
        %1667 = vmatpush2.bf16.msra.mxu0 %v1604
        %1668 = vmatprep.subr.bf16.mxu0 %v1603
        %1669 = vmatpush2.bf16.msra.mxu0 %v1602
        %1670 = vmatprep.subr.bf16.mxu0 %v1601
        %1671 = vmatpush2.bf16.msra.mxu0 %v1600
        %1672 = vmatprep.subr.bf16.mxu0 %v1599
        %1673 = vmatpush2.bf16.msra.mxu0 %v1598
        %1674 = vmatprep.subr.bf16.mxu0 %v1597
        %1675 = vmatpush2.bf16.msra.mxu0 %v1596
        %1676 = vmatprep.mubr.bf16.mxu0 %v1439
        %1677 = vmatmul.mubr.bf16.gmra.mxu0 %v1438
        %v1678 = vpop.f32.mrf.mxu0
        %v1679 = vadd.f32 %v1477, %v1678
        %v1680 = vpop.f32.mrf.mxu0
        %v1681 = vadd.f32 %v1481, %v1680
        %v1682 = vpop.f32.mrf.mxu0
        %v1683 = vpop.f32.mrf.mxu0
        %1684 = vdwg.mxu0
        %v1685 = vlaneseq
        %v1686 = vshrl.u32 %v1685, 7
        %v1687 = vsub.s32 0, %v1686
        %v1688 = vrot.slane %v1679, %v1687
        %v1689 = vlaneseq
        %v1690 = vshrl.u32 %v1689, 7
        %v1691 = vsub.s32 0, %v1690
        %v1692 = vrot.slane %v1681, %v1691
        %v1693 = vmul.f32 %v717, %v1688
        %v1694 = vmul.f32 %v719, %v1692
        %v1695 = vmul.f32 %v721, %v1688
        %v1696 = vmul.f32 %v723, %v1692
        %v1697 = vmul.f32 %v727, %v1688
        %v1698 = vmul.f32 %v729, %v1692
        %v1699 = vmul.f32 %v731, %v1688
        %v1700 = vmul.f32 %v733, %v1692
        %v1701 = vmul.f32 %v737, %v1688
        %v1702 = vmul.f32 %v739, %v1692
        %v1703 = vmul.f32 %v741, %v1688
        %v1704 = vmul.f32 %v743, %v1692
        %v1705 = vmul.f32 %v747, %v1688
        %v1706 = vmul.f32 %v749, %v1692
        %v1707 = vmul.f32 %v751, %v1688
        %v1708 = vmul.f32 %v753, %v1692
        %v1709 = vmul.f32 %v757, %v1688
        %v1710 = vmul.f32 %v759, %v1692
        %v1711 = vmul.f32 %v761, %v1688
        %v1712 = vmul.f32 %v763, %v1692
        %v1713 = vmul.f32 %v767, %v1688
        %v1714 = vmul.f32 %v769, %v1692
        %v1715 = vmul.f32 %v771, %v1688
        %v1716 = vmul.f32 %v773, %v1692
        %v1717 = vmul.f32 %v777, %v1688
        %v1718 = vmul.f32 %v779, %v1692
        %v1719 = vmul.f32 %v781, %v1688
        %v1720 = vmul.f32 %v783, %v1692
        %v1721 = vmul.f32 %v787, %v1688
        %v1722 = vmul.f32 %v789, %v1692
        %v1723 = vmul.f32 %v791, %v1688
        %v1724 = vmul.f32 %v793, %v1692
        %v1725 = vmul.f32 %v797, %v1688
        %v1726 = vmul.f32 %v799, %v1692
        %v1727 = vmul.f32 %v801, %v1688
        %v1728 = vmul.f32 %v803, %v1692
        %v1729 = vmul.f32 %v807, %v1688
        %v1730 = vmul.f32 %v809, %v1692
        %v1731 = vmul.f32 %v811, %v1688
        %v1732 = vmul.f32 %v813, %v1692
        %v1733 = vmul.f32 %v817, %v1688
        %v1734 = vmul.f32 %v819, %v1692
        %v1735 = vmul.f32 %v821, %v1688
        %v1736 = vmul.f32 %v823, %v1692
        %v1737 = vmul.f32 %v827, %v1688
        %v1738 = vmul.f32 %v829, %v1692
        %v1739 = vmul.f32 %v831, %v1688
        %v1740 = vmul.f32 %v833, %v1692
        %v1741 = vmul.f32 %v837, %v1688
        %v1742 = vmul.f32 %v839, %v1692
        %v1743 = vmul.f32 %v841, %v1688
        %v1744 = vmul.f32 %v843, %v1692
        %v1745 = vmul.f32 %v847, %v1688
        %v1746 = vmul.f32 %v849, %v1692
        %v1747 = vmul.f32 %v851, %v1688
        %v1748 = vmul.f32 %v853, %v1692
        %v1749 = vmul.f32 %v857, %v1688
        %v1750 = vmul.f32 %v859, %v1692
        %v1751 = vmul.f32 %v861, %v1688
        %v1752 = vmul.f32 %v863, %v1692
        %v1753 = vmul.f32 %v867, %v1688
        %v1754 = vmul.f32 %v869, %v1692
        %v1755 = vmul.f32 %v871, %v1688
        %v1756 = vmul.f32 %v873, %v1692
        %v1757 = vadd.f32 %v717, %v1693
        %v1758 = vadd.f32 %v719, %v1694
        %v1759 = vadd.f32 %v721, %v1695
        %v1760 = vadd.f32 %v723, %v1696
        %v1761 = vadd.f32 %v727, %v1697
        %v1762 = vadd.f32 %v729, %v1698
        %v1763 = vadd.f32 %v731, %v1699
        %v1764 = vadd.f32 %v733, %v1700
        %v1765 = vadd.f32 %v737, %v1701
        %v1766 = vadd.f32 %v739, %v1702
        %v1767 = vadd.f32 %v741, %v1703
        %v1768 = vadd.f32 %v743, %v1704
        %v1769 = vadd.f32 %v747, %v1705
        %v1770 = vadd.f32 %v749, %v1706
        %v1771 = vadd.f32 %v751, %v1707
        %v1772 = vadd.f32 %v753, %v1708
        %v1773 = vadd.f32 %v757, %v1709
        %v1774 = vadd.f32 %v759, %v1710
        %v1775 = vadd.f32 %v761, %v1711
        %v1776 = vadd.f32 %v763, %v1712
        %v1777 = vadd.f32 %v767, %v1713
        %v1778 = vadd.f32 %v769, %v1714
        %v1779 = vadd.f32 %v771, %v1715
        %v1780 = vadd.f32 %v773, %v1716
        %v1781 = vadd.f32 %v777, %v1717
        %v1782 = vadd.f32 %v779, %v1718
        %v1783 = vadd.f32 %v781, %v1719
        %v1784 = vadd.f32 %v783, %v1720
        %v1785 = vadd.f32 %v787, %v1721
        %v1786 = vadd.f32 %v789, %v1722
        %v1787 = vadd.f32 %v791, %v1723
        %v1788 = vadd.f32 %v793, %v1724
        %v1789 = vadd.f32 %v797, %v1725
        %v1790 = vadd.f32 %v799, %v1726
        %v1791 = vadd.f32 %v801, %v1727
        %v1792 = vadd.f32 %v803, %v1728
        %v1793 = vadd.f32 %v807, %v1729
        %v1794 = vadd.f32 %v809, %v1730
        %v1795 = vadd.f32 %v811, %v1731
        %v1796 = vadd.f32 %v813, %v1732
        %v1797 = vadd.f32 %v817, %v1733
        %v1798 = vadd.f32 %v819, %v1734
        %v1799 = vadd.f32 %v821, %v1735
        %v1800 = vadd.f32 %v823, %v1736
        %v1801 = vadd.f32 %v827, %v1737
        %v1802 = vadd.f32 %v829, %v1738
        %v1803 = vadd.f32 %v831, %v1739
        %v1804 = vadd.f32 %v833, %v1740
        %v1805 = vadd.f32 %v837, %v1741
        %v1806 = vadd.f32 %v839, %v1742
        %v1807 = vadd.f32 %v841, %v1743
        %v1808 = vadd.f32 %v843, %v1744
        %v1809 = vadd.f32 %v847, %v1745
        %v1810 = vadd.f32 %v849, %v1746
        %v1811 = vadd.f32 %v851, %v1747
        %v1812 = vadd.f32 %v853, %v1748
        %v1813 = vadd.f32 %v857, %v1749
        %v1814 = vadd.f32 %v859, %v1750
        %v1815 = vadd.f32 %v861, %v1751
        %v1816 = vadd.f32 %v863, %v1752
        %v1817 = vadd.f32 %v867, %v1753
        %v1818 = vadd.f32 %v869, %v1754
        %v1819 = vadd.f32 %v871, %v1755
        %v1820 = vadd.f32 %v873, %v1756
        %v1821 = vpack.c.bf16 %v1759, %v1757
        %v1822 = vpack.c.bf16 %v1760, %v1758
        %v1823 = vpack.c.bf16 %v1763, %v1761
        %v1824 = vpack.c.bf16 %v1764, %v1762
        %v1825 = vpack.c.bf16 %v1767, %v1765
        %v1826 = vpack.c.bf16 %v1768, %v1766
        %v1827 = vpack.c.bf16 %v1771, %v1769
        %v1828 = vpack.c.bf16 %v1772, %v1770
        %v1829 = vpack.c.bf16 %v1775, %v1773
        %v1830 = vpack.c.bf16 %v1776, %v1774
        %v1831 = vpack.c.bf16 %v1779, %v1777
        %v1832 = vpack.c.bf16 %v1780, %v1778
        %v1833 = vpack.c.bf16 %v1783, %v1781
        %v1834 = vpack.c.bf16 %v1784, %v1782
        %v1835 = vpack.c.bf16 %v1787, %v1785
        %v1836 = vpack.c.bf16 %v1788, %v1786
        %v1837 = vpack.c.bf16 %v1791, %v1789
        %v1838 = vpack.c.bf16 %v1792, %v1790
        %v1839 = vpack.c.bf16 %v1795, %v1793
        %v1840 = vpack.c.bf16 %v1796, %v1794
        %v1841 = vpack.c.bf16 %v1799, %v1797
        %v1842 = vpack.c.bf16 %v1800, %v1798
        %v1843 = vpack.c.bf16 %v1803, %v1801
        %v1844 = vpack.c.bf16 %v1804, %v1802
        %v1845 = vpack.c.bf16 %v1807, %v1805
        %v1846 = vpack.c.bf16 %v1808, %v1806
        %v1847 = vpack.c.bf16 %v1811, %v1809
        %v1848 = vpack.c.bf16 %v1812, %v1810
        %v1849 = vpack.c.bf16 %v1815, %v1813
        %v1850 = vpack.c.bf16 %v1816, %v1814
        %v1851 = vpack.c.bf16 %v1819, %v1817
        %v1852 = vpack.c.bf16 %v1820, %v1818
        %v1885 = vunpack.c.l.b16 %v1821
        %v1886 = vunpack.c.l.b16 %v1822
        %v1887 = vunpack.c.h.b16 %v1821
        %v1888 = vunpack.c.h.b16 %v1822
        %v1889 = vunpack.c.l.b16 %v1823
        %v1890 = vunpack.c.l.b16 %v1824
        %v1891 = vunpack.c.h.b16 %v1823
        %v1892 = vunpack.c.h.b16 %v1824
        %v1893 = vunpack.c.l.b16 %v1825
        %v1894 = vunpack.c.l.b16 %v1826
        %v1895 = vunpack.c.h.b16 %v1825
        %v1896 = vunpack.c.h.b16 %v1826
        %v1897 = vunpack.c.l.b16 %v1827
        %v1898 = vunpack.c.l.b16 %v1828
        %v1899 = vunpack.c.h.b16 %v1827
        %v1900 = vunpack.c.h.b16 %v1828
        %v1901 = vunpack.c.l.b16 %v1829
        %v1902 = vunpack.c.l.b16 %v1830
        %v1903 = vunpack.c.h.b16 %v1829
        %v1904 = vunpack.c.h.b16 %v1830
        %v1905 = vunpack.c.l.b16 %v1831
        %v1906 = vunpack.c.l.b16 %v1832
        %v1907 = vunpack.c.h.b16 %v1831
        %v1908 = vunpack.c.h.b16 %v1832
        %v1909 = vunpack.c.l.b16 %v1833
        %v1910 = vunpack.c.l.b16 %v1834
        %v1911 = vunpack.c.h.b16 %v1833
        %v1912 = vunpack.c.h.b16 %v1834
        %v1913 = vunpack.c.l.b16 %v1835
        %v1914 = vunpack.c.l.b16 %v1836
        %v1915 = vunpack.c.h.b16 %v1835
        %v1916 = vunpack.c.h.b16 %v1836
        %v1917 = vunpack.c.l.b16 %v1837
        %v1918 = vunpack.c.l.b16 %v1838
        %v1919 = vunpack.c.h.b16 %v1837
        %v1920 = vunpack.c.h.b16 %v1838
        %v1921 = vunpack.c.l.b16 %v1839
        %v1922 = vunpack.c.l.b16 %v1840
        %v1923 = vunpack.c.h.b16 %v1839
        %v1924 = vunpack.c.h.b16 %v1840
        %v1925 = vunpack.c.l.b16 %v1841
        %v1926 = vunpack.c.l.b16 %v1842
        %v1927 = vunpack.c.h.b16 %v1841
        %v1928 = vunpack.c.h.b16 %v1842
        %v1929 = vunpack.c.l.b16 %v1843
        %v1930 = vunpack.c.l.b16 %v1844
        %v1931 = vunpack.c.h.b16 %v1843
        %v1932 = vunpack.c.h.b16 %v1844
        %v1933 = vunpack.c.l.b16 %v1845
        %v1934 = vunpack.c.l.b16 %v1846
        %v1935 = vunpack.c.h.b16 %v1845
        %v1936 = vunpack.c.h.b16 %v1846
        %v1937 = vunpack.c.l.b16 %v1847
        %v1938 = vunpack.c.l.b16 %v1848
        %v1939 = vunpack.c.h.b16 %v1847
        %v1940 = vunpack.c.h.b16 %v1848
        %v1941 = vunpack.c.l.b16 %v1849
        %v1942 = vunpack.c.l.b16 %v1850
        %v1943 = vunpack.c.h.b16 %v1849
        %v1944 = vunpack.c.h.b16 %v1850
        %v1945 = vunpack.c.l.b16 %v1851
        %v1946 = vunpack.c.l.b16 %v1852
        %v1947 = vunpack.c.h.b16 %v1851
        %v1948 = vunpack.c.h.b16 %v1852
        %v1949 = vpack.c.b16 %v1886, %v1885
        %v1950 = vpack.c.b16 %v1888, %v1887
        %v1951 = vpack.c.b16 %v1890, %v1889
        %v1952 = vpack.c.b16 %v1892, %v1891
        %v1953 = vpack.c.b16 %v1894, %v1893
        %v1954 = vpack.c.b16 %v1896, %v1895
        %v1955 = vpack.c.b16 %v1898, %v1897
        %v1956 = vpack.c.b16 %v1900, %v1899
        %v1957 = vpack.c.b16 %v1902, %v1901
        %v1958 = vpack.c.b16 %v1904, %v1903
        %v1959 = vpack.c.b16 %v1906, %v1905
        %v1960 = vpack.c.b16 %v1908, %v1907
        %v1961 = vpack.c.b16 %v1910, %v1909
        %v1962 = vpack.c.b16 %v1912, %v1911
        %v1963 = vpack.c.b16 %v1914, %v1913
        %v1964 = vpack.c.b16 %v1916, %v1915
        %v1965 = vpack.c.b16 %v1918, %v1917
        %v1966 = vpack.c.b16 %v1920, %v1919
        %v1967 = vpack.c.b16 %v1922, %v1921
        %v1968 = vpack.c.b16 %v1924, %v1923
        %v1969 = vpack.c.b16 %v1926, %v1925
        %v1970 = vpack.c.b16 %v1928, %v1927
        %v1971 = vpack.c.b16 %v1930, %v1929
        %v1972 = vpack.c.b16 %v1932, %v1931
        %v1973 = vpack.c.b16 %v1934, %v1933
        %v1974 = vpack.c.b16 %v1936, %v1935
        %v1975 = vpack.c.b16 %v1938, %v1937
        %v1976 = vpack.c.b16 %v1940, %v1939
        %v1977 = vpack.c.b16 %v1942, %v1941
        %v1978 = vpack.c.b16 %v1944, %v1943
        %v1979 = vpack.c.b16 %v1946, %v1945
        %v1980 = vpack.c.b16 %v1948, %v1947
        %2013 = vst [vmem:[#allocation2] sm:$0xff] %v1949
        %2014 = vst [vmem:[#allocation2 + $0x8] sm:$0xff] %v1950
        %2015 = vst [vmem:[#allocation2 + $0x10] sm:$0xff] %v1951
        %2016 = vst [vmem:[#allocation2 + $0x18] sm:$0xff] %v1952
        %2017 = vst [vmem:[#allocation2 + $0x20] sm:$0xff] %v1953
        %2018 = vst [vmem:[#allocation2 + $0x28] sm:$0xff] %v1954
        %2019 = vst [vmem:[#allocation2 + $0x30] sm:$0xff] %v1955
        %2020 = vst [vmem:[#allocation2 + $0x38] sm:$0xff] %v1956
        %2021 = vst [vmem:[#allocation2 + $0x40] sm:$0xff] %v1957
        %2022 = vst [vmem:[#allocation2 + $0x48] sm:$0xff] %v1958
        %2023 = vst [vmem:[#allocation2 + $0x50] sm:$0xff] %v1959
        %2024 = vst [vmem:[#allocation2 + $0x58] sm:$0xff] %v1960
        %2025 = vst [vmem:[#allocation2 + $0x60] sm:$0xff] %v1961
        %2026 = vst [vmem:[#allocation2 + $0x68] sm:$0xff] %v1962
        %2027 = vst [vmem:[#allocation2 + $0x70] sm:$0xff] %v1963
        %2028 = vst [vmem:[#allocation2 + $0x78] sm:$0xff] %v1964
        %2029 = vst [vmem:[#allocation2 + $0x80] sm:$0xff] %v1965
        %2030 = vst [vmem:[#allocation2 + $0x88] sm:$0xff] %v1966
        %2031 = vst [vmem:[#allocation2 + $0x90] sm:$0xff] %v1967
        %2032 = vst [vmem:[#allocation2 + $0x98] sm:$0xff] %v1968
        %2033 = vst [vmem:[#allocation2 + $0xa0] sm:$0xff] %v1969
        %2034 = vst [vmem:[#allocation2 + $0xa8] sm:$0xff] %v1970
        %2035 = vst [vmem:[#allocation2 + $0xb0] sm:$0xff] %v1971
        %2036 = vst [vmem:[#allocation2 + $0xb8] sm:$0xff] %v1972
        %2037 = vst [vmem:[#allocation2 + $0xc0] sm:$0xff] %v1973
        %2038 = vst [vmem:[#allocation2 + $0xc8] sm:$0xff] %v1974
        %2039 = vst [vmem:[#allocation2 + $0xd0] sm:$0xff] %v1975
        %2040 = vst [vmem:[#allocation2 + $0xd8] sm:$0xff] %v1976
        %2041 = vst [vmem:[#allocation2 + $0xe0] sm:$0xff] %v1977
        %2042 = vst [vmem:[#allocation2 + $0xe8] sm:$0xff] %v1978
        %2043 = vst [vmem:[#allocation2 + $0xf0] sm:$0xff] %v1979
        %2044 = vst [vmem:[#allocation2 + $0xf8] sm:$0xff] %v1980
        %v2045 = vadd.f32 %v1757, %v1759
        %v2046 = vadd.f32 %v2045, %v1761
        %v2047 = vadd.f32 %v2046, %v1763
        %v2048 = vadd.f32 %v2047, %v1765
        %v2049 = vadd.f32 %v2048, %v1767
        %v2050 = vadd.f32 %v2049, %v1769
        %v2051 = vadd.f32 %v2050, %v1771
        %v2052 = vadd.f32 %v2051, %v1773
        %v2053 = vadd.f32 %v2052, %v1775
        %v2054 = vadd.f32 %v2053, %v1777
        %v2055 = vadd.f32 %v2054, %v1779
        %v2056 = vadd.f32 %v2055, %v1781
        %v2057 = vadd.f32 %v2056, %v1783
        %v2058 = vadd.f32 %v2057, %v1785
        %v2059 = vadd.f32 %v2058, %v1787
        %v2060 = vadd.f32 %v2059, %v1789
        %v2061 = vadd.f32 %v2060, %v1791
        %v2062 = vadd.f32 %v2061, %v1793
        %v2063 = vadd.f32 %v2062, %v1795
        %v2064 = vadd.f32 %v2063, %v1797
        %v2065 = vadd.f32 %v2064, %v1799
        %v2066 = vadd.f32 %v2065, %v1801
        %v2067 = vadd.f32 %v2066, %v1803
        %v2068 = vadd.f32 %v2067, %v1805
        %v2069 = vadd.f32 %v2068, %v1807
        %v2070 = vadd.f32 %v2069, %v1809
        %v2071 = vadd.f32 %v2070, %v1811
        %v2072 = vadd.f32 %v2071, %v1813
        %v2073 = vadd.f32 %v2072, %v1815
        %v2074 = vadd.f32 %v2073, %v1817
        %v2075 = vadd.f32 %v2074, %v1819
        %v2076 = vrot.slane %v2075, 4
        %v2077 = vadd.f32 %v2075, %v2076
        %v2078 = vrot.slane %v2077, 2
        %v2079 = vadd.f32 %v2077, %v2078
        %v2080 = vrot.slane %v2079, 1
        %v2081 = vadd.f32 %v2079, %v2080
        %v2082 = vadd.f32 %v1758, %v1760
        %v2083 = vadd.f32 %v2082, %v1762
        %v2084 = vadd.f32 %v2083, %v1764
        %v2085 = vadd.f32 %v2084, %v1766
        %v2086 = vadd.f32 %v2085, %v1768
        %v2087 = vadd.f32 %v2086, %v1770
        %v2088 = vadd.f32 %v2087, %v1772
        %v2089 = vadd.f32 %v2088, %v1774
        %v2090 = vadd.f32 %v2089, %v1776
        %v2091 = vadd.f32 %v2090, %v1778
        %v2092 = vadd.f32 %v2091, %v1780
        %v2093 = vadd.f32 %v2092, %v1782
        %v2094 = vadd.f32 %v2093, %v1784
        %v2095 = vadd.f32 %v2094, %v1786
        %v2096 = vadd.f32 %v2095, %v1788
        %v2097 = vadd.f32 %v2096, %v1790
        %v2098 = vadd.f32 %v2097, %v1792
        %v2099 = vadd.f32 %v2098, %v1794
        %v2100 = vadd.f32 %v2099, %v1796
        %v2101 = vadd.f32 %v2100, %v1798
        %v2102 = vadd.f32 %v2101, %v1800
        %v2103 = vadd.f32 %v2102, %v1802
        %v2104 = vadd.f32 %v2103, %v1804
        %v2105 = vadd.f32 %v2104, %v1806
        %v2106 = vadd.f32 %v2105, %v1808
        %v2107 = vadd.f32 %v2106, %v1810
        %v2108 = vadd.f32 %v2107, %v1812
        %v2109 = vadd.f32 %v2108, %v1814
        %v2110 = vadd.f32 %v2109, %v1816
        %v2111 = vadd.f32 %v2110, %v1818
        %v2112 = vadd.f32 %v2111, %v1820
        %v2113 = vrot.slane %v2112, 4
        %v2114 = vadd.f32 %v2112, %v2113
        %v2115 = vrot.slane %v2114, 2
        %v2116 = vadd.f32 %v2114, %v2115
        %v2117 = vrot.slane %v2116, 1
        %v2118 = vadd.f32 %v2116, %v2117
        %v2119 = vmul.f32 %v2081, %v1109
        %v2120 = vmul.f32 %v2118, %v1109
        %v2121 = vmul.f32 %v1757, %v2119
        %v2122 = vmul.f32 %v1758, %v2120
        %v2123 = vmul.f32 %v1759, %v2119
        %v2124 = vmul.f32 %v1760, %v2120
        %v2125 = vmul.f32 %v1761, %v2119
        %v2126 = vmul.f32 %v1762, %v2120
        %v2127 = vmul.f32 %v1763, %v2119
        %v2128 = vmul.f32 %v1764, %v2120
        %v2129 = vmul.f32 %v1765, %v2119
        %v2130 = vmul.f32 %v1766, %v2120
        %v2131 = vmul.f32 %v1767, %v2119
        %v2132 = vmul.f32 %v1768, %v2120
        %v2133 = vmul.f32 %v1769, %v2119
        %v2134 = vmul.f32 %v1770, %v2120
        %v2135 = vmul.f32 %v1771, %v2119
        %v2136 = vmul.f32 %v1772, %v2120
        %v2137 = vmul.f32 %v1773, %v2119
        %v2138 = vmul.f32 %v1774, %v2120
        %v2139 = vmul.f32 %v1775, %v2119
        %v2140 = vmul.f32 %v1776, %v2120
        %v2141 = vmul.f32 %v1777, %v2119
        %v2142 = vmul.f32 %v1778, %v2120
        %v2143 = vmul.f32 %v1779, %v2119
        %v2144 = vmul.f32 %v1780, %v2120
        %v2145 = vmul.f32 %v1781, %v2119
        %v2146 = vmul.f32 %v1782, %v2120
        %v2147 = vmul.f32 %v1783, %v2119
        %v2148 = vmul.f32 %v1784, %v2120
        %v2149 = vmul.f32 %v1785, %v2119
        %v2150 = vmul.f32 %v1786, %v2120
        %v2151 = vmul.f32 %v1787, %v2119
        %v2152 = vmul.f32 %v1788, %v2120
        %v2153 = vmul.f32 %v1789, %v2119
        %v2154 = vmul.f32 %v1790, %v2120
        %v2155 = vmul.f32 %v1791, %v2119
        %v2156 = vmul.f32 %v1792, %v2120
        %v2157 = vmul.f32 %v1793, %v2119
        %v2158 = vmul.f32 %v1794, %v2120
        %v2159 = vmul.f32 %v1795, %v2119
        %v2160 = vmul.f32 %v1796, %v2120
        %v2161 = vmul.f32 %v1797, %v2119
        %v2162 = vmul.f32 %v1798, %v2120
        %v2163 = vmul.f32 %v1799, %v2119
        %v2164 = vmul.f32 %v1800, %v2120
        %v2165 = vmul.f32 %v1801, %v2119
        %v2166 = vmul.f32 %v1802, %v2120
        %v2167 = vmul.f32 %v1803, %v2119
        %v2168 = vmul.f32 %v1804, %v2120
        %v2169 = vmul.f32 %v1805, %v2119
        %v2170 = vmul.f32 %v1806, %v2120
        %v2171 = vmul.f32 %v1807, %v2119
        %v2172 = vmul.f32 %v1808, %v2120
        %v2173 = vmul.f32 %v1809, %v2119
        %v2174 = vmul.f32 %v1810, %v2120
        %v2175 = vmul.f32 %v1811, %v2119
        %v2176 = vmul.f32 %v1812, %v2120
        %v2177 = vmul.f32 %v1813, %v2119
        %v2178 = vmul.f32 %v1814, %v2120
        %v2179 = vmul.f32 %v1815, %v2119
        %v2180 = vmul.f32 %v1816, %v2120
        %v2181 = vmul.f32 %v1817, %v2119
        %v2182 = vmul.f32 %v1818, %v2120
        %v2183 = vmul.f32 %v1819, %v2119
        %v2184 = vmul.f32 %v1820, %v2120
        %v2185 = vadd.f32 %v2121, %v2122
        %2186 = vadd.xlane.f32.xlu0 %v2185
        %v2187 = vpop.xlane.xlu0 %2186
        %v2188 = vadd.f32 %v2123, %v2124
        %2189 = vadd.xlane.f32.xlu0 %v2188
        %v2190 = vpop.xlane.xlu0 %2189
        %v2191 = vadd.f32 %v2125, %v2126
        %2192 = vadd.xlane.f32.xlu0 %v2191
        %v2193 = vpop.xlane.xlu0 %2192
        %v2194 = vadd.f32 %v2127, %v2128
        %2195 = vadd.xlane.f32.xlu0 %v2194
        %v2196 = vpop.xlane.xlu0 %2195
        %v2197 = vadd.f32 %v2129, %v2130
        %2198 = vadd.xlane.f32.xlu0 %v2197
        %v2199 = vpop.xlane.xlu0 %2198
        %v2200 = vadd.f32 %v2131, %v2132
        %2201 = vadd.xlane.f32.xlu0 %v2200
        %v2202 = vpop.xlane.xlu0 %2201
        %v2203 = vadd.f32 %v2133, %v2134
        %2204 = vadd.xlane.f32.xlu0 %v2203
        %v2205 = vpop.xlane.xlu0 %2204
        %v2206 = vadd.f32 %v2135, %v2136
        %2207 = vadd.xlane.f32.xlu0 %v2206
        %v2208 = vpop.xlane.xlu0 %2207
        %v2209 = vadd.f32 %v2137, %v2138
        %2210 = vadd.xlane.f32.xlu0 %v2209
        %v2211 = vpop.xlane.xlu0 %2210
        %v2212 = vadd.f32 %v2139, %v2140
        %2213 = vadd.xlane.f32.xlu0 %v2212
        %v2214 = vpop.xlane.xlu0 %2213
        %v2215 = vadd.f32 %v2141, %v2142
        %2216 = vadd.xlane.f32.xlu0 %v2215
        %v2217 = vpop.xlane.xlu0 %2216
        %v2218 = vadd.f32 %v2143, %v2144
        %2219 = vadd.xlane.f32.xlu0 %v2218
        %v2220 = vpop.xlane.xlu0 %2219
        %v2221 = vadd.f32 %v2145, %v2146
        %2222 = vadd.xlane.f32.xlu0 %v2221
        %v2223 = vpop.xlane.xlu0 %2222
        %v2224 = vadd.f32 %v2147, %v2148
        %2225 = vadd.xlane.f32.xlu0 %v2224
        %v2226 = vpop.xlane.xlu0 %2225
        %v2227 = vadd.f32 %v2149, %v2150
        %2228 = vadd.xlane.f32.xlu0 %v2227
        %v2229 = vpop.xlane.xlu0 %2228
        %v2230 = vadd.f32 %v2151, %v2152
        %2231 = vadd.xlane.f32.xlu0 %v2230
        %v2232 = vpop.xlane.xlu0 %2231
        %v2233 = vadd.f32 %v2153, %v2154
        %2234 = vadd.xlane.f32.xlu0 %v2233
        %v2235 = vpop.xlane.xlu0 %2234
        %v2236 = vadd.f32 %v2155, %v2156
        %2237 = vadd.xlane.f32.xlu0 %v2236
        %v2238 = vpop.xlane.xlu0 %2237
        %v2239 = vadd.f32 %v2157, %v2158
        %2240 = vadd.xlane.f32.xlu0 %v2239
        %v2241 = vpop.xlane.xlu0 %2240
        %v2242 = vadd.f32 %v2159, %v2160
        %2243 = vadd.xlane.f32.xlu0 %v2242
        %v2244 = vpop.xlane.xlu0 %2243
        %v2245 = vadd.f32 %v2161, %v2162
        %2246 = vadd.xlane.f32.xlu0 %v2245
        %v2247 = vpop.xlane.xlu0 %2246
        %v2248 = vadd.f32 %v2163, %v2164
        %2249 = vadd.xlane.f32.xlu0 %v2248
        %v2250 = vpop.xlane.xlu0 %2249
        %v2251 = vadd.f32 %v2165, %v2166
        %2252 = vadd.xlane.f32.xlu0 %v2251
        %v2253 = vpop.xlane.xlu0 %2252
        %v2254 = vadd.f32 %v2167, %v2168
        %2255 = vadd.xlane.f32.xlu0 %v2254
        %v2256 = vpop.xlane.xlu0 %2255
        %v2257 = vadd.f32 %v2169, %v2170
        %2258 = vadd.xlane.f32.xlu0 %v2257
        %v2259 = vpop.xlane.xlu0 %2258
        %v2260 = vadd.f32 %v2171, %v2172
        %2261 = vadd.xlane.f32.xlu0 %v2260
        %v2262 = vpop.xlane.xlu0 %2261
        %v2263 = vadd.f32 %v2173, %v2174
        %2264 = vadd.xlane.f32.xlu0 %v2263
        %v2265 = vpop.xlane.xlu0 %2264
        %v2266 = vadd.f32 %v2175, %v2176
        %2267 = vadd.xlane.f32.xlu0 %v2266
        %v2268 = vpop.xlane.xlu0 %2267
        %v2269 = vadd.f32 %v2177, %v2178
        %2270 = vadd.xlane.f32.xlu0 %v2269
        %v2271 = vpop.xlane.xlu0 %2270
        %v2272 = vadd.f32 %v2179, %v2180
        %2273 = vadd.xlane.f32.xlu0 %v2272
        %v2274 = vpop.xlane.xlu0 %2273
        %v2275 = vadd.f32 %v2181, %v2182
        %2276 = vadd.xlane.f32.xlu0 %v2275
        %v2277 = vpop.xlane.xlu0 %2276
        %v2278 = vadd.f32 %v2183, %v2184
        %2279 = vadd.xlane.f32.xlu0 %v2278
        %v2280 = vpop.xlane.xlu0 %2279
        %v2281 = vmul.f32 %v1757, %v1757
        %v2282 = vmul.f32 %v1758, %v1758
        %v2283 = vmul.f32 %v1759, %v1759
        %v2284 = vmul.f32 %v1760, %v1760
        %v2285 = vmul.f32 %v1761, %v1761
        %v2286 = vmul.f32 %v1762, %v1762
        %v2287 = vmul.f32 %v1763, %v1763
        %v2288 = vmul.f32 %v1764, %v1764
        %v2289 = vmul.f32 %v1765, %v1765
        %v2290 = vmul.f32 %v1766, %v1766
        %v2291 = vmul.f32 %v1767, %v1767
        %v2292 = vmul.f32 %v1768, %v1768
        %v2293 = vmul.f32 %v1769, %v1769
        %v2294 = vmul.f32 %v1770, %v1770
        %v2295 = vmul.f32 %v1771, %v1771
        %v2296 = vmul.f32 %v1772, %v1772
        %v2297 = vmul.f32 %v1773, %v1773
        %v2298 = vmul.f32 %v1774, %v1774
        %v2299 = vmul.f32 %v1775, %v1775
        %v2300 = vmul.f32 %v1776, %v1776
        %v2301 = vmul.f32 %v1777, %v1777
        %v2302 = vmul.f32 %v1778, %v1778
        %v2303 = vmul.f32 %v1779, %v1779
        %v2304 = vmul.f32 %v1780, %v1780
        %v2305 = vmul.f32 %v1781, %v1781
        %v2306 = vmul.f32 %v1782, %v1782
        %v2307 = vmul.f32 %v1783, %v1783
        %v2308 = vmul.f32 %v1784, %v1784
        %v2309 = vmul.f32 %v1785, %v1785
        %v2310 = vmul.f32 %v1786, %v1786
        %v2311 = vmul.f32 %v1787, %v1787
        %v2312 = vmul.f32 %v1788, %v1788
        %v2313 = vmul.f32 %v1789, %v1789
        %v2314 = vmul.f32 %v1790, %v1790
        %v2315 = vmul.f32 %v1791, %v1791
        %v2316 = vmul.f32 %v1792, %v1792
        %v2317 = vmul.f32 %v1793, %v1793
        %v2318 = vmul.f32 %v1794, %v1794
        %v2319 = vmul.f32 %v1795, %v1795
        %v2320 = vmul.f32 %v1796, %v1796
        %v2321 = vmul.f32 %v1797, %v1797
        %v2322 = vmul.f32 %v1798, %v1798
        %v2323 = vmul.f32 %v1799, %v1799
        %v2324 = vmul.f32 %v1800, %v1800
        %v2325 = vmul.f32 %v1801, %v1801
        %v2326 = vmul.f32 %v1802, %v1802
        %v2327 = vmul.f32 %v1803, %v1803
        %v2328 = vmul.f32 %v1804, %v1804
        %v2329 = vmul.f32 %v1805, %v1805
        %v2330 = vmul.f32 %v1806, %v1806
        %v2331 = vmul.f32 %v1807, %v1807
        %v2332 = vmul.f32 %v1808, %v1808
        %v2333 = vmul.f32 %v1809, %v1809
        %v2334 = vmul.f32 %v1810, %v1810
        %v2335 = vmul.f32 %v1811, %v1811
        %v2336 = vmul.f32 %v1812, %v1812
        %v2337 = vmul.f32 %v1813, %v1813
        %v2338 = vmul.f32 %v1814, %v1814
        %v2339 = vmul.f32 %v1815, %v1815
        %v2340 = vmul.f32 %v1816, %v1816
        %v2341 = vmul.f32 %v1817, %v1817
        %v2342 = vmul.f32 %v1818, %v1818
        %v2343 = vmul.f32 %v1819, %v1819
        %v2344 = vmul.f32 %v1820, %v1820
        %v2345 = vadd.f32 %v2281, %v2282
        %2346 = vadd.xlane.f32.xlu0 %v2345
        %v2347 = vpop.xlane.xlu0 %2346
        %v2348 = vadd.f32 %v2283, %v2284
        %2349 = vadd.xlane.f32.xlu0 %v2348
        %v2350 = vpop.xlane.xlu0 %2349
        %v2351 = vadd.f32 %v2285, %v2286
        %2352 = vadd.xlane.f32.xlu0 %v2351
        %v2353 = vpop.xlane.xlu0 %2352
        %v2354 = vadd.f32 %v2287, %v2288
        %2355 = vadd.xlane.f32.xlu0 %v2354
        %v2356 = vpop.xlane.xlu0 %2355
        %v2357 = vadd.f32 %v2289, %v2290
        %2358 = vadd.xlane.f32.xlu0 %v2357
        %v2359 = vpop.xlane.xlu0 %2358
        %v2360 = vadd.f32 %v2291, %v2292
        %2361 = vadd.xlane.f32.xlu0 %v2360
        %v2362 = vpop.xlane.xlu0 %2361
        %v2363 = vadd.f32 %v2293, %v2294
        %2364 = vadd.xlane.f32.xlu0 %v2363
        %v2365 = vpop.xlane.xlu0 %2364
        %v2366 = vadd.f32 %v2295, %v2296
        %2367 = vadd.xlane.f32.xlu0 %v2366
        %v2368 = vpop.xlane.xlu0 %2367
        %v2369 = vadd.f32 %v2297, %v2298
        %2370 = vadd.xlane.f32.xlu0 %v2369
        %v2371 = vpop.xlane.xlu0 %2370
        %v2372 = vadd.f32 %v2299, %v2300
        %2373 = vadd.xlane.f32.xlu0 %v2372
        %v2374 = vpop.xlane.xlu0 %2373
        %v2375 = vadd.f32 %v2301, %v2302
        %2376 = vadd.xlane.f32.xlu0 %v2375
        %v2377 = vpop.xlane.xlu0 %2376
        %v2378 = vadd.f32 %v2303, %v2304
        %2379 = vadd.xlane.f32.xlu0 %v2378
        %v2380 = vpop.xlane.xlu0 %2379
        %v2381 = vadd.f32 %v2305, %v2306
        %2382 = vadd.xlane.f32.xlu0 %v2381
        %v2383 = vpop.xlane.xlu0 %2382
        %v2384 = vadd.f32 %v2307, %v2308
        %2385 = vadd.xlane.f32.xlu0 %v2384
        %v2386 = vpop.xlane.xlu0 %2385
        %v2387 = vadd.f32 %v2309, %v2310
        %2388 = vadd.xlane.f32.xlu0 %v2387
        %v2389 = vpop.xlane.xlu0 %2388
        %v2390 = vadd.f32 %v2311, %v2312
        %2391 = vadd.xlane.f32.xlu0 %v2390
        %v2392 = vpop.xlane.xlu0 %2391
        %v2393 = vadd.f32 %v2313, %v2314
        %2394 = vadd.xlane.f32.xlu0 %v2393
        %v2395 = vpop.xlane.xlu0 %2394
        %v2396 = vadd.f32 %v2315, %v2316
        %2397 = vadd.xlane.f32.xlu0 %v2396
        %v2398 = vpop.xlane.xlu0 %2397
        %v2399 = vadd.f32 %v2317, %v2318
        %2400 = vadd.xlane.f32.xlu0 %v2399
        %v2401 = vpop.xlane.xlu0 %2400
        %v2402 = vadd.f32 %v2319, %v2320
        %2403 = vadd.xlane.f32.xlu0 %v2402
        %v2404 = vpop.xlane.xlu0 %2403
        %v2405 = vadd.f32 %v2321, %v2322
        %2406 = vadd.xlane.f32.xlu0 %v2405
        %v2407 = vpop.xlane.xlu0 %2406
        %v2408 = vadd.f32 %v2323, %v2324
        %2409 = vadd.xlane.f32.xlu0 %v2408
        %v2410 = vpop.xlane.xlu0 %2409
        %v2411 = vadd.f32 %v2325, %v2326
        %2412 = vadd.xlane.f32.xlu0 %v2411
        %v2413 = vpop.xlane.xlu0 %2412
        %v2414 = vadd.f32 %v2327, %v2328
        %2415 = vadd.xlane.f32.xlu0 %v2414
        %v2416 = vpop.xlane.xlu0 %2415
        %v2417 = vadd.f32 %v2329, %v2330
        %2418 = vadd.xlane.f32.xlu0 %v2417
        %v2419 = vpop.xlane.xlu0 %2418
        %v2420 = vadd.f32 %v2331, %v2332
        %2421 = vadd.xlane.f32.xlu0 %v2420
        %v2422 = vpop.xlane.xlu0 %2421
        %v2423 = vadd.f32 %v2333, %v2334
        %2424 = vadd.xlane.f32.xlu0 %v2423
        %v2425 = vpop.xlane.xlu0 %2424
        %v2426 = vadd.f32 %v2335, %v2336
        %2427 = vadd.xlane.f32.xlu0 %v2426
        %v2428 = vpop.xlane.xlu0 %2427
        %v2429 = vadd.f32 %v2337, %v2338
        %2430 = vadd.xlane.f32.xlu0 %v2429
        %v2431 = vpop.xlane.xlu0 %2430
        %v2432 = vadd.f32 %v2339, %v2340
        %2433 = vadd.xlane.f32.xlu0 %v2432
        %v2434 = vpop.xlane.xlu0 %2433
        %v2435 = vadd.f32 %v2341, %v2342
        %2436 = vadd.xlane.f32.xlu0 %v2435
        %v2437 = vpop.xlane.xlu0 %2436
        %v2438 = vadd.f32 %v2343, %v2344
        %2439 = vadd.xlane.f32.xlu0 %v2438
        %v2440 = vpop.xlane.xlu0 %2439
        %v2441 = vmul.f32 %v2119, %v2119
        %v2442 = vmul.f32 %v2120, %v2120
        %v2443 = vadd.f32 %v2441, %v2442
        %2444 = vadd.xlane.f32.xlu0 %v2443
        %v2445 = vpop.xlane.xlu0 %2444
        %v2446 = vmul.f32 %v2347, %v2445
        %v2447 = vmul.f32 %v2350, %v2445
        %v2448 = vmul.f32 %v2353, %v2445
        %v2449 = vmul.f32 %v2356, %v2445
        %v2450 = vmul.f32 %v2359, %v2445
        %v2451 = vmul.f32 %v2362, %v2445
        %v2452 = vmul.f32 %v2365, %v2445
        %v2453 = vmul.f32 %v2368, %v2445
        %v2454 = vmul.f32 %v2371, %v2445
        %v2455 = vmul.f32 %v2374, %v2445
        %v2456 = vmul.f32 %v2377, %v2445
        %v2457 = vmul.f32 %v2380, %v2445
        %v2458 = vmul.f32 %v2383, %v2445
        %v2459 = vmul.f32 %v2386, %v2445
        %v2460 = vmul.f32 %v2389, %v2445
        %v2461 = vmul.f32 %v2392, %v2445
        %v2462 = vmul.f32 %v2395, %v2445
        %v2463 = vmul.f32 %v2398, %v2445
        %v2464 = vmul.f32 %v2401, %v2445
        %v2465 = vmul.f32 %v2404, %v2445
        %v2466 = vmul.f32 %v2407, %v2445
        %v2467 = vmul.f32 %v2410, %v2445
        %v2468 = vmul.f32 %v2413, %v2445
        %v2469 = vmul.f32 %v2416, %v2445
        %v2470 = vmul.f32 %v2419, %v2445
        %v2471 = vmul.f32 %v2422, %v2445
        %v2472 = vmul.f32 %v2425, %v2445
        %v2473 = vmul.f32 %v2428, %v2445
        %v2474 = vmul.f32 %v2431, %v2445
        %v2475 = vmul.f32 %v2434, %v2445
        %v2476 = vmul.f32 %v2437, %v2445
        %v2477 = vmul.f32 %v2440, %v2445
        %v2478 = vmax.f32 %v2446, 1e-16
        %v2479 = vmax.f32 %v2447, 1e-16
        %v2480 = vmax.f32 %v2448, 1e-16
        %v2481 = vmax.f32 %v2449, 1e-16
        %v2482 = vmax.f32 %v2450, 1e-16
        %v2483 = vmax.f32 %v2451, 1e-16
        %v2484 = vmax.f32 %v2452, 1e-16
        %v2485 = vmax.f32 %v2453, 1e-16
        %v2486 = vmax.f32 %v2454, 1e-16
        %v2487 = vmax.f32 %v2455, 1e-16
        %v2488 = vmax.f32 %v2456, 1e-16
        %v2489 = vmax.f32 %v2457, 1e-16
        %v2490 = vmax.f32 %v2458, 1e-16
        %v2491 = vmax.f32 %v2459, 1e-16
        %v2492 = vmax.f32 %v2460, 1e-16
        %v2493 = vmax.f32 %v2461, 1e-16
        %v2494 = vmax.f32 %v2462, 1e-16
        %v2495 = vmax.f32 %v2463, 1e-16
        %v2496 = vmax.f32 %v2464, 1e-16
        %v2497 = vmax.f32 %v2465, 1e-16
        %v2498 = vmax.f32 %v2466, 1e-16
        %v2499 = vmax.f32 %v2467, 1e-16
        %v2500 = vmax.f32 %v2468, 1e-16
        %v2501 = vmax.f32 %v2469, 1e-16
        %v2502 = vmax.f32 %v2470, 1e-16
        %v2503 = vmax.f32 %v2471, 1e-16
        %v2504 = vmax.f32 %v2472, 1e-16
        %v2505 = vmax.f32 %v2473, 1e-16
        %v2506 = vmax.f32 %v2474, 1e-16
        %v2507 = vmax.f32 %v2475, 1e-16
        %v2508 = vmax.f32 %v2476, 1e-16
        %v2509 = vmax.f32 %v2477, 1e-16
        %v2510 = vrsqrt.pop %v2478
        %v2511 = vrsqrt.pop %v2479
        %v2512 = vrsqrt.pop %v2480
        %v2513 = vrsqrt.pop %v2481
        %v2514 = vrsqrt.pop %v2482
        %v2515 = vrsqrt.pop %v2483
        %v2516 = vrsqrt.pop %v2484
        %v2517 = vrsqrt.pop %v2485
        %v2518 = vrsqrt.pop %v2486
        %v2519 = vrsqrt.pop %v2487
        %v2520 = vrsqrt.pop %v2488
        %v2521 = vrsqrt.pop %v2489
        %v2522 = vrsqrt.pop %v2490
        %v2523 = vrsqrt.pop %v2491
        %v2524 = vrsqrt.pop %v2492
        %v2525 = vrsqrt.pop %v2493
        %v2526 = vrsqrt.pop %v2494
        %v2527 = vrsqrt.pop %v2495
        %v2528 = vrsqrt.pop %v2496
        %v2529 = vrsqrt.pop %v2497
        %v2530 = vrsqrt.pop %v2498
        %v2531 = vrsqrt.pop %v2499
        %v2532 = vrsqrt.pop %v2500
        %v2533 = vrsqrt.pop %v2501
        %v2534 = vrsqrt.pop %v2502
        %v2535 = vrsqrt.pop %v2503
        %v2536 = vrsqrt.pop %v2504
        %v2537 = vrsqrt.pop %v2505
        %v2538 = vrsqrt.pop %v2506
        %v2539 = vrsqrt.pop %v2507
        %v2540 = vrsqrt.pop %v2508
        %v2541 = vrsqrt.pop %v2509
        %v2542 = vmul.f32 %v2187, %v2510
        %v2543 = vmul.f32 %v2190, %v2511
        %v2544 = vmul.f32 %v2193, %v2512
        %v2545 = vmul.f32 %v2196, %v2513
        %v2546 = vmul.f32 %v2199, %v2514
        %v2547 = vmul.f32 %v2202, %v2515
        %v2548 = vmul.f32 %v2205, %v2516
        %v2549 = vmul.f32 %v2208, %v2517
        %v2550 = vmul.f32 %v2211, %v2518
        %v2551 = vmul.f32 %v2214, %v2519
        %v2552 = vmul.f32 %v2217, %v2520
        %v2553 = vmul.f32 %v2220, %v2521
        %v2554 = vmul.f32 %v2223, %v2522
        %v2555 = vmul.f32 %v2226, %v2523
        %v2556 = vmul.f32 %v2229, %v2524
        %v2557 = vmul.f32 %v2232, %v2525
        %v2558 = vmul.f32 %v2235, %v2526
        %v2559 = vmul.f32 %v2238, %v2527
        %v2560 = vmul.f32 %v2241, %v2528
        %v2561 = vmul.f32 %v2244, %v2529
        %v2562 = vmul.f32 %v2247, %v2530
        %v2563 = vmul.f32 %v2250, %v2531
        %v2564 = vmul.f32 %v2253, %v2532
        %v2565 = vmul.f32 %v2256, %v2533
        %v2566 = vmul.f32 %v2259, %v2534
        %v2567 = vmul.f32 %v2262, %v2535
        %v2568 = vmul.f32 %v2265, %v2536
        %v2569 = vmul.f32 %v2268, %v2537
        %v2570 = vmul.f32 %v2271, %v2538
        %v2571 = vmul.f32 %v2274, %v2539
        %v2572 = vmul.f32 %v2277, %v2540
        %v2573 = vmul.f32 %v2280, %v2541
        %vm2574 = vcmask 7168
        %v2576 = vsel %vm2574, %v2542, 0
        %v2579 = vsel %vm2574, %v2543, 0
        %v2582 = vsel %vm2574, %v2544, 0
        %v2585 = vsel %vm2574, %v2545, 0
        %v2588 = vsel %vm2574, %v2546, 0
        %v2591 = vsel %vm2574, %v2547, 0
        %v2594 = vsel %vm2574, %v2548, 0
        %v2597 = vsel %vm2574, %v2549, 0
        %v2600 = vsel %vm2574, %v2550, 0
        %v2603 = vsel %vm2574, %v2551, 0
        %v2606 = vsel %vm2574, %v2552, 0
        %v2609 = vsel %vm2574, %v2553, 0
        %v2612 = vsel %vm2574, %v2554, 0
        %v2615 = vsel %vm2574, %v2555, 0
        %v2618 = vsel %vm2574, %v2556, 0
        %v2621 = vsel %vm2574, %v2557, 0
        %v2624 = vsel %vm2574, %v2558, 0
        %v2627 = vsel %vm2574, %v2559, 0
        %v2630 = vsel %vm2574, %v2560, 0
        %v2633 = vsel %vm2574, %v2561, 0
        %v2636 = vsel %vm2574, %v2562, 0
        %v2639 = vsel %vm2574, %v2563, 0
        %v2642 = vsel %vm2574, %v2564, 0
        %v2645 = vsel %vm2574, %v2565, 0
        %v2648 = vsel %vm2574, %v2566, 0
        %v2651 = vsel %vm2574, %v2567, 0
        %v2654 = vsel %vm2574, %v2568, 0
        %v2657 = vsel %vm2574, %v2569, 0
        %v2660 = vsel %vm2574, %v2570, 0
        %v2663 = vsel %vm2574, %v2571, 0
        %v2666 = vsel %vm2574, %v2572, 0
        %v2669 = vsel %vm2574, %v2573, 0
        %2671 = vmatprep.subr.mxu0 0.0
        %2672 = vmatpush1.xpose.msra.mxu0 %v2621
        %2673 = vmatprep.subr.mxu0 0.0
        %2674 = vmatpush1.xpose.msra.mxu0 %v2618
        %2675 = vmatprep.subr.mxu0 0.0
        %2676 = vmatpush1.xpose.msra.mxu0 %v2615
        %2677 = vmatprep.subr.mxu0 0.0
        %2678 = vmatpush1.xpose.msra.mxu0 %v2612
        %2679 = vmatprep.subr.mxu0 0.0
        %2680 = vmatpush1.xpose.msra.mxu0 %v2609
        %2681 = vmatprep.subr.mxu0 0.0
        %2682 = vmatpush1.xpose.msra.mxu0 %v2606
        %2683 = vmatprep.subr.mxu0 0.0
        %2684 = vmatpush1.xpose.msra.mxu0 %v2603
        %2685 = vmatprep.subr.mxu0 0.0
        %2686 = vmatpush1.xpose.msra.mxu0 %v2600
        %2687 = vmatprep.subr.mxu0 0.0
        %2688 = vmatpush1.xpose.msra.mxu0 %v2597
        %2689 = vmatprep.subr.mxu0 0.0
        %2690 = vmatpush1.xpose.msra.mxu0 %v2594
        %2691 = vmatprep.subr.mxu0 0.0
        %2692 = vmatpush1.xpose.msra.mxu0 %v2591
        %2693 = vmatprep.subr.mxu0 0.0
        %2694 = vmatpush1.xpose.msra.mxu0 %v2588
        %2695 = vmatprep.subr.mxu0 0.0
        %2696 = vmatpush1.xpose.msra.mxu0 %v2585
        %2697 = vmatprep.subr.mxu0 0.0
        %2698 = vmatpush1.xpose.msra.mxu0 %v2582
        %2699 = vmatprep.subr.mxu0 0.0
        %2700 = vmatpush1.xpose.msra.mxu0 %v2579
        %2701 = vmatprep.subr.mxu0 0.0
        %2702 = vmatpush1.xpose.msra.mxu0 %v2576
        %2703 = vmatprep.subr.mxu0 0.0
        %2704 = vmatpush2.xpose.msra.mxu0 %v2669
        %2705 = vmatprep.subr.mxu0 0.0
        %2706 = vmatpush2.xpose.msra.mxu0 %v2666
        %2707 = vmatprep.subr.mxu0 0.0
        %2708 = vmatpush2.xpose.msra.mxu0 %v2663
        %2709 = vmatprep.subr.mxu0 0.0
        %2710 = vmatpush2.xpose.msra.mxu0 %v2660
        %2711 = vmatprep.subr.mxu0 0.0
        %2712 = vmatpush2.xpose.msra.mxu0 %v2657
        %2713 = vmatprep.subr.mxu0 0.0
        %2714 = vmatpush2.xpose.msra.mxu0 %v2654
        %2715 = vmatprep.subr.mxu0 0.0
        %2716 = vmatpush2.xpose.msra.mxu0 %v2651
        %2717 = vmatprep.subr.mxu0 0.0
        %2718 = vmatpush2.xpose.msra.mxu0 %v2648
        %2719 = vmatprep.subr.mxu0 0.0
        %2720 = vmatpush2.xpose.msra.mxu0 %v2645
        %2721 = vmatprep.subr.mxu0 0.0
        %2722 = vmatpush2.xpose.msra.mxu0 %v2642
        %2723 = vmatprep.subr.mxu0 0.0
        %2724 = vmatpush2.xpose.msra.mxu0 %v2639
        %2725 = vmatprep.subr.mxu0 0.0
        %2726 = vmatpush2.xpose.msra.mxu0 %v2636
        %2727 = vmatprep.subr.mxu0 0.0
        %2728 = vmatpush2.xpose.msra.mxu0 %v2633
        %2729 = vmatprep.subr.mxu0 0.0
        %2730 = vmatpush2.xpose.msra.mxu0 %v2630
        %2731 = vmatprep.subr.mxu0 0.0
        %2732 = vmatpush2.xpose.msra.mxu0 %v2627
        %2733 = vmatprep.subr.mxu0 0.0
        %2734 = vmatpush2.xpose.msra.mxu0 %v2624
        %2735 = vmatprep.mubr.f32.mxu0 0.0
        %2736 = vmatmul.mubr.f32.gmra.mxu0 %v2576
        %v2737 = vpop.f32.mrf.mxu0
        %v2738 = vadd.f32 0.0, %v2737
        %v2739 = vpop.f32.mrf.mxu0
        %v2740 = vadd.f32 0.0, %v2739
        %2741 = vmatprep.mubr.f32.mxu0 0.0
        %2742 = vmatmul.mubr.f32.gmra.mxu0 %v2579
        %v2743 = vpop.f32.mrf.mxu0
        %v2744 = vadd.f32 0.0, %v2743
        %v2745 = vpop.f32.mrf.mxu0
        %v2746 = vadd.f32 0.0, %v2745
        %2747 = vmatprep.mubr.f32.mxu0 0.0
        %2748 = vmatmul.mubr.f32.gmra.mxu0 %v2582
        %v2749 = vpop.f32.mrf.mxu0
        %v2750 = vadd.f32 0.0, %v2749
        %v2751 = vpop.f32.mrf.mxu0
        %v2752 = vadd.f32 0.0, %v2751
        %2753 = vmatprep.mubr.f32.mxu0 0.0
        %2754 = vmatmul.mubr.f32.gmra.mxu0 %v2585
        %v2755 = vpop.f32.mrf.mxu0
        %v2756 = vadd.f32 0.0, %v2755
        %v2757 = vpop.f32.mrf.mxu0
        %v2758 = vadd.f32 0.0, %v2757
        %2759 = vmatprep.mubr.f32.mxu0 0.0
        %2760 = vmatmul.mubr.f32.gmra.mxu0 %v2588
        %v2761 = vpop.f32.mrf.mxu0
        %v2762 = vadd.f32 0.0, %v2761
        %v2763 = vpop.f32.mrf.mxu0
        %v2764 = vadd.f32 0.0, %v2763
        %2765 = vmatprep.mubr.f32.mxu0 0.0
        %2766 = vmatmul.mubr.f32.gmra.mxu0 %v2591
        %v2767 = vpop.f32.mrf.mxu0
        %v2768 = vadd.f32 0.0, %v2767
        %v2769 = vpop.f32.mrf.mxu0
        %v2770 = vadd.f32 0.0, %v2769
        %2771 = vmatprep.mubr.f32.mxu0 0.0
        %2772 = vmatmul.mubr.f32.gmra.mxu0 %v2594
        %v2773 = vpop.f32.mrf.mxu0
        %v2774 = vadd.f32 0.0, %v2773
        %v2775 = vpop.f32.mrf.mxu0
        %v2776 = vadd.f32 0.0, %v2775
        %2777 = vmatprep.mubr.f32.mxu0 0.0
        %2778 = vmatmul.mubr.f32.gmra.mxu0 %v2597
        %v2779 = vpop.f32.mrf.mxu0
        %v2780 = vadd.f32 0.0, %v2779
        %v2781 = vpop.f32.mrf.mxu0
        %v2782 = vadd.f32 0.0, %v2781
        %2783 = vmatprep.mubr.f32.mxu0 0.0
        %2784 = vmatmul.mubr.f32.gmra.mxu0 %v2600
        %v2785 = vpop.f32.mrf.mxu0
        %v2786 = vadd.f32 0.0, %v2785
        %v2787 = vpop.f32.mrf.mxu0
        %v2788 = vadd.f32 0.0, %v2787
        %2789 = vmatprep.mubr.f32.mxu0 0.0
        %2790 = vmatmul.mubr.f32.gmra.mxu0 %v2603
        %v2791 = vpop.f32.mrf.mxu0
        %v2792 = vadd.f32 0.0, %v2791
        %v2793 = vpop.f32.mrf.mxu0
        %v2794 = vadd.f32 0.0, %v2793
        %2795 = vmatprep.mubr.f32.mxu0 0.0
        %2796 = vmatmul.mubr.f32.gmra.mxu0 %v2606
        %v2797 = vpop.f32.mrf.mxu0
        %v2798 = vadd.f32 0.0, %v2797
        %v2799 = vpop.f32.mrf.mxu0
        %v2800 = vadd.f32 0.0, %v2799
        %2801 = vmatprep.mubr.f32.mxu0 0.0
        %2802 = vmatmul.mubr.f32.gmra.mxu0 %v2609
        %v2803 = vpop.f32.mrf.mxu0
        %v2804 = vadd.f32 0.0, %v2803
        %v2805 = vpop.f32.mrf.mxu0
        %v2806 = vadd.f32 0.0, %v2805
        %2807 = vmatprep.mubr.f32.mxu0 0.0
        %2808 = vmatmul.mubr.f32.gmra.mxu0 %v2612
        %v2809 = vpop.f32.mrf.mxu0
        %v2810 = vadd.f32 0.0, %v2809
        %v2811 = vpop.f32.mrf.mxu0
        %v2812 = vadd.f32 0.0, %v2811
        %2813 = vmatprep.mubr.f32.mxu0 0.0
        %2814 = vmatmul.mubr.f32.gmra.mxu0 %v2615
        %v2815 = vpop.f32.mrf.mxu0
        %v2816 = vadd.f32 0.0, %v2815
        %v2817 = vpop.f32.mrf.mxu0
        %v2818 = vadd.f32 0.0, %v2817
        %2819 = vmatprep.mubr.f32.mxu0 0.0
        %2820 = vmatmul.mubr.f32.gmra.mxu0 %v2618
        %v2821 = vpop.f32.mrf.mxu0
        %v2822 = vadd.f32 0.0, %v2821
        %v2823 = vpop.f32.mrf.mxu0
        %v2824 = vadd.f32 0.0, %v2823
        %2825 = vmatprep.mubr.f32.mxu0 0.0
        %2826 = vmatmul.mubr.f32.gmra.mxu0 %v2621
        %v2827 = vpop.f32.mrf.mxu0
        %v2828 = vadd.f32 0.0, %v2827
        %v2829 = vpop.f32.mrf.mxu0
        %v2830 = vadd.f32 0.0, %v2829
        %2831 = vmatprep.mubr.f32.mxu0 0.0
        %2832 = vmatmul.mubr.f32.gmra.mxu0 %v2624
        %v2833 = vpop.f32.mrf.mxu0
        %v2834 = vadd.f32 0.0, %v2833
        %v2835 = vpop.f32.mrf.mxu0
        %v2836 = vadd.f32 0.0, %v2835
        %2837 = vmatprep.mubr.f32.mxu0 0.0
        %2838 = vmatmul.mubr.f32.gmra.mxu0 %v2627
        %v2839 = vpop.f32.mrf.mxu0
        %v2840 = vadd.f32 0.0, %v2839
        %v2841 = vpop.f32.mrf.mxu0
        %v2842 = vadd.f32 0.0, %v2841
        %2843 = vmatprep.mubr.f32.mxu0 0.0
        %2844 = vmatmul.mubr.f32.gmra.mxu0 %v2630
        %v2845 = vpop.f32.mrf.mxu0
        %v2846 = vadd.f32 0.0, %v2845
        %v2847 = vpop.f32.mrf.mxu0
        %v2848 = vadd.f32 0.0, %v2847
        %2849 = vmatprep.mubr.f32.mxu0 0.0
        %2850 = vmatmul.mubr.f32.gmra.mxu0 %v2633
        %v2851 = vpop.f32.mrf.mxu0
        %v2852 = vadd.f32 0.0, %v2851
        %v2853 = vpop.f32.mrf.mxu0
        %v2854 = vadd.f32 0.0, %v2853
        %2855 = vmatprep.mubr.f32.mxu0 0.0
        %2856 = vmatmul.mubr.f32.gmra.mxu0 %v2636
        %v2857 = vpop.f32.mrf.mxu0
        %v2858 = vadd.f32 0.0, %v2857
        %v2859 = vpop.f32.mrf.mxu0
        %v2860 = vadd.f32 0.0, %v2859
        %2861 = vmatprep.mubr.f32.mxu0 0.0
        %2862 = vmatmul.mubr.f32.gmra.mxu0 %v2639
        %v2863 = vpop.f32.mrf.mxu0
        %v2864 = vadd.f32 0.0, %v2863
        %v2865 = vpop.f32.mrf.mxu0
        %v2866 = vadd.f32 0.0, %v2865
        %2867 = vmatprep.mubr.f32.mxu0 0.0
        %2868 = vmatmul.mubr.f32.gmra.mxu0 %v2642
        %v2869 = vpop.f32.mrf.mxu0
        %v2870 = vadd.f32 0.0, %v2869
        %v2871 = vpop.f32.mrf.mxu0
        %v2872 = vadd.f32 0.0, %v2871
        %2873 = vmatprep.mubr.f32.mxu0 0.0
        %2874 = vmatmul.mubr.f32.gmra.mxu0 %v2645
        %v2875 = vpop.f32.mrf.mxu0
        %v2876 = vadd.f32 0.0, %v2875
        %v2877 = vpop.f32.mrf.mxu0
        %v2878 = vadd.f32 0.0, %v2877
        %2879 = vmatprep.mubr.f32.mxu0 0.0
        %2880 = vmatmul.mubr.f32.gmra.mxu0 %v2648
        %v2881 = vpop.f32.mrf.mxu0
        %v2882 = vadd.f32 0.0, %v2881
        %v2883 = vpop.f32.mrf.mxu0
        %v2884 = vadd.f32 0.0, %v2883
        %2885 = vmatprep.mubr.f32.mxu0 0.0
        %2886 = vmatmul.mubr.f32.gmra.mxu0 %v2651
        %v2887 = vpop.f32.mrf.mxu0
        %v2888 = vadd.f32 0.0, %v2887
        %v2889 = vpop.f32.mrf.mxu0
        %v2890 = vadd.f32 0.0, %v2889
        %2891 = vmatprep.mubr.f32.mxu0 0.0
        %2892 = vmatmul.mubr.f32.gmra.mxu0 %v2654
        %v2893 = vpop.f32.mrf.mxu0
        %v2894 = vadd.f32 0.0, %v2893
        %v2895 = vpop.f32.mrf.mxu0
        %v2896 = vadd.f32 0.0, %v2895
        %2897 = vmatprep.mubr.f32.mxu0 0.0
        %2898 = vmatmul.mubr.f32.gmra.mxu0 %v2657
        %v2899 = vpop.f32.mrf.mxu0
        %v2900 = vadd.f32 0.0, %v2899
        %v2901 = vpop.f32.mrf.mxu0
        %v2902 = vadd.f32 0.0, %v2901
        %2903 = vmatprep.mubr.f32.mxu0 0.0
        %2904 = vmatmul.mubr.f32.gmra.mxu0 %v2660
        %v2905 = vpop.f32.mrf.mxu0
        %v2906 = vadd.f32 0.0, %v2905
        %v2907 = vpop.f32.mrf.mxu0
        %v2908 = vadd.f32 0.0, %v2907
        %2909 = vmatprep.mubr.f32.mxu0 0.0
        %2910 = vmatmul.mubr.f32.gmra.mxu0 %v2663
        %v2911 = vpop.f32.mrf.mxu0
        %v2912 = vadd.f32 0.0, %v2911
        %v2913 = vpop.f32.mrf.mxu0
        %v2914 = vadd.f32 0.0, %v2913
        %2915 = vmatprep.mubr.f32.mxu0 0.0
        %2916 = vmatmul.mubr.f32.gmra.mxu0 %v2666
        %v2917 = vpop.f32.mrf.mxu0
        %v2918 = vadd.f32 0.0, %v2917
        %v2919 = vpop.f32.mrf.mxu0
        %v2920 = vadd.f32 0.0, %v2919
        %2921 = vmatprep.mubr.f32.mxu0 0.0
        %2922 = vmatmul.mubr.f32.gmra.mxu0 %v2669
        %v2923 = vpop.f32.mrf.mxu0
        %v2924 = vadd.f32 0.0, %v2923
        %v2925 = vpop.f32.mrf.mxu0
        %v2926 = vadd.f32 0.0, %v2925
        %2927 = vdwg.mxu0
        %2928 = vst [vmem:[#allocation3] sm:$0xff] %v2738
        %2929 = vst [vmem:[#allocation3 + $0x8] sm:$0xff] %v2740
        %2930 = vst [vmem:[#allocation3 + $0x10] sm:$0xff] %v2744
        %2931 = vst [vmem:[#allocation3 + $0x18] sm:$0xff] %v2746
        %2932 = vst [vmem:[#allocation3 + $0x20] sm:$0xff] %v2750
        %2933 = vst [vmem:[#allocation3 + $0x28] sm:$0xff] %v2752
        %2934 = vst [vmem:[#allocation3 + $0x30] sm:$0xff] %v2756
        %2935 = vst [vmem:[#allocation3 + $0x38] sm:$0xff] %v2758
        %2936 = vst [vmem:[#allocation3 + $0x40] sm:$0xff] %v2762
        %2937 = vst [vmem:[#allocation3 + $0x48] sm:$0xff] %v2764
        %2938 = vst [vmem:[#allocation3 + $0x50] sm:$0xff] %v2768
        %2939 = vst [vmem:[#allocation3 + $0x58] sm:$0xff] %v2770
        %2940 = vst [vmem:[#allocation3 + $0x60] sm:$0xff] %v2774
        %2941 = vst [vmem:[#allocation3 + $0x68] sm:$0xff] %v2776
        %2942 = vst [vmem:[#allocation3 + $0x70] sm:$0xff] %v2780
        %2943 = vst [vmem:[#allocation3 + $0x78] sm:$0xff] %v2782
        %2944 = vst [vmem:[#allocation3 + $0x80] sm:$0xff] %v2786
        %2945 = vst [vmem:[#allocation3 + $0x88] sm:$0xff] %v2788
        %2946 = vst [vmem:[#allocation3 + $0x90] sm:$0xff] %v2792
        %2947 = vst [vmem:[#allocation3 + $0x98] sm:$0xff] %v2794
        %2948 = vst [vmem:[#allocation3 + $0xa0] sm:$0xff] %v2798
        %2949 = vst [vmem:[#allocation3 + $0xa8] sm:$0xff] %v2800
        %2950 = vst [vmem:[#allocation3 + $0xb0] sm:$0xff] %v2804
        %2951 = vst [vmem:[#allocation3 + $0xb8] sm:$0xff] %v2806
        %2952 = vst [vmem:[#allocation3 + $0xc0] sm:$0xff] %v2810
        %2953 = vst [vmem:[#allocation3 + $0xc8] sm:$0xff] %v2812
        %2954 = vst [vmem:[#allocation3 + $0xd0] sm:$0xff] %v2816
        %2955 = vst [vmem:[#allocation3 + $0xd8] sm:$0xff] %v2818
        %2956 = vst [vmem:[#allocation3 + $0xe0] sm:$0xff] %v2822
        %2957 = vst [vmem:[#allocation3 + $0xe8] sm:$0xff] %v2824
        %2958 = vst [vmem:[#allocation3 + $0xf0] sm:$0xff] %v2828
        %2959 = vst [vmem:[#allocation3 + $0xf8] sm:$0xff] %v2830
        %2960 = vst [vmem:[#allocation3 + $0x100] sm:$0xff] %v2834
        %2961 = vst [vmem:[#allocation3 + $0x108] sm:$0xff] %v2836
        %2962 = vst [vmem:[#allocation3 + $0x110] sm:$0xff] %v2840
        %2963 = vst [vmem:[#allocation3 + $0x118] sm:$0xff] %v2842
        %2964 = vst [vmem:[#allocation3 + $0x120] sm:$0xff] %v2846
        %2965 = vst [vmem:[#allocation3 + $0x128] sm:$0xff] %v2848
        %2966 = vst [vmem:[#allocation3 + $0x130] sm:$0xff] %v2852
        %2967 = vst [vmem:[#allocation3 + $0x138] sm:$0xff] %v2854
        %2968 = vst [vmem:[#allocation3 + $0x140] sm:$0xff] %v2858
        %2969 = vst [vmem:[#allocation3 + $0x148] sm:$0xff] %v2860
        %2970 = vst [vmem:[#allocation3 + $0x150] sm:$0xff] %v2864
        %2971 = vst [vmem:[#allocation3 + $0x158] sm:$0xff] %v2866
        %2972 = vst [vmem:[#allocation3 + $0x160] sm:$0xff] %v2870
        %2973 = vst [vmem:[#allocation3 + $0x168] sm:$0xff] %v2872
        %2974 = vst [vmem:[#allocation3 + $0x170] sm:$0xff] %v2876
        %2975 = vst [vmem:[#allocation3 + $0x178] sm:$0xff] %v2878
        %2976 = vst [vmem:[#allocation3 + $0x180] sm:$0xff] %v2882
        %2977 = vst [vmem:[#allocation3 + $0x188] sm:$0xff] %v2884
        %2978 = vst [vmem:[#allocation3 + $0x190] sm:$0xff] %v2888
        %2979 = vst [vmem:[#allocation3 + $0x198] sm:$0xff] %v2890
        %2980 = vst [vmem:[#allocation3 + $0x1a0] sm:$0xff] %v2894
        %2981 = vst [vmem:[#allocation3 + $0x1a8] sm:$0xff] %v2896
        %2982 = vst [vmem:[#allocation3 + $0x1b0] sm:$0xff] %v2900
        %2983 = vst [vmem:[#allocation3 + $0x1b8] sm:$0xff] %v2902
        %2984 = vst [vmem:[#allocation3 + $0x1c0] sm:$0xff] %v2906
        %2985 = vst [vmem:[#allocation3 + $0x1c8] sm:$0xff] %v2908
        %2986 = vst [vmem:[#allocation3 + $0x1d0] sm:$0xff] %v2912
        %2987 = vst [vmem:[#allocation3 + $0x1d8] sm:$0xff] %v2914
        %2988 = vst [vmem:[#allocation3 + $0x1e0] sm:$0xff] %v2918
        %2989 = vst [vmem:[#allocation3 + $0x1e8] sm:$0xff] %v2920
        %2990 = vst [vmem:[#allocation3 + $0x1f0] sm:$0xff] %v2924
        %2991 = vst [vmem:[#allocation3 + $0x1f8] sm:$0xff] %v2926
        %v2992 = vlaneseq
        %v2993 = vshrl.u32 %v2992, 7
        %v2994 = vsub.s32 1, %v2993
        %v2995 = vrot.slane %v1679, %v2994
        %v2996 = vlaneseq
        %v2997 = vshrl.u32 %v2996, 7
        %v2998 = vsub.s32 1, %v2997
        %v2999 = vrot.slane %v1681, %v2998
        %v3000 = vmul.f32 %v877, %v2995
        %v3001 = vmul.f32 %v879, %v2999
        %v3002 = vmul.f32 %v881, %v2995
        %v3003 = vmul.f32 %v883, %v2999
        %v3004 = vmul.f32 %v887, %v2995
        %v3005 = vmul.f32 %v889, %v2999
        %v3006 = vmul.f32 %v891, %v2995
        %v3007 = vmul.f32 %v893, %v2999
        %v3008 = vmul.f32 %v897, %v2995
        %v3009 = vmul.f32 %v899, %v2999
        %v3010 = vmul.f32 %v901, %v2995
        %v3011 = vmul.f32 %v903, %v2999
        %v3012 = vmul.f32 %v907, %v2995
        %v3013 = vmul.f32 %v909, %v2999
        %v3014 = vmul.f32 %v911, %v2995
        %v3015 = vmul.f32 %v913, %v2999
        %v3016 = vmul.f32 %v917, %v2995
        %v3017 = vmul.f32 %v919, %v2999
        %v3018 = vmul.f32 %v921, %v2995
        %v3019 = vmul.f32 %v923, %v2999
        %v3020 = vmul.f32 %v927, %v2995
        %v3021 = vmul.f32 %v929, %v2999
        %v3022 = vmul.f32 %v931, %v2995
        %v3023 = vmul.f32 %v933, %v2999
        %v3024 = vmul.f32 %v937, %v2995
        %v3025 = vmul.f32 %v939, %v2999
        %v3026 = vmul.f32 %v941, %v2995
        %v3027 = vmul.f32 %v943, %v2999
        %v3028 = vmul.f32 %v947, %v2995
        %v3029 = vmul.f32 %v949, %v2999
        %v3030 = vmul.f32 %v951, %v2995
        %v3031 = vmul.f32 %v953, %v2999
        %v3032 = vmul.f32 %v957, %v2995
        %v3033 = vmul.f32 %v959, %v2999
        %v3034 = vmul.f32 %v961, %v2995
        %v3035 = vmul.f32 %v963, %v2999
        %v3036 = vmul.f32 %v967, %v2995
        %v3037 = vmul.f32 %v969, %v2999
        %v3038 = vmul.f32 %v971, %v2995
        %v3039 = vmul.f32 %v973, %v2999
        %v3040 = vmul.f32 %v977, %v2995
        %v3041 = vmul.f32 %v979, %v2999
        %v3042 = vmul.f32 %v981, %v2995
        %v3043 = vmul.f32 %v983, %v2999
        %v3044 = vmul.f32 %v987, %v2995
        %v3045 = vmul.f32 %v989, %v2999
        %v3046 = vmul.f32 %v991, %v2995
        %v3047 = vmul.f32 %v993, %v2999
        %v3048 = vmul.f32 %v997, %v2995
        %v3049 = vmul.f32 %v999, %v2999
        %v3050 = vmul.f32 %v1001, %v2995
        %v3051 = vmul.f32 %v1003, %v2999
        %v3052 = vmul.f32 %v1007, %v2995
        %v3053 = vmul.f32 %v1009, %v2999
        %v3054 = vmul.f32 %v1011, %v2995
        %v3055 = vmul.f32 %v1013, %v2999
        %v3056 = vmul.f32 %v1017, %v2995
        %v3057 = vmul.f32 %v1019, %v2999
        %v3058 = vmul.f32 %v1021, %v2995
        %v3059 = vmul.f32 %v1023, %v2999
        %v3060 = vmul.f32 %v1027, %v2995
        %v3061 = vmul.f32 %v1029, %v2999
        %v3062 = vmul.f32 %v1031, %v2995
        %v3063 = vmul.f32 %v1033, %v2999
        %v3064 = vadd.f32 %v877, %v3000
        %v3065 = vadd.f32 %v879, %v3001
        %v3066 = vadd.f32 %v881, %v3002
        %v3067 = vadd.f32 %v883, %v3003
        %v3068 = vadd.f32 %v887, %v3004
        %v3069 = vadd.f32 %v889, %v3005
        %v3070 = vadd.f32 %v891, %v3006
        %v3071 = vadd.f32 %v893, %v3007
        %v3072 = vadd.f32 %v897, %v3008
        %v3073 = vadd.f32 %v899, %v3009
        %v3074 = vadd.f32 %v901, %v3010
        %v3075 = vadd.f32 %v903, %v3011
        %v3076 = vadd.f32 %v907, %v3012
        %v3077 = vadd.f32 %v909, %v3013
        %v3078 = vadd.f32 %v911, %v3014
        %v3079 = vadd.f32 %v913, %v3015
        %v3080 = vadd.f32 %v917, %v3016
        %v3081 = vadd.f32 %v919, %v3017
        %v3082 = vadd.f32 %v921, %v3018
        %v3083 = vadd.f32 %v923, %v3019
        %v3084 = vadd.f32 %v927, %v3020
        %v3085 = vadd.f32 %v929, %v3021
        %v3086 = vadd.f32 %v931, %v3022
        %v3087 = vadd.f32 %v933, %v3023
        %v3088 = vadd.f32 %v937, %v3024
        %v3089 = vadd.f32 %v939, %v3025
        %v3090 = vadd.f32 %v941, %v3026
        %v3091 = vadd.f32 %v943, %v3027
        %v3092 = vadd.f32 %v947, %v3028
        %v3093 = vadd.f32 %v949, %v3029
        %v3094 = vadd.f32 %v951, %v3030
        %v3095 = vadd.f32 %v953, %v3031
        %v3096 = vadd.f32 %v957, %v3032
        %v3097 = vadd.f32 %v959, %v3033
        %v3098 = vadd.f32 %v961, %v3034
        %v3099 = vadd.f32 %v963, %v3035
        %v3100 = vadd.f32 %v967, %v3036
        %v3101 = vadd.f32 %v969, %v3037
        %v3102 = vadd.f32 %v971, %v3038
        %v3103 = vadd.f32 %v973, %v3039
        %v3104 = vadd.f32 %v977, %v3040
        %v3105 = vadd.f32 %v979, %v3041
        %v3106 = vadd.f32 %v981, %v3042
        %v3107 = vadd.f32 %v983, %v3043
        %v3108 = vadd.f32 %v987, %v3044
        %v3109 = vadd.f32 %v989, %v3045
        %v3110 = vadd.f32 %v991, %v3046
        %v3111 = vadd.f32 %v993, %v3047
        %v3112 = vadd.f32 %v997, %v3048
        %v3113 = vadd.f32 %v999, %v3049
        %v3114 = vadd.f32 %v1001, %v3050
        %v3115 = vadd.f32 %v1003, %v3051
        %v3116 = vadd.f32 %v1007, %v3052
        %v3117 = vadd.f32 %v1009, %v3053
        %v3118 = vadd.f32 %v1011, %v3054
        %v3119 = vadd.f32 %v1013, %v3055
        %v3120 = vadd.f32 %v1017, %v3056
        %v3121 = vadd.f32 %v1019, %v3057
        %v3122 = vadd.f32 %v1021, %v3058
        %v3123 = vadd.f32 %v1023, %v3059
        %v3124 = vadd.f32 %v1027, %v3060
        %v3125 = vadd.f32 %v1029, %v3061
        %v3126 = vadd.f32 %v1031, %v3062
        %v3127 = vadd.f32 %v1033, %v3063
        %v3128 = vpack.c.bf16 %v3066, %v3064
        %v3129 = vpack.c.bf16 %v3067, %v3065
        %v3130 = vpack.c.bf16 %v3070, %v3068
        %v3131 = vpack.c.bf16 %v3071, %v3069
        %v3132 = vpack.c.bf16 %v3074, %v3072
        %v3133 = vpack.c.bf16 %v3075, %v3073
        %v3134 = vpack.c.bf16 %v3078, %v3076
        %v3135 = vpack.c.bf16 %v3079, %v3077
        %v3136 = vpack.c.bf16 %v3082, %v3080
        %v3137 = vpack.c.bf16 %v3083, %v3081
        %v3138 = vpack.c.bf16 %v3086, %v3084
        %v3139 = vpack.c.bf16 %v3087, %v3085
        %v3140 = vpack.c.bf16 %v3090, %v3088
        %v3141 = vpack.c.bf16 %v3091, %v3089
        %v3142 = vpack.c.bf16 %v3094, %v3092
        %v3143 = vpack.c.bf16 %v3095, %v3093
        %v3144 = vpack.c.bf16 %v3098, %v3096
        %v3145 = vpack.c.bf16 %v3099, %v3097
        %v3146 = vpack.c.bf16 %v3102, %v3100
        %v3147 = vpack.c.bf16 %v3103, %v3101
        %v3148 = vpack.c.bf16 %v3106, %v3104
        %v3149 = vpack.c.bf16 %v3107, %v3105
        %v3150 = vpack.c.bf16 %v3110, %v3108
        %v3151 = vpack.c.bf16 %v3111, %v3109
        %v3152 = vpack.c.bf16 %v3114, %v3112
        %v3153 = vpack.c.bf16 %v3115, %v3113
        %v3154 = vpack.c.bf16 %v3118, %v3116
        %v3155 = vpack.c.bf16 %v3119, %v3117
        %v3156 = vpack.c.bf16 %v3122, %v3120
        %v3157 = vpack.c.bf16 %v3123, %v3121
        %v3158 = vpack.c.bf16 %v3126, %v3124
        %v3159 = vpack.c.bf16 %v3127, %v3125
        %v3192 = vunpack.c.l.b16 %v3128
        %v3193 = vunpack.c.l.b16 %v3129
        %v3194 = vunpack.c.h.b16 %v3128
        %v3195 = vunpack.c.h.b16 %v3129
        %v3196 = vunpack.c.l.b16 %v3130
        %v3197 = vunpack.c.l.b16 %v3131
        %v3198 = vunpack.c.h.b16 %v3130
        %v3199 = vunpack.c.h.b16 %v3131
        %v3200 = vunpack.c.l.b16 %v3132
        %v3201 = vunpack.c.l.b16 %v3133
        %v3202 = vunpack.c.h.b16 %v3132
        %v3203 = vunpack.c.h.b16 %v3133
        %v3204 = vunpack.c.l.b16 %v3134
        %v3205 = vunpack.c.l.b16 %v3135
        %v3206 = vunpack.c.h.b16 %v3134
        %v3207 = vunpack.c.h.b16 %v3135
        %v3208 = vunpack.c.l.b16 %v3136
        %v3209 = vunpack.c.l.b16 %v3137
        %v3210 = vunpack.c.h.b16 %v3136
        %v3211 = vunpack.c.h.b16 %v3137
        %v3212 = vunpack.c.l.b16 %v3138
        %v3213 = vunpack.c.l.b16 %v3139
        %v3214 = vunpack.c.h.b16 %v3138
        %v3215 = vunpack.c.h.b16 %v3139
        %v3216 = vunpack.c.l.b16 %v3140
        %v3217 = vunpack.c.l.b16 %v3141
        %v3218 = vunpack.c.h.b16 %v3140
        %v3219 = vunpack.c.h.b16 %v3141
        %v3220 = vunpack.c.l.b16 %v3142
        %v3221 = vunpack.c.l.b16 %v3143
        %v3222 = vunpack.c.h.b16 %v3142
        %v3223 = vunpack.c.h.b16 %v3143
        %v3224 = vunpack.c.l.b16 %v3144
        %v3225 = vunpack.c.l.b16 %v3145
        %v3226 = vunpack.c.h.b16 %v3144
        %v3227 = vunpack.c.h.b16 %v3145
        %v3228 = vunpack.c.l.b16 %v3146
        %v3229 = vunpack.c.l.b16 %v3147
        %v3230 = vunpack.c.h.b16 %v3146
        %v3231 = vunpack.c.h.b16 %v3147
        %v3232 = vunpack.c.l.b16 %v3148
        %v3233 = vunpack.c.l.b16 %v3149
        %v3234 = vunpack.c.h.b16 %v3148
        %v3235 = vunpack.c.h.b16 %v3149
        %v3236 = vunpack.c.l.b16 %v3150
        %v3237 = vunpack.c.l.b16 %v3151
        %v3238 = vunpack.c.h.b16 %v3150
        %v3239 = vunpack.c.h.b16 %v3151
        %v3240 = vunpack.c.l.b16 %v3152
        %v3241 = vunpack.c.l.b16 %v3153
        %v3242 = vunpack.c.h.b16 %v3152
        %v3243 = vunpack.c.h.b16 %v3153
        %v3244 = vunpack.c.l.b16 %v3154
        %v3245 = vunpack.c.l.b16 %v3155
        %v3246 = vunpack.c.h.b16 %v3154
        %v3247 = vunpack.c.h.b16 %v3155
        %v3248 = vunpack.c.l.b16 %v3156
        %v3249 = vunpack.c.l.b16 %v3157
        %v3250 = vunpack.c.h.b16 %v3156
        %v3251 = vunpack.c.h.b16 %v3157
        %v3252 = vunpack.c.l.b16 %v3158
        %v3253 = vunpack.c.l.b16 %v3159
        %v3254 = vunpack.c.h.b16 %v3158
        %v3255 = vunpack.c.h.b16 %v3159
        %v3256 = vpack.c.b16 %v3193, %v3192
        %v3257 = vpack.c.b16 %v3195, %v3194
        %v3258 = vpack.c.b16 %v3197, %v3196
        %v3259 = vpack.c.b16 %v3199, %v3198
        %v3260 = vpack.c.b16 %v3201, %v3200
        %v3261 = vpack.c.b16 %v3203, %v3202
        %v3262 = vpack.c.b16 %v3205, %v3204
        %v3263 = vpack.c.b16 %v3207, %v3206
        %v3264 = vpack.c.b16 %v3209, %v3208
        %v3265 = vpack.c.b16 %v3211, %v3210
        %v3266 = vpack.c.b16 %v3213, %v3212
        %v3267 = vpack.c.b16 %v3215, %v3214
        %v3268 = vpack.c.b16 %v3217, %v3216
        %v3269 = vpack.c.b16 %v3219, %v3218
        %v3270 = vpack.c.b16 %v3221, %v3220
        %v3271 = vpack.c.b16 %v3223, %v3222
        %v3272 = vpack.c.b16 %v3225, %v3224
        %v3273 = vpack.c.b16 %v3227, %v3226
        %v3274 = vpack.c.b16 %v3229, %v3228
        %v3275 = vpack.c.b16 %v3231, %v3230
        %v3276 = vpack.c.b16 %v3233, %v3232
        %v3277 = vpack.c.b16 %v3235, %v3234
        %v3278 = vpack.c.b16 %v3237, %v3236
        %v3279 = vpack.c.b16 %v3239, %v3238
        %v3280 = vpack.c.b16 %v3241, %v3240
        %v3281 = vpack.c.b16 %v3243, %v3242
        %v3282 = vpack.c.b16 %v3245, %v3244
        %v3283 = vpack.c.b16 %v3247, %v3246
        %v3284 = vpack.c.b16 %v3249, %v3248
        %v3285 = vpack.c.b16 %v3251, %v3250
        %v3286 = vpack.c.b16 %v3253, %v3252
        %v3287 = vpack.c.b16 %v3255, %v3254
        %s3320 = scalar_lea.vmem [#allocation2], 256
        %3321 = vst [vmem:[%s3320] sm:$0xff] %v3256
        %3322 = vst [vmem:[%s3320 + $0x8] sm:$0xff] %v3257
        %3323 = vst [vmem:[%s3320 + $0x10] sm:$0xff] %v3258
        %3324 = vst [vmem:[%s3320 + $0x18] sm:$0xff] %v3259
        %3325 = vst [vmem:[%s3320 + $0x20] sm:$0xff] %v3260
        %3326 = vst [vmem:[%s3320 + $0x28] sm:$0xff] %v3261
        %3327 = vst [vmem:[%s3320 + $0x30] sm:$0xff] %v3262
        %3328 = vst [vmem:[%s3320 + $0x38] sm:$0xff] %v3263
        %3329 = vst [vmem:[%s3320 + $0x40] sm:$0xff] %v3264
        %3330 = vst [vmem:[%s3320 + $0x48] sm:$0xff] %v3265
        %3331 = vst [vmem:[%s3320 + $0x50] sm:$0xff] %v3266
        %3332 = vst [vmem:[%s3320 + $0x58] sm:$0xff] %v3267
        %3333 = vst [vmem:[%s3320 + $0x60] sm:$0xff] %v3268
        %3334 = vst [vmem:[%s3320 + $0x68] sm:$0xff] %v3269
        %3335 = vst [vmem:[%s3320 + $0x70] sm:$0xff] %v3270
        %3336 = vst [vmem:[%s3320 + $0x78] sm:$0xff] %v3271
        %3337 = vst [vmem:[%s3320 + $0x80] sm:$0xff] %v3272
        %3338 = vst [vmem:[%s3320 + $0x88] sm:$0xff] %v3273
        %3339 = vst [vmem:[%s3320 + $0x90] sm:$0xff] %v3274
        %3340 = vst [vmem:[%s3320 + $0x98] sm:$0xff] %v3275
        %3341 = vst [vmem:[%s3320 + $0xa0] sm:$0xff] %v3276
        %3342 = vst [vmem:[%s3320 + $0xa8] sm:$0xff] %v3277
        %3343 = vst [vmem:[%s3320 + $0xb0] sm:$0xff] %v3278
        %3344 = vst [vmem:[%s3320 + $0xb8] sm:$0xff] %v3279
        %3345 = vst [vmem:[%s3320 + $0xc0] sm:$0xff] %v3280
        %3346 = vst [vmem:[%s3320 + $0xc8] sm:$0xff] %v3281
        %3347 = vst [vmem:[%s3320 + $0xd0] sm:$0xff] %v3282
        %3348 = vst [vmem:[%s3320 + $0xd8] sm:$0xff] %v3283
        %3349 = vst [vmem:[%s3320 + $0xe0] sm:$0xff] %v3284
        %3350 = vst [vmem:[%s3320 + $0xe8] sm:$0xff] %v3285
        %3351 = vst [vmem:[%s3320 + $0xf0] sm:$0xff] %v3286
        %3352 = vst [vmem:[%s3320 + $0xf8] sm:$0xff] %v3287
        %v3353 = vadd.f32 %v3064, %v3066
        %v3354 = vadd.f32 %v3353, %v3068
        %v3355 = vadd.f32 %v3354, %v3070
        %v3356 = vadd.f32 %v3355, %v3072
        %v3357 = vadd.f32 %v3356, %v3074
        %v3358 = vadd.f32 %v3357, %v3076
        %v3359 = vadd.f32 %v3358, %v3078
        %v3360 = vadd.f32 %v3359, %v3080
        %v3361 = vadd.f32 %v3360, %v3082
        %v3362 = vadd.f32 %v3361, %v3084
        %v3363 = vadd.f32 %v3362, %v3086
        %v3364 = vadd.f32 %v3363, %v3088
        %v3365 = vadd.f32 %v3364, %v3090
        %v3366 = vadd.f32 %v3365, %v3092
        %v3367 = vadd.f32 %v3366, %v3094
        %v3368 = vadd.f32 %v3367, %v3096
        %v3369 = vadd.f32 %v3368, %v3098
        %v3370 = vadd.f32 %v3369, %v3100
        %v3371 = vadd.f32 %v3370, %v3102
        %v3372 = vadd.f32 %v3371, %v3104
        %v3373 = vadd.f32 %v3372, %v3106
        %v3374 = vadd.f32 %v3373, %v3108
        %v3375 = vadd.f32 %v3374, %v3110
        %v3376 = vadd.f32 %v3375, %v3112
        %v3377 = vadd.f32 %v3376, %v3114
        %v3378 = vadd.f32 %v3377, %v3116
        %v3379 = vadd.f32 %v3378, %v3118
        %v3380 = vadd.f32 %v3379, %v3120
        %v3381 = vadd.f32 %v3380, %v3122
        %v3382 = vadd.f32 %v3381, %v3124
        %v3383 = vadd.f32 %v3382, %v3126
        %v3384 = vrot.slane %v3383, 4
        %v3385 = vadd.f32 %v3383, %v3384
        %v3386 = vrot.slane %v3385, 2
        %v3387 = vadd.f32 %v3385, %v3386
        %v3388 = vrot.slane %v3387, 1
        %v3389 = vadd.f32 %v3387, %v3388
        %v3390 = vadd.f32 %v3065, %v3067
        %v3391 = vadd.f32 %v3390, %v3069
        %v3392 = vadd.f32 %v3391, %v3071
        %v3393 = vadd.f32 %v3392, %v3073
        %v3394 = vadd.f32 %v3393, %v3075
        %v3395 = vadd.f32 %v3394, %v3077
        %v3396 = vadd.f32 %v3395, %v3079
        %v3397 = vadd.f32 %v3396, %v3081
        %v3398 = vadd.f32 %v3397, %v3083
        %v3399 = vadd.f32 %v3398, %v3085
        %v3400 = vadd.f32 %v3399, %v3087
        %v3401 = vadd.f32 %v3400, %v3089
        %v3402 = vadd.f32 %v3401, %v3091
        %v3403 = vadd.f32 %v3402, %v3093
        %v3404 = vadd.f32 %v3403, %v3095
        %v3405 = vadd.f32 %v3404, %v3097
        %v3406 = vadd.f32 %v3405, %v3099
        %v3407 = vadd.f32 %v3406, %v3101
        %v3408 = vadd.f32 %v3407, %v3103
        %v3409 = vadd.f32 %v3408, %v3105
        %v3410 = vadd.f32 %v3409, %v3107
        %v3411 = vadd.f32 %v3410, %v3109
        %v3412 = vadd.f32 %v3411, %v3111
        %v3413 = vadd.f32 %v3412, %v3113
        %v3414 = vadd.f32 %v3413, %v3115
        %v3415 = vadd.f32 %v3414, %v3117
        %v3416 = vadd.f32 %v3415, %v3119
        %v3417 = vadd.f32 %v3416, %v3121
        %v3418 = vadd.f32 %v3417, %v3123
        %v3419 = vadd.f32 %v3418, %v3125
        %v3420 = vadd.f32 %v3419, %v3127
        %v3421 = vrot.slane %v3420, 4
        %v3422 = vadd.f32 %v3420, %v3421
        %v3423 = vrot.slane %v3422, 2
        %v3424 = vadd.f32 %v3422, %v3423
        %v3425 = vrot.slane %v3424, 1
        %v3426 = vadd.f32 %v3424, %v3425
        %v3427 = vmul.f32 %v3389, %v1109
        %v3428 = vmul.f32 %v3426, %v1109
        %v3429 = vmul.f32 %v3064, %v3427
        %v3430 = vmul.f32 %v3065, %v3428
        %v3431 = vmul.f32 %v3066, %v3427
        %v3432 = vmul.f32 %v3067, %v3428
        %v3433 = vmul.f32 %v3068, %v3427
        %v3434 = vmul.f32 %v3069, %v3428
        %v3435 = vmul.f32 %v3070, %v3427
        %v3436 = vmul.f32 %v3071, %v3428
        %v3437 = vmul.f32 %v3072, %v3427
        %v3438 = vmul.f32 %v3073, %v3428
        %v3439 = vmul.f32 %v3074, %v3427
        %v3440 = vmul.f32 %v3075, %v3428
        %v3441 = vmul.f32 %v3076, %v3427
        %v3442 = vmul.f32 %v3077, %v3428
        %v3443 = vmul.f32 %v3078, %v3427
        %v3444 = vmul.f32 %v3079, %v3428
        %v3445 = vmul.f32 %v3080, %v3427
        %v3446 = vmul.f32 %v3081, %v3428
        %v3447 = vmul.f32 %v3082, %v3427
        %v3448 = vmul.f32 %v3083, %v3428
        %v3449 = vmul.f32 %v3084, %v3427
        %v3450 = vmul.f32 %v3085, %v3428
        %v3451 = vmul.f32 %v3086, %v3427
        %v3452 = vmul.f32 %v3087, %v3428
        %v3453 = vmul.f32 %v3088, %v3427
        %v3454 = vmul.f32 %v3089, %v3428
        %v3455 = vmul.f32 %v3090, %v3427
        %v3456 = vmul.f32 %v3091, %v3428
        %v3457 = vmul.f32 %v3092, %v3427
        %v3458 = vmul.f32 %v3093, %v3428
        %v3459 = vmul.f32 %v3094, %v3427
        %v3460 = vmul.f32 %v3095, %v3428
        %v3461 = vmul.f32 %v3096, %v3427
        %v3462 = vmul.f32 %v3097, %v3428
        %v3463 = vmul.f32 %v3098, %v3427
        %v3464 = vmul.f32 %v3099, %v3428
        %v3465 = vmul.f32 %v3100, %v3427
        %v3466 = vmul.f32 %v3101, %v3428
        %v3467 = vmul.f32 %v3102, %v3427
        %v3468 = vmul.f32 %v3103, %v3428
        %v3469 = vmul.f32 %v3104, %v3427
        %v3470 = vmul.f32 %v3105, %v3428
        %v3471 = vmul.f32 %v3106, %v3427
        %v3472 = vmul.f32 %v3107, %v3428
        %v3473 = vmul.f32 %v3108, %v3427
        %v3474 = vmul.f32 %v3109, %v3428
        %v3475 = vmul.f32 %v3110, %v3427
        %v3476 = vmul.f32 %v3111, %v3428
        %v3477 = vmul.f32 %v3112, %v3427
        %v3478 = vmul.f32 %v3113, %v3428
        %v3479 = vmul.f32 %v3114, %v3427
        %v3480 = vmul.f32 %v3115, %v3428
        %v3481 = vmul.f32 %v3116, %v3427
        %v3482 = vmul.f32 %v3117, %v3428
        %v3483 = vmul.f32 %v3118, %v3427
        %v3484 = vmul.f32 %v3119, %v3428
        %v3485 = vmul.f32 %v3120, %v3427
        %v3486 = vmul.f32 %v3121, %v3428
        %v3487 = vmul.f32 %v3122, %v3427
        %v3488 = vmul.f32 %v3123, %v3428
        %v3489 = vmul.f32 %v3124, %v3427
        %v3490 = vmul.f32 %v3125, %v3428
        %v3491 = vmul.f32 %v3126, %v3427
        %v3492 = vmul.f32 %v3127, %v3428
        %v3493 = vadd.f32 %v3429, %v3430
        %3494 = vadd.xlane.f32.xlu0 %v3493
        %v3495 = vpop.xlane.xlu0 %3494
        %v3496 = vadd.f32 %v3431, %v3432
        %3497 = vadd.xlane.f32.xlu0 %v3496
        %v3498 = vpop.xlane.xlu0 %3497
        %v3499 = vadd.f32 %v3433, %v3434
        %3500 = vadd.xlane.f32.xlu0 %v3499
        %v3501 = vpop.xlane.xlu0 %3500
        %v3502 = vadd.f32 %v3435, %v3436
        %3503 = vadd.xlane.f32.xlu0 %v3502
        %v3504 = vpop.xlane.xlu0 %3503
        %v3505 = vadd.f32 %v3437, %v3438
        %3506 = vadd.xlane.f32.xlu0 %v3505
        %v3507 = vpop.xlane.xlu0 %3506
        %v3508 = vadd.f32 %v3439, %v3440
        %3509 = vadd.xlane.f32.xlu0 %v3508
        %v3510 = vpop.xlane.xlu0 %3509
        %v3511 = vadd.f32 %v3441, %v3442
        %3512 = vadd.xlane.f32.xlu0 %v3511
        %v3513 = vpop.xlane.xlu0 %3512
        %v3514 = vadd.f32 %v3443, %v3444
        %3515 = vadd.xlane.f32.xlu0 %v3514
        %v3516 = vpop.xlane.xlu0 %3515
        %v3517 = vadd.f32 %v3445, %v3446
        %3518 = vadd.xlane.f32.xlu0 %v3517
        %v3519 = vpop.xlane.xlu0 %3518
        %v3520 = vadd.f32 %v3447, %v3448
        %3521 = vadd.xlane.f32.xlu0 %v3520
        %v3522 = vpop.xlane.xlu0 %3521
        %v3523 = vadd.f32 %v3449, %v3450
        %3524 = vadd.xlane.f32.xlu0 %v3523
        %v3525 = vpop.xlane.xlu0 %3524
        %v3526 = vadd.f32 %v3451, %v3452
        %3527 = vadd.xlane.f32.xlu0 %v3526
        %v3528 = vpop.xlane.xlu0 %3527
        %v3529 = vadd.f32 %v3453, %v3454
        %3530 = vadd.xlane.f32.xlu0 %v3529
        %v3531 = vpop.xlane.xlu0 %3530
        %v3532 = vadd.f32 %v3455, %v3456
        %3533 = vadd.xlane.f32.xlu0 %v3532
        %v3534 = vpop.xlane.xlu0 %3533
        %v3535 = vadd.f32 %v3457, %v3458
        %3536 = vadd.xlane.f32.xlu0 %v3535
        %v3537 = vpop.xlane.xlu0 %3536
        %v3538 = vadd.f32 %v3459, %v3460
        %3539 = vadd.xlane.f32.xlu0 %v3538
        %v3540 = vpop.xlane.xlu0 %3539
        %v3541 = vadd.f32 %v3461, %v3462
        %3542 = vadd.xlane.f32.xlu0 %v3541
        %v3543 = vpop.xlane.xlu0 %3542
        %v3544 = vadd.f32 %v3463, %v3464
        %3545 = vadd.xlane.f32.xlu0 %v3544
        %v3546 = vpop.xlane.xlu0 %3545
        %v3547 = vadd.f32 %v3465, %v3466
        %3548 = vadd.xlane.f32.xlu0 %v3547
        %v3549 = vpop.xlane.xlu0 %3548
        %v3550 = vadd.f32 %v3467, %v3468
        %3551 = vadd.xlane.f32.xlu0 %v3550
        %v3552 = vpop.xlane.xlu0 %3551
        %v3553 = vadd.f32 %v3469, %v3470
        %3554 = vadd.xlane.f32.xlu0 %v3553
        %v3555 = vpop.xlane.xlu0 %3554
        %v3556 = vadd.f32 %v3471, %v3472
        %3557 = vadd.xlane.f32.xlu0 %v3556
        %v3558 = vpop.xlane.xlu0 %3557
        %v3559 = vadd.f32 %v3473, %v3474
        %3560 = vadd.xlane.f32.xlu0 %v3559
        %v3561 = vpop.xlane.xlu0 %3560
        %v3562 = vadd.f32 %v3475, %v3476
        %3563 = vadd.xlane.f32.xlu0 %v3562
        %v3564 = vpop.xlane.xlu0 %3563
        %v3565 = vadd.f32 %v3477, %v3478
        %3566 = vadd.xlane.f32.xlu0 %v3565
        %v3567 = vpop.xlane.xlu0 %3566
        %v3568 = vadd.f32 %v3479, %v3480
        %3569 = vadd.xlane.f32.xlu0 %v3568
        %v3570 = vpop.xlane.xlu0 %3569
        %v3571 = vadd.f32 %v3481, %v3482
        %3572 = vadd.xlane.f32.xlu0 %v3571
        %v3573 = vpop.xlane.xlu0 %3572
        %v3574 = vadd.f32 %v3483, %v3484
        %3575 = vadd.xlane.f32.xlu0 %v3574
        %v3576 = vpop.xlane.xlu0 %3575
        %v3577 = vadd.f32 %v3485, %v3486
        %3578 = vadd.xlane.f32.xlu0 %v3577
        %v3579 = vpop.xlane.xlu0 %3578
        %v3580 = vadd.f32 %v3487, %v3488
        %3581 = vadd.xlane.f32.xlu0 %v3580
        %v3582 = vpop.xlane.xlu0 %3581
        %v3583 = vadd.f32 %v3489, %v3490
        %3584 = vadd.xlane.f32.xlu0 %v3583
        %v3585 = vpop.xlane.xlu0 %3584
        %v3586 = vadd.f32 %v3491, %v3492
        %3587 = vadd.xlane.f32.xlu0 %v3586
        %v3588 = vpop.xlane.xlu0 %3587
        %v3589 = vmul.f32 %v3064, %v3064
        %v3590 = vmul.f32 %v3065, %v3065
        %v3591 = vmul.f32 %v3066, %v3066
        %v3592 = vmul.f32 %v3067, %v3067
        %v3593 = vmul.f32 %v3068, %v3068
        %v3594 = vmul.f32 %v3069, %v3069
        %v3595 = vmul.f32 %v3070, %v3070
        %v3596 = vmul.f32 %v3071, %v3071
        %v3597 = vmul.f32 %v3072, %v3072
        %v3598 = vmul.f32 %v3073, %v3073
        %v3599 = vmul.f32 %v3074, %v3074
        %v3600 = vmul.f32 %v3075, %v3075
        %v3601 = vmul.f32 %v3076, %v3076
        %v3602 = vmul.f32 %v3077, %v3077
        %v3603 = vmul.f32 %v3078, %v3078
        %v3604 = vmul.f32 %v3079, %v3079
        %v3605 = vmul.f32 %v3080, %v3080
        %v3606 = vmul.f32 %v3081, %v3081
        %v3607 = vmul.f32 %v3082, %v3082
        %v3608 = vmul.f32 %v3083, %v3083
        %v3609 = vmul.f32 %v3084, %v3084
        %v3610 = vmul.f32 %v3085, %v3085
        %v3611 = vmul.f32 %v3086, %v3086
        %v3612 = vmul.f32 %v3087, %v3087
        %v3613 = vmul.f32 %v3088, %v3088
        %v3614 = vmul.f32 %v3089, %v3089
        %v3615 = vmul.f32 %v3090, %v3090
        %v3616 = vmul.f32 %v3091, %v3091
        %v3617 = vmul.f32 %v3092, %v3092
        %v3618 = vmul.f32 %v3093, %v3093
        %v3619 = vmul.f32 %v3094, %v3094
        %v3620 = vmul.f32 %v3095, %v3095
        %v3621 = vmul.f32 %v3096, %v3096
        %v3622 = vmul.f32 %v3097, %v3097
        %v3623 = vmul.f32 %v3098, %v3098
        %v3624 = vmul.f32 %v3099, %v3099
        %v3625 = vmul.f32 %v3100, %v3100
        %v3626 = vmul.f32 %v3101, %v3101
        %v3627 = vmul.f32 %v3102, %v3102
        %v3628 = vmul.f32 %v3103, %v3103
        %v3629 = vmul.f32 %v3104, %v3104
        %v3630 = vmul.f32 %v3105, %v3105
        %v3631 = vmul.f32 %v3106, %v3106
        %v3632 = vmul.f32 %v3107, %v3107
        %v3633 = vmul.f32 %v3108, %v3108
        %v3634 = vmul.f32 %v3109, %v3109
        %v3635 = vmul.f32 %v3110, %v3110
        %v3636 = vmul.f32 %v3111, %v3111
        %v3637 = vmul.f32 %v3112, %v3112
        %v3638 = vmul.f32 %v3113, %v3113
        %v3639 = vmul.f32 %v3114, %v3114
        %v3640 = vmul.f32 %v3115, %v3115
        %v3641 = vmul.f32 %v3116, %v3116
        %v3642 = vmul.f32 %v3117, %v3117
        %v3643 = vmul.f32 %v3118, %v3118
        %v3644 = vmul.f32 %v3119, %v3119
        %v3645 = vmul.f32 %v3120, %v3120
        %v3646 = vmul.f32 %v3121, %v3121
        %v3647 = vmul.f32 %v3122, %v3122
        %v3648 = vmul.f32 %v3123, %v3123
        %v3649 = vmul.f32 %v3124, %v3124
        %v3650 = vmul.f32 %v3125, %v3125
        %v3651 = vmul.f32 %v3126, %v3126
        %v3652 = vmul.f32 %v3127, %v3127
        %v3653 = vadd.f32 %v3589, %v3590
        %3654 = vadd.xlane.f32.xlu0 %v3653
        %v3655 = vpop.xlane.xlu0 %3654
        %v3656 = vadd.f32 %v3591, %v3592
        %3657 = vadd.xlane.f32.xlu0 %v3656
        %v3658 = vpop.xlane.xlu0 %3657
        %v3659 = vadd.f32 %v3593, %v3594
        %3660 = vadd.xlane.f32.xlu0 %v3659
        %v3661 = vpop.xlane.xlu0 %3660
        %v3662 = vadd.f32 %v3595, %v3596
        %3663 = vadd.xlane.f32.xlu0 %v3662
        %v3664 = vpop.xlane.xlu0 %3663
        %v3665 = vadd.f32 %v3597, %v3598
        %3666 = vadd.xlane.f32.xlu0 %v3665
        %v3667 = vpop.xlane.xlu0 %3666
        %v3668 = vadd.f32 %v3599, %v3600
        %3669 = vadd.xlane.f32.xlu0 %v3668
        %v3670 = vpop.xlane.xlu0 %3669
        %v3671 = vadd.f32 %v3601, %v3602
        %3672 = vadd.xlane.f32.xlu0 %v3671
        %v3673 = vpop.xlane.xlu0 %3672
        %v3674 = vadd.f32 %v3603, %v3604
        %3675 = vadd.xlane.f32.xlu0 %v3674
        %v3676 = vpop.xlane.xlu0 %3675
        %v3677 = vadd.f32 %v3605, %v3606
        %3678 = vadd.xlane.f32.xlu0 %v3677
        %v3679 = vpop.xlane.xlu0 %3678
        %v3680 = vadd.f32 %v3607, %v3608
        %3681 = vadd.xlane.f32.xlu0 %v3680
        %v3682 = vpop.xlane.xlu0 %3681
        %v3683 = vadd.f32 %v3609, %v3610
        %3684 = vadd.xlane.f32.xlu0 %v3683
        %v3685 = vpop.xlane.xlu0 %3684
        %v3686 = vadd.f32 %v3611, %v3612
        %3687 = vadd.xlane.f32.xlu0 %v3686
        %v3688 = vpop.xlane.xlu0 %3687
        %v3689 = vadd.f32 %v3613, %v3614
        %3690 = vadd.xlane.f32.xlu0 %v3689
        %v3691 = vpop.xlane.xlu0 %3690
        %v3692 = vadd.f32 %v3615, %v3616
        %3693 = vadd.xlane.f32.xlu0 %v3692
        %v3694 = vpop.xlane.xlu0 %3693
        %v3695 = vadd.f32 %v3617, %v3618
        %3696 = vadd.xlane.f32.xlu0 %v3695
        %v3697 = vpop.xlane.xlu0 %3696
        %v3698 = vadd.f32 %v3619, %v3620
        %3699 = vadd.xlane.f32.xlu0 %v3698
        %v3700 = vpop.xlane.xlu0 %3699
        %v3701 = vadd.f32 %v3621, %v3622
        %3702 = vadd.xlane.f32.xlu0 %v3701
        %v3703 = vpop.xlane.xlu0 %3702
        %v3704 = vadd.f32 %v3623, %v3624
        %3705 = vadd.xlane.f32.xlu0 %v3704
        %v3706 = vpop.xlane.xlu0 %3705
        %v3707 = vadd.f32 %v3625, %v3626
        %3708 = vadd.xlane.f32.xlu0 %v3707
        %v3709 = vpop.xlane.xlu0 %3708
        %v3710 = vadd.f32 %v3627, %v3628
        %3711 = vadd.xlane.f32.xlu0 %v3710
        %v3712 = vpop.xlane.xlu0 %3711
        %v3713 = vadd.f32 %v3629, %v3630
        %3714 = vadd.xlane.f32.xlu0 %v3713
        %v3715 = vpop.xlane.xlu0 %3714
        %v3716 = vadd.f32 %v3631, %v3632
        %3717 = vadd.xlane.f32.xlu0 %v3716
        %v3718 = vpop.xlane.xlu0 %3717
        %v3719 = vadd.f32 %v3633, %v3634
        %3720 = vadd.xlane.f32.xlu0 %v3719
        %v3721 = vpop.xlane.xlu0 %3720
        %v3722 = vadd.f32 %v3635, %v3636
        %3723 = vadd.xlane.f32.xlu0 %v3722
        %v3724 = vpop.xlane.xlu0 %3723
        %v3725 = vadd.f32 %v3637, %v3638
        %3726 = vadd.xlane.f32.xlu0 %v3725
        %v3727 = vpop.xlane.xlu0 %3726
        %v3728 = vadd.f32 %v3639, %v3640
        %3729 = vadd.xlane.f32.xlu0 %v3728
        %v3730 = vpop.xlane.xlu0 %3729
        %v3731 = vadd.f32 %v3641, %v3642
        %3732 = vadd.xlane.f32.xlu0 %v3731
        %v3733 = vpop.xlane.xlu0 %3732
        %v3734 = vadd.f32 %v3643, %v3644
        %3735 = vadd.xlane.f32.xlu0 %v3734
        %v3736 = vpop.xlane.xlu0 %3735
        %v3737 = vadd.f32 %v3645, %v3646
        %3738 = vadd.xlane.f32.xlu0 %v3737
        %v3739 = vpop.xlane.xlu0 %3738
        %v3740 = vadd.f32 %v3647, %v3648
        %3741 = vadd.xlane.f32.xlu0 %v3740
        %v3742 = vpop.xlane.xlu0 %3741
        %v3743 = vadd.f32 %v3649, %v3650
        %3744 = vadd.xlane.f32.xlu0 %v3743
        %v3745 = vpop.xlane.xlu0 %3744
        %v3746 = vadd.f32 %v3651, %v3652
        %3747 = vadd.xlane.f32.xlu0 %v3746
        %v3748 = vpop.xlane.xlu0 %3747
        %v3749 = vmul.f32 %v3427, %v3427
        %v3750 = vmul.f32 %v3428, %v3428
        %v3751 = vadd.f32 %v3749, %v3750
        %3752 = vadd.xlane.f32.xlu0 %v3751
        %v3753 = vpop.xlane.xlu0 %3752
        %v3754 = vmul.f32 %v3655, %v3753
        %v3755 = vmul.f32 %v3658, %v3753
        %v3756 = vmul.f32 %v3661, %v3753
        %v3757 = vmul.f32 %v3664, %v3753
        %v3758 = vmul.f32 %v3667, %v3753
        %v3759 = vmul.f32 %v3670, %v3753
        %v3760 = vmul.f32 %v3673, %v3753
        %v3761 = vmul.f32 %v3676, %v3753
        %v3762 = vmul.f32 %v3679, %v3753
        %v3763 = vmul.f32 %v3682, %v3753
        %v3764 = vmul.f32 %v3685, %v3753
        %v3765 = vmul.f32 %v3688, %v3753
        %v3766 = vmul.f32 %v3691, %v3753
        %v3767 = vmul.f32 %v3694, %v3753
        %v3768 = vmul.f32 %v3697, %v3753
        %v3769 = vmul.f32 %v3700, %v3753
        %v3770 = vmul.f32 %v3703, %v3753
        %v3771 = vmul.f32 %v3706, %v3753
        %v3772 = vmul.f32 %v3709, %v3753
        %v3773 = vmul.f32 %v3712, %v3753
        %v3774 = vmul.f32 %v3715, %v3753
        %v3775 = vmul.f32 %v3718, %v3753
        %v3776 = vmul.f32 %v3721, %v3753
        %v3777 = vmul.f32 %v3724, %v3753
        %v3778 = vmul.f32 %v3727, %v3753
        %v3779 = vmul.f32 %v3730, %v3753
        %v3780 = vmul.f32 %v3733, %v3753
        %v3781 = vmul.f32 %v3736, %v3753
        %v3782 = vmul.f32 %v3739, %v3753
        %v3783 = vmul.f32 %v3742, %v3753
        %v3784 = vmul.f32 %v3745, %v3753
        %v3785 = vmul.f32 %v3748, %v3753
        %v3786 = vmax.f32 %v3754, 1e-16
        %v3787 = vmax.f32 %v3755, 1e-16
        %v3788 = vmax.f32 %v3756, 1e-16
        %v3789 = vmax.f32 %v3757, 1e-16
        %v3790 = vmax.f32 %v3758, 1e-16
        %v3791 = vmax.f32 %v3759, 1e-16
        %v3792 = vmax.f32 %v3760, 1e-16
        %v3793 = vmax.f32 %v3761, 1e-16
        %v3794 = vmax.f32 %v3762, 1e-16
        %v3795 = vmax.f32 %v3763, 1e-16
        %v3796 = vmax.f32 %v3764, 1e-16
        %v3797 = vmax.f32 %v3765, 1e-16
        %v3798 = vmax.f32 %v3766, 1e-16
        %v3799 = vmax.f32 %v3767, 1e-16
        %v3800 = vmax.f32 %v3768, 1e-16
        %v3801 = vmax.f32 %v3769, 1e-16
        %v3802 = vmax.f32 %v3770, 1e-16
        %v3803 = vmax.f32 %v3771, 1e-16
        %v3804 = vmax.f32 %v3772, 1e-16
        %v3805 = vmax.f32 %v3773, 1e-16
        %v3806 = vmax.f32 %v3774, 1e-16
        %v3807 = vmax.f32 %v3775, 1e-16
        %v3808 = vmax.f32 %v3776, 1e-16
        %v3809 = vmax.f32 %v3777, 1e-16
        %v3810 = vmax.f32 %v3778, 1e-16
        %v3811 = vmax.f32 %v3779, 1e-16
        %v3812 = vmax.f32 %v3780, 1e-16
        %v3813 = vmax.f32 %v3781, 1e-16
        %v3814 = vmax.f32 %v3782, 1e-16
        %v3815 = vmax.f32 %v3783, 1e-16
        %v3816 = vmax.f32 %v3784, 1e-16
        %v3817 = vmax.f32 %v3785, 1e-16
        %v3818 = vrsqrt.pop %v3786
        %v3819 = vrsqrt.pop %v3787
        %v3820 = vrsqrt.pop %v3788
        %v3821 = vrsqrt.pop %v3789
        %v3822 = vrsqrt.pop %v3790
        %v3823 = vrsqrt.pop %v3791
        %v3824 = vrsqrt.pop %v3792
        %v3825 = vrsqrt.pop %v3793
        %v3826 = vrsqrt.pop %v3794
        %v3827 = vrsqrt.pop %v3795
        %v3828 = vrsqrt.pop %v3796
        %v3829 = vrsqrt.pop %v3797
        %v3830 = vrsqrt.pop %v3798
        %v3831 = vrsqrt.pop %v3799
        %v3832 = vrsqrt.pop %v3800
        %v3833 = vrsqrt.pop %v3801
        %v3834 = vrsqrt.pop %v3802
        %v3835 = vrsqrt.pop %v3803
        %v3836 = vrsqrt.pop %v3804
        %v3837 = vrsqrt.pop %v3805
        %v3838 = vrsqrt.pop %v3806
        %v3839 = vrsqrt.pop %v3807
        %v3840 = vrsqrt.pop %v3808
        %v3841 = vrsqrt.pop %v3809
        %v3842 = vrsqrt.pop %v3810
        %v3843 = vrsqrt.pop %v3811
        %v3844 = vrsqrt.pop %v3812
        %v3845 = vrsqrt.pop %v3813
        %v3846 = vrsqrt.pop %v3814
        %v3847 = vrsqrt.pop %v3815
        %v3848 = vrsqrt.pop %v3816
        %v3849 = vrsqrt.pop %v3817
        %v3850 = vmul.f32 %v3495, %v3818
        %v3851 = vmul.f32 %v3498, %v3819
        %v3852 = vmul.f32 %v3501, %v3820
        %v3853 = vmul.f32 %v3504, %v3821
        %v3854 = vmul.f32 %v3507, %v3822
        %v3855 = vmul.f32 %v3510, %v3823
        %v3856 = vmul.f32 %v3513, %v3824
        %v3857 = vmul.f32 %v3516, %v3825
        %v3858 = vmul.f32 %v3519, %v3826
        %v3859 = vmul.f32 %v3522, %v3827
        %v3860 = vmul.f32 %v3525, %v3828
        %v3861 = vmul.f32 %v3528, %v3829
        %v3862 = vmul.f32 %v3531, %v3830
        %v3863 = vmul.f32 %v3534, %v3831
        %v3864 = vmul.f32 %v3537, %v3832
        %v3865 = vmul.f32 %v3540, %v3833
        %v3866 = vmul.f32 %v3543, %v3834
        %v3867 = vmul.f32 %v3546, %v3835
        %v3868 = vmul.f32 %v3549, %v3836
        %v3869 = vmul.f32 %v3552, %v3837
        %v3870 = vmul.f32 %v3555, %v3838
        %v3871 = vmul.f32 %v3558, %v3839
        %v3872 = vmul.f32 %v3561, %v3840
        %v3873 = vmul.f32 %v3564, %v3841
        %v3874 = vmul.f32 %v3567, %v3842
        %v3875 = vmul.f32 %v3570, %v3843
        %v3876 = vmul.f32 %v3573, %v3844
        %v3877 = vmul.f32 %v3576, %v3845
        %v3878 = vmul.f32 %v3579, %v3846
        %v3879 = vmul.f32 %v3582, %v3847
        %v3880 = vmul.f32 %v3585, %v3848
        %v3881 = vmul.f32 %v3588, %v3849
        %v3883 = vsel %vm2574, %v3850, 0
        %v3886 = vsel %vm2574, %v3851, 0
        %v3889 = vsel %vm2574, %v3852, 0
        %v3892 = vsel %vm2574, %v3853, 0
        %v3895 = vsel %vm2574, %v3854, 0
        %v3898 = vsel %vm2574, %v3855, 0
        %v3901 = vsel %vm2574, %v3856, 0
        %v3904 = vsel %vm2574, %v3857, 0
        %v3907 = vsel %vm2574, %v3858, 0
        %v3910 = vsel %vm2574, %v3859, 0
        %v3913 = vsel %vm2574, %v3860, 0
        %v3916 = vsel %vm2574, %v3861, 0
        %v3919 = vsel %vm2574, %v3862, 0
        %v3922 = vsel %vm2574, %v3863, 0
        %v3925 = vsel %vm2574, %v3864, 0
        %v3928 = vsel %vm2574, %v3865, 0
        %v3931 = vsel %vm2574, %v3866, 0
        %v3934 = vsel %vm2574, %v3867, 0
        %v3937 = vsel %vm2574, %v3868, 0
        %v3940 = vsel %vm2574, %v3869, 0
        %v3943 = vsel %vm2574, %v3870, 0
        %v3946 = vsel %vm2574, %v3871, 0
        %v3949 = vsel %vm2574, %v3872, 0
        %v3952 = vsel %vm2574, %v3873, 0
        %v3955 = vsel %vm2574, %v3874, 0
        %v3958 = vsel %vm2574, %v3875, 0
        %v3961 = vsel %vm2574, %v3876, 0
        %v3964 = vsel %vm2574, %v3877, 0
        %v3967 = vsel %vm2574, %v3878, 0
        %v3970 = vsel %vm2574, %v3879, 0
        %v3973 = vsel %vm2574, %v3880, 0
        %v3976 = vsel %vm2574, %v3881, 0
        %3978 = vmatprep.subr.mxu0 0.0
        %3979 = vmatpush1.xpose.msra.mxu0 %v3928
        %3980 = vmatprep.subr.mxu0 0.0
        %3981 = vmatpush1.xpose.msra.mxu0 %v3925
        %3982 = vmatprep.subr.mxu0 0.0
        %3983 = vmatpush1.xpose.msra.mxu0 %v3922
        %3984 = vmatprep.subr.mxu0 0.0
        %3985 = vmatpush1.xpose.msra.mxu0 %v3919
        %3986 = vmatprep.subr.mxu0 0.0
        %3987 = vmatpush1.xpose.msra.mxu0 %v3916
        %3988 = vmatprep.subr.mxu0 0.0
        %3989 = vmatpush1.xpose.msra.mxu0 %v3913
        %3990 = vmatprep.subr.mxu0 0.0
        %3991 = vmatpush1.xpose.msra.mxu0 %v3910
        %3992 = vmatprep.subr.mxu0 0.0
        %3993 = vmatpush1.xpose.msra.mxu0 %v3907
        %3994 = vmatprep.subr.mxu0 0.0
        %3995 = vmatpush1.xpose.msra.mxu0 %v3904
        %3996 = vmatprep.subr.mxu0 0.0
        %3997 = vmatpush1.xpose.msra.mxu0 %v3901
        %3998 = vmatprep.subr.mxu0 0.0
        %3999 = vmatpush1.xpose.msra.mxu0 %v3898
        %4000 = vmatprep.subr.mxu0 0.0
        %4001 = vmatpush1.xpose.msra.mxu0 %v3895
        %4002 = vmatprep.subr.mxu0 0.0
        %4003 = vmatpush1.xpose.msra.mxu0 %v3892
        %4004 = vmatprep.subr.mxu0 0.0
        %4005 = vmatpush1.xpose.msra.mxu0 %v3889
        %4006 = vmatprep.subr.mxu0 0.0
        %4007 = vmatpush1.xpose.msra.mxu0 %v3886
        %4008 = vmatprep.subr.mxu0 0.0
        %4009 = vmatpush1.xpose.msra.mxu0 %v3883
        %4010 = vmatprep.subr.mxu0 0.0
        %4011 = vmatpush2.xpose.msra.mxu0 %v3976
        %4012 = vmatprep.subr.mxu0 0.0
        %4013 = vmatpush2.xpose.msra.mxu0 %v3973
        %4014 = vmatprep.subr.mxu0 0.0
        %4015 = vmatpush2.xpose.msra.mxu0 %v3970
        %4016 = vmatprep.subr.mxu0 0.0
        %4017 = vmatpush2.xpose.msra.mxu0 %v3967
        %4018 = vmatprep.subr.mxu0 0.0
        %4019 = vmatpush2.xpose.msra.mxu0 %v3964
        %4020 = vmatprep.subr.mxu0 0.0
        %4021 = vmatpush2.xpose.msra.mxu0 %v3961
        %4022 = vmatprep.subr.mxu0 0.0
        %4023 = vmatpush2.xpose.msra.mxu0 %v3958
        %4024 = vmatprep.subr.mxu0 0.0
        %4025 = vmatpush2.xpose.msra.mxu0 %v3955
        %4026 = vmatprep.subr.mxu0 0.0
        %4027 = vmatpush2.xpose.msra.mxu0 %v3952
        %4028 = vmatprep.subr.mxu0 0.0
        %4029 = vmatpush2.xpose.msra.mxu0 %v3949
        %4030 = vmatprep.subr.mxu0 0.0
        %4031 = vmatpush2.xpose.msra.mxu0 %v3946
        %4032 = vmatprep.subr.mxu0 0.0
        %4033 = vmatpush2.xpose.msra.mxu0 %v3943
        %4034 = vmatprep.subr.mxu0 0.0
        %4035 = vmatpush2.xpose.msra.mxu0 %v3940
        %4036 = vmatprep.subr.mxu0 0.0
        %4037 = vmatpush2.xpose.msra.mxu0 %v3937
        %4038 = vmatprep.subr.mxu0 0.0
        %4039 = vmatpush2.xpose.msra.mxu0 %v3934
        %4040 = vmatprep.subr.mxu0 0.0
        %4041 = vmatpush2.xpose.msra.mxu0 %v3931
        %4042 = vmatprep.mubr.f32.mxu0 0.0
        %4043 = vmatmul.mubr.f32.gmra.mxu0 %v3883
        %v4044 = vpop.f32.mrf.mxu0
        %v4045 = vadd.f32 0.0, %v4044
        %v4046 = vpop.f32.mrf.mxu0
        %v4047 = vadd.f32 0.0, %v4046
        %4048 = vmatprep.mubr.f32.mxu0 0.0
        %4049 = vmatmul.mubr.f32.gmra.mxu0 %v3886
        %v4050 = vpop.f32.mrf.mxu0
        %v4051 = vadd.f32 0.0, %v4050
        %v4052 = vpop.f32.mrf.mxu0
        %v4053 = vadd.f32 0.0, %v4052
        %4054 = vmatprep.mubr.f32.mxu0 0.0
        %4055 = vmatmul.mubr.f32.gmra.mxu0 %v3889
        %v4056 = vpop.f32.mrf.mxu0
        %v4057 = vadd.f32 0.0, %v4056
        %v4058 = vpop.f32.mrf.mxu0
        %v4059 = vadd.f32 0.0, %v4058
        %4060 = vmatprep.mubr.f32.mxu0 0.0
        %4061 = vmatmul.mubr.f32.gmra.mxu0 %v3892
        %v4062 = vpop.f32.mrf.mxu0
        %v4063 = vadd.f32 0.0, %v4062
        %v4064 = vpop.f32.mrf.mxu0
        %v4065 = vadd.f32 0.0, %v4064
        %4066 = vmatprep.mubr.f32.mxu0 0.0
        %4067 = vmatmul.mubr.f32.gmra.mxu0 %v3895
        %v4068 = vpop.f32.mrf.mxu0
        %v4069 = vadd.f32 0.0, %v4068
        %v4070 = vpop.f32.mrf.mxu0
        %v4071 = vadd.f32 0.0, %v4070
        %4072 = vmatprep.mubr.f32.mxu0 0.0
        %4073 = vmatmul.mubr.f32.gmra.mxu0 %v3898
        %v4074 = vpop.f32.mrf.mxu0
        %v4075 = vadd.f32 0.0, %v4074
        %v4076 = vpop.f32.mrf.mxu0
        %v4077 = vadd.f32 0.0, %v4076
        %4078 = vmatprep.mubr.f32.mxu0 0.0
        %4079 = vmatmul.mubr.f32.gmra.mxu0 %v3901
        %v4080 = vpop.f32.mrf.mxu0
        %v4081 = vadd.f32 0.0, %v4080
        %v4082 = vpop.f32.mrf.mxu0
        %v4083 = vadd.f32 0.0, %v4082
        %4084 = vmatprep.mubr.f32.mxu0 0.0
        %4085 = vmatmul.mubr.f32.gmra.mxu0 %v3904
        %v4086 = vpop.f32.mrf.mxu0
        %v4087 = vadd.f32 0.0, %v4086
        %v4088 = vpop.f32.mrf.mxu0
        %v4089 = vadd.f32 0.0, %v4088
        %4090 = vmatprep.mubr.f32.mxu0 0.0
        %4091 = vmatmul.mubr.f32.gmra.mxu0 %v3907
        %v4092 = vpop.f32.mrf.mxu0
        %v4093 = vadd.f32 0.0, %v4092
        %v4094 = vpop.f32.mrf.mxu0
        %v4095 = vadd.f32 0.0, %v4094
        %4096 = vmatprep.mubr.f32.mxu0 0.0
        %4097 = vmatmul.mubr.f32.gmra.mxu0 %v3910
        %v4098 = vpop.f32.mrf.mxu0
        %v4099 = vadd.f32 0.0, %v4098
        %v4100 = vpop.f32.mrf.mxu0
        %v4101 = vadd.f32 0.0, %v4100
        %4102 = vmatprep.mubr.f32.mxu0 0.0
        %4103 = vmatmul.mubr.f32.gmra.mxu0 %v3913
        %v4104 = vpop.f32.mrf.mxu0
        %v4105 = vadd.f32 0.0, %v4104
        %v4106 = vpop.f32.mrf.mxu0
        %v4107 = vadd.f32 0.0, %v4106
        %4108 = vmatprep.mubr.f32.mxu0 0.0
        %4109 = vmatmul.mubr.f32.gmra.mxu0 %v3916
        %v4110 = vpop.f32.mrf.mxu0
        %v4111 = vadd.f32 0.0, %v4110
        %v4112 = vpop.f32.mrf.mxu0
        %v4113 = vadd.f32 0.0, %v4112
        %4114 = vmatprep.mubr.f32.mxu0 0.0
        %4115 = vmatmul.mubr.f32.gmra.mxu0 %v3919
        %v4116 = vpop.f32.mrf.mxu0
        %v4117 = vadd.f32 0.0, %v4116
        %v4118 = vpop.f32.mrf.mxu0
        %v4119 = vadd.f32 0.0, %v4118
        %4120 = vmatprep.mubr.f32.mxu0 0.0
        %4121 = vmatmul.mubr.f32.gmra.mxu0 %v3922
        %v4122 = vpop.f32.mrf.mxu0
        %v4123 = vadd.f32 0.0, %v4122
        %v4124 = vpop.f32.mrf.mxu0
        %v4125 = vadd.f32 0.0, %v4124
        %4126 = vmatprep.mubr.f32.mxu0 0.0
        %4127 = vmatmul.mubr.f32.gmra.mxu0 %v3925
        %v4128 = vpop.f32.mrf.mxu0
        %v4129 = vadd.f32 0.0, %v4128
        %v4130 = vpop.f32.mrf.mxu0
        %v4131 = vadd.f32 0.0, %v4130
        %4132 = vmatprep.mubr.f32.mxu0 0.0
        %4133 = vmatmul.mubr.f32.gmra.mxu0 %v3928
        %v4134 = vpop.f32.mrf.mxu0
        %v4135 = vadd.f32 0.0, %v4134
        %v4136 = vpop.f32.mrf.mxu0
        %v4137 = vadd.f32 0.0, %v4136
        %4138 = vmatprep.mubr.f32.mxu0 0.0
        %4139 = vmatmul.mubr.f32.gmra.mxu0 %v3931
        %v4140 = vpop.f32.mrf.mxu0
        %v4141 = vadd.f32 0.0, %v4140
        %v4142 = vpop.f32.mrf.mxu0
        %v4143 = vadd.f32 0.0, %v4142
        %4144 = vmatprep.mubr.f32.mxu0 0.0
        %4145 = vmatmul.mubr.f32.gmra.mxu0 %v3934
        %v4146 = vpop.f32.mrf.mxu0
        %v4147 = vadd.f32 0.0, %v4146
        %v4148 = vpop.f32.mrf.mxu0
        %v4149 = vadd.f32 0.0, %v4148
        %4150 = vmatprep.mubr.f32.mxu0 0.0
        %4151 = vmatmul.mubr.f32.gmra.mxu0 %v3937
        %v4152 = vpop.f32.mrf.mxu0
        %v4153 = vadd.f32 0.0, %v4152
        %v4154 = vpop.f32.mrf.mxu0
        %v4155 = vadd.f32 0.0, %v4154
        %4156 = vmatprep.mubr.f32.mxu0 0.0
        %4157 = vmatmul.mubr.f32.gmra.mxu0 %v3940
        %v4158 = vpop.f32.mrf.mxu0
        %v4159 = vadd.f32 0.0, %v4158
        %v4160 = vpop.f32.mrf.mxu0
        %v4161 = vadd.f32 0.0, %v4160
        %4162 = vmatprep.mubr.f32.mxu0 0.0
        %4163 = vmatmul.mubr.f32.gmra.mxu0 %v3943
        %v4164 = vpop.f32.mrf.mxu0
        %v4165 = vadd.f32 0.0, %v4164
        %v4166 = vpop.f32.mrf.mxu0
        %v4167 = vadd.f32 0.0, %v4166
        %4168 = vmatprep.mubr.f32.mxu0 0.0
        %4169 = vmatmul.mubr.f32.gmra.mxu0 %v3946
        %v4170 = vpop.f32.mrf.mxu0
        %v4171 = vadd.f32 0.0, %v4170
        %v4172 = vpop.f32.mrf.mxu0
        %v4173 = vadd.f32 0.0, %v4172
        %4174 = vmatprep.mubr.f32.mxu0 0.0
        %4175 = vmatmul.mubr.f32.gmra.mxu0 %v3949
        %v4176 = vpop.f32.mrf.mxu0
        %v4177 = vadd.f32 0.0, %v4176
        %v4178 = vpop.f32.mrf.mxu0
        %v4179 = vadd.f32 0.0, %v4178
        %4180 = vmatprep.mubr.f32.mxu0 0.0
        %4181 = vmatmul.mubr.f32.gmra.mxu0 %v3952
        %v4182 = vpop.f32.mrf.mxu0
        %v4183 = vadd.f32 0.0, %v4182
        %v4184 = vpop.f32.mrf.mxu0
        %v4185 = vadd.f32 0.0, %v4184
        %4186 = vmatprep.mubr.f32.mxu0 0.0
        %4187 = vmatmul.mubr.f32.gmra.mxu0 %v3955
        %v4188 = vpop.f32.mrf.mxu0
        %v4189 = vadd.f32 0.0, %v4188
        %v4190 = vpop.f32.mrf.mxu0
        %v4191 = vadd.f32 0.0, %v4190
        %4192 = vmatprep.mubr.f32.mxu0 0.0
        %4193 = vmatmul.mubr.f32.gmra.mxu0 %v3958
        %v4194 = vpop.f32.mrf.mxu0
        %v4195 = vadd.f32 0.0, %v4194
        %v4196 = vpop.f32.mrf.mxu0
        %v4197 = vadd.f32 0.0, %v4196
        %4198 = vmatprep.mubr.f32.mxu0 0.0
        %4199 = vmatmul.mubr.f32.gmra.mxu0 %v3961
        %v4200 = vpop.f32.mrf.mxu0
        %v4201 = vadd.f32 0.0, %v4200
        %v4202 = vpop.f32.mrf.mxu0
        %v4203 = vadd.f32 0.0, %v4202
        %4204 = vmatprep.mubr.f32.mxu0 0.0
        %4205 = vmatmul.mubr.f32.gmra.mxu0 %v3964
        %v4206 = vpop.f32.mrf.mxu0
        %v4207 = vadd.f32 0.0, %v4206
        %v4208 = vpop.f32.mrf.mxu0
        %v4209 = vadd.f32 0.0, %v4208
        %4210 = vmatprep.mubr.f32.mxu0 0.0
        %4211 = vmatmul.mubr.f32.gmra.mxu0 %v3967
        %v4212 = vpop.f32.mrf.mxu0
        %v4213 = vadd.f32 0.0, %v4212
        %v4214 = vpop.f32.mrf.mxu0
        %v4215 = vadd.f32 0.0, %v4214
        %4216 = vmatprep.mubr.f32.mxu0 0.0
        %4217 = vmatmul.mubr.f32.gmra.mxu0 %v3970
        %v4218 = vpop.f32.mrf.mxu0
        %v4219 = vadd.f32 0.0, %v4218
        %v4220 = vpop.f32.mrf.mxu0
        %v4221 = vadd.f32 0.0, %v4220
        %4222 = vmatprep.mubr.f32.mxu0 0.0
        %4223 = vmatmul.mubr.f32.gmra.mxu0 %v3973
        %v4224 = vpop.f32.mrf.mxu0
        %v4225 = vadd.f32 0.0, %v4224
        %v4226 = vpop.f32.mrf.mxu0
        %v4227 = vadd.f32 0.0, %v4226
        %4228 = vmatprep.mubr.f32.mxu0 0.0
        %4229 = vmatmul.mubr.f32.gmra.mxu0 %v3976
        %v4230 = vpop.f32.mrf.mxu0
        %v4231 = vadd.f32 0.0, %v4230
        %v4232 = vpop.f32.mrf.mxu0
        %v4233 = vadd.f32 0.0, %v4232
        %4234 = vdwg.mxu0
        %v4235 = vld [vmem:[#allocation3] sm:$0xff]
        %v4236 = vld [vmem:[#allocation3 + $0x8] sm:$0xff]
        %v4237 = vld [vmem:[#allocation3 + $0x10] sm:$0xff]
        %v4238 = vld [vmem:[#allocation3 + $0x18] sm:$0xff]
        %v4239 = vld [vmem:[#allocation3 + $0x20] sm:$0xff]
        %v4240 = vld [vmem:[#allocation3 + $0x28] sm:$0xff]
        %v4241 = vld [vmem:[#allocation3 + $0x30] sm:$0xff]
        %v4242 = vld [vmem:[#allocation3 + $0x38] sm:$0xff]
        %v4243 = vld [vmem:[#allocation3 + $0x40] sm:$0xff]
        %v4244 = vld [vmem:[#allocation3 + $0x48] sm:$0xff]
        %v4245 = vld [vmem:[#allocation3 + $0x50] sm:$0xff]
        %v4246 = vld [vmem:[#allocation3 + $0x58] sm:$0xff]
        %v4247 = vld [vmem:[#allocation3 + $0x60] sm:$0xff]
        %v4248 = vld [vmem:[#allocation3 + $0x68] sm:$0xff]
        %v4249 = vld [vmem:[#allocation3 + $0x70] sm:$0xff]
        %v4250 = vld [vmem:[#allocation3 + $0x78] sm:$0xff]
        %v4251 = vld [vmem:[#allocation3 + $0x80] sm:$0xff]
        %v4252 = vld [vmem:[#allocation3 + $0x88] sm:$0xff]
        %v4253 = vld [vmem:[#allocation3 + $0x90] sm:$0xff]
        %v4254 = vld [vmem:[#allocation3 + $0x98] sm:$0xff]
        %v4255 = vld [vmem:[#allocation3 + $0xa0] sm:$0xff]
        %v4256 = vld [vmem:[#allocation3 + $0xa8] sm:$0xff]
        %v4257 = vld [vmem:[#allocation3 + $0xb0] sm:$0xff]
        %v4258 = vld [vmem:[#allocation3 + $0xb8] sm:$0xff]
        %v4259 = vld [vmem:[#allocation3 + $0xc0] sm:$0xff]
        %v4260 = vld [vmem:[#allocation3 + $0xc8] sm:$0xff]
        %v4261 = vld [vmem:[#allocation3 + $0xd0] sm:$0xff]
        %v4262 = vld [vmem:[#allocation3 + $0xd8] sm:$0xff]
        %v4263 = vld [vmem:[#allocation3 + $0xe0] sm:$0xff]
        %v4264 = vld [vmem:[#allocation3 + $0xe8] sm:$0xff]
        %v4265 = vld [vmem:[#allocation3 + $0xf0] sm:$0xff]
        %v4266 = vld [vmem:[#allocation3 + $0xf8] sm:$0xff]
        %v4267 = vld [vmem:[#allocation3 + $0x100] sm:$0xff]
        %v4268 = vld [vmem:[#allocation3 + $0x108] sm:$0xff]
        %v4269 = vld [vmem:[#allocation3 + $0x110] sm:$0xff]
        %v4270 = vld [vmem:[#allocation3 + $0x118] sm:$0xff]
        %v4271 = vld [vmem:[#allocation3 + $0x120] sm:$0xff]
        %v4272 = vld [vmem:[#allocation3 + $0x128] sm:$0xff]
        %v4273 = vld [vmem:[#allocation3 + $0x130] sm:$0xff]
        %v4274 = vld [vmem:[#allocation3 + $0x138] sm:$0xff]
        %v4275 = vld [vmem:[#allocation3 + $0x140] sm:$0xff]
        %v4276 = vld [vmem:[#allocation3 + $0x148] sm:$0xff]
        %v4277 = vld [vmem:[#allocation3 + $0x150] sm:$0xff]
        %v4278 = vld [vmem:[#allocation3 + $0x158] sm:$0xff]
        %v4279 = vld [vmem:[#allocation3 + $0x160] sm:$0xff]
        %v4280 = vld [vmem:[#allocation3 + $0x168] sm:$0xff]
        %v4281 = vld [vmem:[#allocation3 + $0x170] sm:$0xff]
        %v4282 = vld [vmem:[#allocation3 + $0x178] sm:$0xff]
        %v4283 = vld [vmem:[#allocation3 + $0x180] sm:$0xff]
        %v4284 = vld [vmem:[#allocation3 + $0x188] sm:$0xff]
        %v4285 = vld [vmem:[#allocation3 + $0x190] sm:$0xff]
        %v4286 = vld [vmem:[#allocation3 + $0x198] sm:$0xff]
        %v4287 = vld [vmem:[#allocation3 + $0x1a0] sm:$0xff]
        %v4288 = vld [vmem:[#allocation3 + $0x1a8] sm:$0xff]
        %v4289 = vld [vmem:[#allocation3 + $0x1b0] sm:$0xff]
        %v4290 = vld [vmem:[#allocation3 + $0x1b8] sm:$0xff]
        %v4291 = vld [vmem:[#allocation3 + $0x1c0] sm:$0xff]
        %v4292 = vld [vmem:[#allocation3 + $0x1c8] sm:$0xff]
        %v4293 = vld [vmem:[#allocation3 + $0x1d0] sm:$0xff]
        %v4294 = vld [vmem:[#allocation3 + $0x1d8] sm:$0xff]
        %v4295 = vld [vmem:[#allocation3 + $0x1e0] sm:$0xff]
        %v4296 = vld [vmem:[#allocation3 + $0x1e8] sm:$0xff]
        %v4297 = vld [vmem:[#allocation3 + $0x1f0] sm:$0xff]
        %v4298 = vld [vmem:[#allocation3 + $0x1f8] sm:$0xff]
        %v4299 = vadd.f32 %v4235, %v4045
        %v4300 = vadd.f32 %v4236, %v4047
        %v4301 = vadd.f32 %v4237, %v4051
        %v4302 = vadd.f32 %v4238, %v4053
        %v4303 = vadd.f32 %v4239, %v4057
        %v4304 = vadd.f32 %v4240, %v4059
        %v4305 = vadd.f32 %v4241, %v4063
        %v4306 = vadd.f32 %v4242, %v4065
        %v4307 = vadd.f32 %v4243, %v4069
        %v4308 = vadd.f32 %v4244, %v4071
        %v4309 = vadd.f32 %v4245, %v4075
        %v4310 = vadd.f32 %v4246, %v4077
        %v4311 = vadd.f32 %v4247, %v4081
        %v4312 = vadd.f32 %v4248, %v4083
        %v4313 = vadd.f32 %v4249, %v4087
        %v4314 = vadd.f32 %v4250, %v4089
        %v4315 = vadd.f32 %v4251, %v4093
        %v4316 = vadd.f32 %v4252, %v4095
        %v4317 = vadd.f32 %v4253, %v4099
        %v4318 = vadd.f32 %v4254, %v4101
        %v4319 = vadd.f32 %v4255, %v4105
        %v4320 = vadd.f32 %v4256, %v4107
        %v4321 = vadd.f32 %v4257, %v4111
        %v4322 = vadd.f32 %v4258, %v4113
        %v4323 = vadd.f32 %v4259, %v4117
        %v4324 = vadd.f32 %v4260, %v4119
        %v4325 = vadd.f32 %v4261, %v4123
        %v4326 = vadd.f32 %v4262, %v4125
        %v4327 = vadd.f32 %v4263, %v4129
        %v4328 = vadd.f32 %v4264, %v4131
        %v4329 = vadd.f32 %v4265, %v4135
        %v4330 = vadd.f32 %v4266, %v4137
        %v4331 = vadd.f32 %v4267, %v4141
        %v4332 = vadd.f32 %v4268, %v4143
        %v4333 = vadd.f32 %v4269, %v4147
        %v4334 = vadd.f32 %v4270, %v4149
        %v4335 = vadd.f32 %v4271, %v4153
        %v4336 = vadd.f32 %v4272, %v4155
        %v4337 = vadd.f32 %v4273, %v4159
        %v4338 = vadd.f32 %v4274, %v4161
        %v4339 = vadd.f32 %v4275, %v4165
        %v4340 = vadd.f32 %v4276, %v4167
        %v4341 = vadd.f32 %v4277, %v4171
        %v4342 = vadd.f32 %v4278, %v4173
        %v4343 = vadd.f32 %v4279, %v4177
        %v4344 = vadd.f32 %v4280, %v4179
        %v4345 = vadd.f32 %v4281, %v4183
        %v4346 = vadd.f32 %v4282, %v4185
        %v4347 = vadd.f32 %v4283, %v4189
        %v4348 = vadd.f32 %v4284, %v4191
        %v4349 = vadd.f32 %v4285, %v4195
        %v4350 = vadd.f32 %v4286, %v4197
        %v4351 = vadd.f32 %v4287, %v4201
        %v4352 = vadd.f32 %v4288, %v4203
        %v4353 = vadd.f32 %v4289, %v4207
        %v4354 = vadd.f32 %v4290, %v4209
        %v4355 = vadd.f32 %v4291, %v4213
        %v4356 = vadd.f32 %v4292, %v4215
        %v4357 = vadd.f32 %v4293, %v4219
        %v4358 = vadd.f32 %v4294, %v4221
        %v4359 = vadd.f32 %v4295, %v4225
        %v4360 = vadd.f32 %v4296, %v4227
        %v4361 = vadd.f32 %v4297, %v4231
        %v4362 = vadd.f32 %v4298, %v4233
        %4363 = vst [vmem:[#allocation3] sm:$0xff] %v4299
        %4364 = vst [vmem:[#allocation3 + $0x8] sm:$0xff] %v4300
        %4365 = vst [vmem:[#allocation3 + $0x10] sm:$0xff] %v4301
        %4366 = vst [vmem:[#allocation3 + $0x18] sm:$0xff] %v4302
        %4367 = vst [vmem:[#allocation3 + $0x20] sm:$0xff] %v4303
        %4368 = vst [vmem:[#allocation3 + $0x28] sm:$0xff] %v4304
        %4369 = vst [vmem:[#allocation3 + $0x30] sm:$0xff] %v4305
        %4370 = vst [vmem:[#allocation3 + $0x38] sm:$0xff] %v4306
        %4371 = vst [vmem:[#allocation3 + $0x40] sm:$0xff] %v4307
        %4372 = vst [vmem:[#allocation3 + $0x48] sm:$0xff] %v4308
        %4373 = vst [vmem:[#allocation3 + $0x50] sm:$0xff] %v4309
        %4374 = vst [vmem:[#allocation3 + $0x58] sm:$0xff] %v4310
        %4375 = vst [vmem:[#allocation3 + $0x60] sm:$0xff] %v4311
        %4376 = vst [vmem:[#allocation3 + $0x68] sm:$0xff] %v4312
        %4377 = vst [vmem:[#allocation3 + $0x70] sm:$0xff] %v4313
        %4378 = vst [vmem:[#allocation3 + $0x78] sm:$0xff] %v4314
        %4379 = vst [vmem:[#allocation3 + $0x80] sm:$0xff] %v4315
        %4380 = vst [vmem:[#allocation3 + $0x88] sm:$0xff] %v4316
        %4381 = vst [vmem:[#allocation3 + $0x90] sm:$0xff] %v4317
        %4382 = vst [vmem:[#allocation3 + $0x98] sm:$0xff] %v4318
        %4383 = vst [vmem:[#allocation3 + $0xa0] sm:$0xff] %v4319
        %4384 = vst [vmem:[#allocation3 + $0xa8] sm:$0xff] %v4320
        %4385 = vst [vmem:[#allocation3 + $0xb0] sm:$0xff] %v4321
        %4386 = vst [vmem:[#allocation3 + $0xb8] sm:$0xff] %v4322
        %4387 = vst [vmem:[#allocation3 + $0xc0] sm:$0xff] %v4323
        %4388 = vst [vmem:[#allocation3 + $0xc8] sm:$0xff] %v4324
        %4389 = vst [vmem:[#allocation3 + $0xd0] sm:$0xff] %v4325
        %4390 = vst [vmem:[#allocation3 + $0xd8] sm:$0xff] %v4326
        %4391 = vst [vmem:[#allocation3 + $0xe0] sm:$0xff] %v4327
        %4392 = vst [vmem:[#allocation3 + $0xe8] sm:$0xff] %v4328
        %4393 = vst [vmem:[#allocation3 + $0xf0] sm:$0xff] %v4329
        %4394 = vst [vmem:[#allocation3 + $0xf8] sm:$0xff] %v4330
        %4395 = vst [vmem:[#allocation3 + $0x100] sm:$0xff] %v4331
        %4396 = vst [vmem:[#allocation3 + $0x108] sm:$0xff] %v4332
        %4397 = vst [vmem:[#allocation3 + $0x110] sm:$0xff] %v4333
        %4398 = vst [vmem:[#allocation3 + $0x118] sm:$0xff] %v4334
        %4399 = vst [vmem:[#allocation3 + $0x120] sm:$0xff] %v4335
        %4400 = vst [vmem:[#allocation3 + $0x128] sm:$0xff] %v4336
        %4401 = vst [vmem:[#allocation3 + $0x130] sm:$0xff] %v4337
        %4402 = vst [vmem:[#allocation3 + $0x138] sm:$0xff] %v4338
        %4403 = vst [vmem:[#allocation3 + $0x140] sm:$0xff] %v4339
        %4404 = vst [vmem:[#allocation3 + $0x148] sm:$0xff] %v4340
        %4405 = vst [vmem:[#allocation3 + $0x150] sm:$0xff] %v4341
        %4406 = vst [vmem:[#allocation3 + $0x158] sm:$0xff] %v4342
        %4407 = vst [vmem:[#allocation3 + $0x160] sm:$0xff] %v4343
        %4408 = vst [vmem:[#allocation3 + $0x168] sm:$0xff] %v4344
        %4409 = vst [vmem:[#allocation3 + $0x170] sm:$0xff] %v4345
        %4410 = vst [vmem:[#allocation3 + $0x178] sm:$0xff] %v4346
        %4411 = vst [vmem:[#allocation3 + $0x180] sm:$0xff] %v4347
        %4412 = vst [vmem:[#allocation3 + $0x188] sm:$0xff] %v4348
        %4413 = vst [vmem:[#allocation3 + $0x190] sm:$0xff] %v4349
        %4414 = vst [vmem:[#allocation3 + $0x198] sm:$0xff] %v4350
        %4415 = vst [vmem:[#allocation3 + $0x1a0] sm:$0xff] %v4351
        %4416 = vst [vmem:[#allocation3 + $0x1a8] sm:$0xff] %v4352
        %4417 = vst [vmem:[#allocation3 + $0x1b0] sm:$0xff] %v4353
        %4418 = vst [vmem:[#allocation3 + $0x1b8] sm:$0xff] %v4354
        %4419 = vst [vmem:[#allocation3 + $0x1c0] sm:$0xff] %v4355
        %4420 = vst [vmem:[#allocation3 + $0x1c8] sm:$0xff] %v4356
        %4421 = vst [vmem:[#allocation3 + $0x1d0] sm:$0xff] %v4357
        %4422 = vst [vmem:[#allocation3 + $0x1d8] sm:$0xff] %v4358
        %4423 = vst [vmem:[#allocation3 + $0x1e0] sm:$0xff] %v4359
        %4424 = vst [vmem:[#allocation3 + $0x1e8] sm:$0xff] %v4360
        %4425 = vst [vmem:[#allocation3 + $0x1f0] sm:$0xff] %v4361
        %4426 = vst [vmem:[#allocation3 + $0x1f8] sm:$0xff] %v4362
      $region60: #{temblock_forward.1} parent=55 // pred_fallthru
        _
      %s4427 = smul.u32 %s20, 64
      %s4428 = smul.addr %s4427, 4
      %s4429 = scalar_lea.vmem [#allocation2], %s4428
      %v4430 = vld [vmem:[%s4429] sm:$0xff]
      %v4431 = vld [vmem:[%s4429 + $0x8] sm:$0xff]
      %v4432 = vld [vmem:[%s4429 + $0x10] sm:$0xff]
      %v4433 = vld [vmem:[%s4429 + $0x18] sm:$0xff]
      %v4434 = vld [vmem:[%s4429 + $0x20] sm:$0xff]
      %v4435 = vld [vmem:[%s4429 + $0x28] sm:$0xff]
      %v4436 = vld [vmem:[%s4429 + $0x30] sm:$0xff]
      %v4437 = vld [vmem:[%s4429 + $0x38] sm:$0xff]
      %v4438 = vld [vmem:[%s4429 + $0x40] sm:$0xff]
      %v4439 = vld [vmem:[%s4429 + $0x48] sm:$0xff]
      %v4440 = vld [vmem:[%s4429 + $0x50] sm:$0xff]
      %v4441 = vld [vmem:[%s4429 + $0x58] sm:$0xff]
      %v4442 = vld [vmem:[%s4429 + $0x60] sm:$0xff]
      %v4443 = vld [vmem:[%s4429 + $0x68] sm:$0xff]
      %v4444 = vld [vmem:[%s4429 + $0x70] sm:$0xff]
      %v4445 = vld [vmem:[%s4429 + $0x78] sm:$0xff]
      %v4446 = vld [vmem:[%s4429 + $0x80] sm:$0xff]
      %v4447 = vld [vmem:[%s4429 + $0x88] sm:$0xff]
      %v4448 = vld [vmem:[%s4429 + $0x90] sm:$0xff]
      %v4449 = vld [vmem:[%s4429 + $0x98] sm:$0xff]
      %v4450 = vld [vmem:[%s4429 + $0xa0] sm:$0xff]
      %v4451 = vld [vmem:[%s4429 + $0xa8] sm:$0xff]
      %v4452 = vld [vmem:[%s4429 + $0xb0] sm:$0xff]
      %v4453 = vld [vmem:[%s4429 + $0xb8] sm:$0xff]
      %v4454 = vld [vmem:[%s4429 + $0xc0] sm:$0xff]
      %v4455 = vld [vmem:[%s4429 + $0xc8] sm:$0xff]
      %v4456 = vld [vmem:[%s4429 + $0xd0] sm:$0xff]
      %v4457 = vld [vmem:[%s4429 + $0xd8] sm:$0xff]
      %v4458 = vld [vmem:[%s4429 + $0xe0] sm:$0xff]
      %v4459 = vld [vmem:[%s4429 + $0xe8] sm:$0xff]
      %v4460 = vld [vmem:[%s4429 + $0xf0] sm:$0xff]
      %v4461 = vld [vmem:[%s4429 + $0xf8] sm:$0xff]
      %v4462 = vld [vmem:[%s7] sm:$0xff]
      %v4463 = vld [vmem:[%s7 + $0x8] sm:$0xff]
      %v4464 = vld [vmem:[%s7 + $0x10] sm:$0xff]
      %v4465 = vld [vmem:[%s7 + $0x18] sm:$0xff]
      %v4466 = vld [vmem:[%s7 + $0x20] sm:$0xff]
      %v4467 = vld [vmem:[%s7 + $0x28] sm:$0xff]
      %v4468 = vld [vmem:[%s7 + $0x30] sm:$0xff]
      %v4469 = vld [vmem:[%s7 + $0x38] sm:$0xff]
      %v4470 = vld [vmem:[%s7 + $0x40] sm:$0xff]
      %v4471 = vld [vmem:[%s7 + $0x48] sm:$0xff]
      %v4472 = vld [vmem:[%s7 + $0x50] sm:$0xff]
      %v4473 = vld [vmem:[%s7 + $0x58] sm:$0xff]
      %v4474 = vld [vmem:[%s7 + $0x60] sm:$0xff]
      %v4475 = vld [vmem:[%s7 + $0x68] sm:$0xff]
      %v4476 = vld [vmem:[%s7 + $0x70] sm:$0xff]
      %v4477 = vld [vmem:[%s7 + $0x78] sm:$0xff]
      %v4478 = vld [vmem:[%s7 + $0x80] sm:$0xff]
      %v4479 = vld [vmem:[%s7 + $0x88] sm:$0xff]
      %v4480 = vld [vmem:[%s7 + $0x90] sm:$0xff]
      %v4481 = vld [vmem:[%s7 + $0x98] sm:$0xff]
      %v4482 = vld [vmem:[%s7 + $0xa0] sm:$0xff]
      %v4483 = vld [vmem:[%s7 + $0xa8] sm:$0xff]
      %v4484 = vld [vmem:[%s7 + $0xb0] sm:$0xff]
      %v4485 = vld [vmem:[%s7 + $0xb8] sm:$0xff]
      %v4486 = vld [vmem:[%s7 + $0xc0] sm:$0xff]
      %v4487 = vld [vmem:[%s7 + $0xc8] sm:$0xff]
      %v4488 = vld [vmem:[%s7 + $0xd0] sm:$0xff]
      %v4489 = vld [vmem:[%s7 + $0xd8] sm:$0xff]
      %v4490 = vld [vmem:[%s7 + $0xe0] sm:$0xff]
      %v4491 = vld [vmem:[%s7 + $0xe8] sm:$0xff]
      %v4492 = vld [vmem:[%s7 + $0xf0] sm:$0xff]
      %v4493 = vld [vmem:[%s7 + $0xf8] sm:$0xff]
      %v4494 = vld [vmem:[%s8] sm:$0x3]
      %v4496 = vlaneseq
      %v4497 = vshrl.u32 %v4496, 7
      %v4498 = vsub.s32 0, %v4497
      %v4499 = vrot.slane %v4494, %v4498
      %v4500 = vlaneseq
      %v4501 = vshrl.u32 %v4500, 7
      %v4502 = vsub.s32 1, %v4501
      %v4503 = vrot.slane %v4494, %v4502
      %v4538 = vunpack.c.l.b16 %v4430
      %v4539 = vunpack.c.h.b16 %v4430
      %v4540 = vunpack.c.l.b16 %v4431
      %v4541 = vunpack.c.h.b16 %v4431
      %v4542 = vunpack.c.l.b16 %v4432
      %v4543 = vunpack.c.h.b16 %v4432
      %v4544 = vunpack.c.l.b16 %v4433
      %v4545 = vunpack.c.h.b16 %v4433
      %v4546 = vunpack.c.l.b16 %v4434
      %v4547 = vunpack.c.h.b16 %v4434
      %v4548 = vunpack.c.l.b16 %v4435
      %v4549 = vunpack.c.h.b16 %v4435
      %v4550 = vunpack.c.l.b16 %v4436
      %v4551 = vunpack.c.h.b16 %v4436
      %v4552 = vunpack.c.l.b16 %v4437
      %v4553 = vunpack.c.h.b16 %v4437
      %v4554 = vunpack.c.l.b16 %v4438
      %v4555 = vunpack.c.h.b16 %v4438
      %v4556 = vunpack.c.l.b16 %v4439
      %v4557 = vunpack.c.h.b16 %v4439
      %v4558 = vunpack.c.l.b16 %v4440
      %v4559 = vunpack.c.h.b16 %v4440
      %v4560 = vunpack.c.l.b16 %v4441
      %v4561 = vunpack.c.h.b16 %v4441
      %v4562 = vunpack.c.l.b16 %v4442
      %v4563 = vunpack.c.h.b16 %v4442
      %v4564 = vunpack.c.l.b16 %v4443
      %v4565 = vunpack.c.h.b16 %v4443
      %v4566 = vunpack.c.l.b16 %v4444
      %v4567 = vunpack.c.h.b16 %v4444
      %v4568 = vunpack.c.l.b16 %v4445
      %v4569 = vunpack.c.h.b16 %v4445
      %v4570 = vunpack.c.l.b16 %v4446
      %v4571 = vunpack.c.h.b16 %v4446
      %v4572 = vunpack.c.l.b16 %v4447
      %v4573 = vunpack.c.h.b16 %v4447
      %v4574 = vunpack.c.l.b16 %v4448
      %v4575 = vunpack.c.h.b16 %v4448
      %v4576 = vunpack.c.l.b16 %v4449
      %v4577 = vunpack.c.h.b16 %v4449
      %v4578 = vunpack.c.l.b16 %v4450
      %v4579 = vunpack.c.h.b16 %v4450
      %v4580 = vunpack.c.l.b16 %v4451
      %v4581 = vunpack.c.h.b16 %v4451
      %v4582 = vunpack.c.l.b16 %v4452
      %v4583 = vunpack.c.h.b16 %v4452
      %v4584 = vunpack.c.l.b16 %v4453
      %v4585 = vunpack.c.h.b16 %v4453
      %v4586 = vunpack.c.l.b16 %v4454
      %v4587 = vunpack.c.h.b16 %v4454
      %v4588 = vunpack.c.l.b16 %v4455
      %v4589 = vunpack.c.h.b16 %v4455
      %v4590 = vunpack.c.l.b16 %v4456
      %v4591 = vunpack.c.h.b16 %v4456
      %v4592 = vunpack.c.l.b16 %v4457
      %v4593 = vunpack.c.h.b16 %v4457
      %v4594 = vunpack.c.l.b16 %v4458
      %v4595 = vunpack.c.h.b16 %v4458
      %v4596 = vunpack.c.l.b16 %v4459
      %v4597 = vunpack.c.h.b16 %v4459
      %v4598 = vunpack.c.l.b16 %v4460
      %v4599 = vunpack.c.h.b16 %v4460
      %v4600 = vunpack.c.l.b16 %v4461
      %v4601 = vunpack.c.h.b16 %v4461
      %v4602 = vpack.c.b16 %v4540, %v4538
      %v4603 = vpack.c.b16 %v4541, %v4539
      %v4604 = vpack.c.b16 %v4544, %v4542
      %v4605 = vpack.c.b16 %v4545, %v4543
      %v4606 = vpack.c.b16 %v4548, %v4546
      %v4607 = vpack.c.b16 %v4549, %v4547
      %v4608 = vpack.c.b16 %v4552, %v4550
      %v4609 = vpack.c.b16 %v4553, %v4551
      %v4610 = vpack.c.b16 %v4556, %v4554
      %v4611 = vpack.c.b16 %v4557, %v4555
      %v4612 = vpack.c.b16 %v4560, %v4558
      %v4613 = vpack.c.b16 %v4561, %v4559
      %v4614 = vpack.c.b16 %v4564, %v4562
      %v4615 = vpack.c.b16 %v4565, %v4563
      %v4616 = vpack.c.b16 %v4568, %v4566
      %v4617 = vpack.c.b16 %v4569, %v4567
      %v4618 = vpack.c.b16 %v4572, %v4570
      %v4619 = vpack.c.b16 %v4573, %v4571
      %v4620 = vpack.c.b16 %v4576, %v4574
      %v4621 = vpack.c.b16 %v4577, %v4575
      %v4622 = vpack.c.b16 %v4580, %v4578
      %v4623 = vpack.c.b16 %v4581, %v4579
      %v4624 = vpack.c.b16 %v4584, %v4582
      %v4625 = vpack.c.b16 %v4585, %v4583
      %v4626 = vpack.c.b16 %v4588, %v4586
      %v4627 = vpack.c.b16 %v4589, %v4587
      %v4628 = vpack.c.b16 %v4592, %v4590
      %v4629 = vpack.c.b16 %v4593, %v4591
      %v4630 = vpack.c.b16 %v4596, %v4594
      %v4631 = vpack.c.b16 %v4597, %v4595
      %v4632 = vpack.c.b16 %v4600, %v4598
      %v4633 = vpack.c.b16 %v4601, %v4599
      %v4698 = vunpack.c.l.b16 %v4462
      %v4699 = vunpack.c.h.b16 %v4462
      %v4700 = vunpack.c.l.b16 %v4463
      %v4701 = vunpack.c.h.b16 %v4463
      %v4702 = vunpack.c.l.b16 %v4464
      %v4703 = vunpack.c.h.b16 %v4464
      %v4704 = vunpack.c.l.b16 %v4465
      %v4705 = vunpack.c.h.b16 %v4465
      %v4706 = vunpack.c.l.b16 %v4466
      %v4707 = vunpack.c.h.b16 %v4466
      %v4708 = vunpack.c.l.b16 %v4467
      %v4709 = vunpack.c.h.b16 %v4467
      %v4710 = vunpack.c.l.b16 %v4468
      %v4711 = vunpack.c.h.b16 %v4468
      %v4712 = vunpack.c.l.b16 %v4469
      %v4713 = vunpack.c.h.b16 %v4469
      %v4714 = vunpack.c.l.b16 %v4470
      %v4715 = vunpack.c.h.b16 %v4470
      %v4716 = vunpack.c.l.b16 %v4471
      %v4717 = vunpack.c.h.b16 %v4471
      %v4718 = vunpack.c.l.b16 %v4472
      %v4719 = vunpack.c.h.b16 %v4472
      %v4720 = vunpack.c.l.b16 %v4473
      %v4721 = vunpack.c.h.b16 %v4473
      %v4722 = vunpack.c.l.b16 %v4474
      %v4723 = vunpack.c.h.b16 %v4474
      %v4724 = vunpack.c.l.b16 %v4475
      %v4725 = vunpack.c.h.b16 %v4475
      %v4726 = vunpack.c.l.b16 %v4476
      %v4727 = vunpack.c.h.b16 %v4476
      %v4728 = vunpack.c.l.b16 %v4477
      %v4729 = vunpack.c.h.b16 %v4477
      %v4730 = vunpack.c.l.b16 %v4478
      %v4731 = vunpack.c.h.b16 %v4478
      %v4732 = vunpack.c.l.b16 %v4479
      %v4733 = vunpack.c.h.b16 %v4479
      %v4734 = vunpack.c.l.b16 %v4480
      %v4735 = vunpack.c.h.b16 %v4480
      %v4736 = vunpack.c.l.b16 %v4481
      %v4737 = vunpack.c.h.b16 %v4481
      %v4738 = vunpack.c.l.b16 %v4482
      %v4739 = vunpack.c.h.b16 %v4482
      %v4740 = vunpack.c.l.b16 %v4483
      %v4741 = vunpack.c.h.b16 %v4483
      %v4742 = vunpack.c.l.b16 %v4484
      %v4743 = vunpack.c.h.b16 %v4484
      %v4744 = vunpack.c.l.b16 %v4485
      %v4745 = vunpack.c.h.b16 %v4485
      %v4746 = vunpack.c.l.b16 %v4486
      %v4747 = vunpack.c.h.b16 %v4486
      %v4748 = vunpack.c.l.b16 %v4487
      %v4749 = vunpack.c.h.b16 %v4487
      %v4750 = vunpack.c.l.b16 %v4488
      %v4751 = vunpack.c.h.b16 %v4488
      %v4752 = vunpack.c.l.b16 %v4489
      %v4753 = vunpack.c.h.b16 %v4489
      %v4754 = vunpack.c.l.b16 %v4490
      %v4755 = vunpack.c.h.b16 %v4490
      %v4756 = vunpack.c.l.b16 %v4491
      %v4757 = vunpack.c.h.b16 %v4491
      %v4758 = vunpack.c.l.b16 %v4492
      %v4759 = vunpack.c.h.b16 %v4492
      %v4760 = vunpack.c.l.b16 %v4493
      %v4761 = vunpack.c.h.b16 %v4493
      %v4762 = vpack.c.b16 %v4700, %v4698
      %v4763 = vpack.c.b16 %v4701, %v4699
      %v4764 = vpack.c.b16 %v4704, %v4702
      %v4765 = vpack.c.b16 %v4705, %v4703
      %v4766 = vpack.c.b16 %v4708, %v4706
      %v4767 = vpack.c.b16 %v4709, %v4707
      %v4768 = vpack.c.b16 %v4712, %v4710
      %v4769 = vpack.c.b16 %v4713, %v4711
      %v4770 = vpack.c.b16 %v4716, %v4714
      %v4771 = vpack.c.b16 %v4717, %v4715
      %v4772 = vpack.c.b16 %v4720, %v4718
      %v4773 = vpack.c.b16 %v4721, %v4719
      %v4774 = vpack.c.b16 %v4724, %v4722
      %v4775 = vpack.c.b16 %v4725, %v4723
      %v4776 = vpack.c.b16 %v4728, %v4726
      %v4777 = vpack.c.b16 %v4729, %v4727
      %v4778 = vpack.c.b16 %v4732, %v4730
      %v4779 = vpack.c.b16 %v4733, %v4731
      %v4780 = vpack.c.b16 %v4736, %v4734
      %v4781 = vpack.c.b16 %v4737, %v4735
      %v4782 = vpack.c.b16 %v4740, %v4738
      %v4783 = vpack.c.b16 %v4741, %v4739
      %v4784 = vpack.c.b16 %v4744, %v4742
      %v4785 = vpack.c.b16 %v4745, %v4743
      %v4786 = vpack.c.b16 %v4748, %v4746
      %v4787 = vpack.c.b16 %v4749, %v4747
      %v4788 = vpack.c.b16 %v4752, %v4750
      %v4789 = vpack.c.b16 %v4753, %v4751
      %v4790 = vpack.c.b16 %v4756, %v4754
      %v4791 = vpack.c.b16 %v4757, %v4755
      %v4792 = vpack.c.b16 %v4760, %v4758
      %v4793 = vpack.c.b16 %v4761, %v4759
      %4826 = vmatprep.subr.bf16.mxu0 %v4777
      %4827 = vmatpush1.bf16.msra.mxu0 %v4776
      %4828 = vmatprep.subr.bf16.mxu0 %v4775
      %4829 = vmatpush1.bf16.msra.mxu0 %v4774
      %4830 = vmatprep.subr.bf16.mxu0 %v4773
      %4831 = vmatpush1.bf16.msra.mxu0 %v4772
      %4832 = vmatprep.subr.bf16.mxu0 %v4771
      %4833 = vmatpush1.bf16.msra.mxu0 %v4770
      %4834 = vmatprep.subr.bf16.mxu0 %v4769
      %4835 = vmatpush1.bf16.msra.mxu0 %v4768
      %4836 = vmatprep.subr.bf16.mxu0 %v4767
      %4837 = vmatpush1.bf16.msra.mxu0 %v4766
      %4838 = vmatprep.subr.bf16.mxu0 %v4765
      %4839 = vmatpush1.bf16.msra.mxu0 %v4764
      %4840 = vmatprep.subr.bf16.mxu0 %v4763
      %4841 = vmatpush1.bf16.msra.mxu0 %v4762
      %4842 = vmatprep.subr.bf16.mxu0 %v4793
      %4843 = vmatpush2.bf16.msra.mxu0 %v4792
      %4844 = vmatprep.subr.bf16.mxu0 %v4791
      %4845 = vmatpush2.bf16.msra.mxu0 %v4790
      %4846 = vmatprep.subr.bf16.mxu0 %v4789
      %4847 = vmatpush2.bf16.msra.mxu0 %v4788
      %4848 = vmatprep.subr.bf16.mxu0 %v4787
      %4849 = vmatpush2.bf16.msra.mxu0 %v4786
      %4850 = vmatprep.subr.bf16.mxu0 %v4785
      %4851 = vmatpush2.bf16.msra.mxu0 %v4784
      %4852 = vmatprep.subr.bf16.mxu0 %v4783
      %4853 = vmatpush2.bf16.msra.mxu0 %v4782
      %4854 = vmatprep.subr.bf16.mxu0 %v4781
      %4855 = vmatpush2.bf16.msra.mxu0 %v4780
      %4856 = vmatprep.subr.bf16.mxu0 %v4779
      %4857 = vmatpush2.bf16.msra.mxu0 %v4778
      %4858 = vmatprep.mubr.bf16.mxu0 %v4603
      %4859 = vmatmul.mubr.bf16.gmra.mxu0 %v4602
      %v4860 = vpop.f32.mrf.mxu0
      %v4861 = vadd.f32 %v4499, %v4860
      %v4862 = vpop.f32.mrf.mxu0
      %v4863 = vadd.f32 %v4503, %v4862
      %v4864 = vpop.f32.mrf.mxu0
      %v4865 = vadd.f32 %v4499, %v4864
      %v4866 = vpop.f32.mrf.mxu0
      %v4867 = vadd.f32 %v4503, %v4866
      %4868 = vmatprep.mubr.bf16.mxu0 %v4605
      %4869 = vmatmul.mubr.bf16.gmra.mxu0 %v4604
      %v4870 = vpop.f32.mrf.mxu0
      %v4871 = vadd.f32 %v4499, %v4870
      %v4872 = vpop.f32.mrf.mxu0
      %v4873 = vadd.f32 %v4503, %v4872
      %v4874 = vpop.f32.mrf.mxu0
      %v4875 = vadd.f32 %v4499, %v4874
      %v4876 = vpop.f32.mrf.mxu0
      %v4877 = vadd.f32 %v4503, %v4876
      %4878 = vmatprep.mubr.bf16.mxu0 %v4607
      %4879 = vmatmul.mubr.bf16.gmra.mxu0 %v4606
      %v4880 = vpop.f32.mrf.mxu0
      %v4881 = vadd.f32 %v4499, %v4880
      %v4882 = vpop.f32.mrf.mxu0
      %v4883 = vadd.f32 %v4503, %v4882
      %v4884 = vpop.f32.mrf.mxu0
      %v4885 = vadd.f32 %v4499, %v4884
      %v4886 = vpop.f32.mrf.mxu0
      %v4887 = vadd.f32 %v4503, %v4886
      %4888 = vmatprep.mubr.bf16.mxu0 %v4609
      %4889 = vmatmul.mubr.bf16.gmra.mxu0 %v4608
      %v4890 = vpop.f32.mrf.mxu0
      %v4891 = vadd.f32 %v4499, %v4890
      %v4892 = vpop.f32.mrf.mxu0
      %v4893 = vadd.f32 %v4503, %v4892
      %v4894 = vpop.f32.mrf.mxu0
      %v4895 = vadd.f32 %v4499, %v4894
      %v4896 = vpop.f32.mrf.mxu0
      %v4897 = vadd.f32 %v4503, %v4896
      %4898 = vmatprep.mubr.bf16.mxu0 %v4611
      %4899 = vmatmul.mubr.bf16.gmra.mxu0 %v4610
      %v4900 = vpop.f32.mrf.mxu0
      %v4901 = vadd.f32 %v4499, %v4900
      %v4902 = vpop.f32.mrf.mxu0
      %v4903 = vadd.f32 %v4503, %v4902
      %v4904 = vpop.f32.mrf.mxu0
      %v4905 = vadd.f32 %v4499, %v4904
      %v4906 = vpop.f32.mrf.mxu0
      %v4907 = vadd.f32 %v4503, %v4906
      %4908 = vmatprep.mubr.bf16.mxu0 %v4613
      %4909 = vmatmul.mubr.bf16.gmra.mxu0 %v4612
      %v4910 = vpop.f32.mrf.mxu0
      %v4911 = vadd.f32 %v4499, %v4910
      %v4912 = vpop.f32.mrf.mxu0
      %v4913 = vadd.f32 %v4503, %v4912
      %v4914 = vpop.f32.mrf.mxu0
      %v4915 = vadd.f32 %v4499, %v4914
      %v4916 = vpop.f32.mrf.mxu0
      %v4917 = vadd.f32 %v4503, %v4916
      %4918 = vmatprep.mubr.bf16.mxu0 %v4615
      %4919 = vmatmul.mubr.bf16.gmra.mxu0 %v4614
      %v4920 = vpop.f32.mrf.mxu0
      %v4921 = vadd.f32 %v4499, %v4920
      %v4922 = vpop.f32.mrf.mxu0
      %v4923 = vadd.f32 %v4503, %v4922
      %v4924 = vpop.f32.mrf.mxu0
      %v4925 = vadd.f32 %v4499, %v4924
      %v4926 = vpop.f32.mrf.mxu0
      %v4927 = vadd.f32 %v4503, %v4926
      %4928 = vmatprep.mubr.bf16.mxu0 %v4617
      %4929 = vmatmul.mubr.bf16.gmra.mxu0 %v4616
      %v4930 = vpop.f32.mrf.mxu0
      %v4931 = vadd.f32 %v4499, %v4930
      %v4932 = vpop.f32.mrf.mxu0
      %v4933 = vadd.f32 %v4503, %v4932
      %v4934 = vpop.f32.mrf.mxu0
      %v4935 = vadd.f32 %v4499, %v4934
      %v4936 = vpop.f32.mrf.mxu0
      %v4937 = vadd.f32 %v4503, %v4936
      %4938 = vmatprep.mubr.bf16.mxu0 %v4619
      %4939 = vmatmul.mubr.bf16.gmra.mxu0 %v4618
      %v4940 = vpop.f32.mrf.mxu0
      %v4941 = vadd.f32 %v4499, %v4940
      %v4942 = vpop.f32.mrf.mxu0
      %v4943 = vadd.f32 %v4503, %v4942
      %v4944 = vpop.f32.mrf.mxu0
      %v4945 = vadd.f32 %v4499, %v4944
      %v4946 = vpop.f32.mrf.mxu0
      %v4947 = vadd.f32 %v4503, %v4946
      %4948 = vmatprep.mubr.bf16.mxu0 %v4621
      %4949 = vmatmul.mubr.bf16.gmra.mxu0 %v4620
      %v4950 = vpop.f32.mrf.mxu0
      %v4951 = vadd.f32 %v4499, %v4950
      %v4952 = vpop.f32.mrf.mxu0
      %v4953 = vadd.f32 %v4503, %v4952
      %v4954 = vpop.f32.mrf.mxu0
      %v4955 = vadd.f32 %v4499, %v4954
      %v4956 = vpop.f32.mrf.mxu0
      %v4957 = vadd.f32 %v4503, %v4956
      %4958 = vmatprep.mubr.bf16.mxu0 %v4623
      %4959 = vmatmul.mubr.bf16.gmra.mxu0 %v4622
      %v4960 = vpop.f32.mrf.mxu0
      %v4961 = vadd.f32 %v4499, %v4960
      %v4962 = vpop.f32.mrf.mxu0
      %v4963 = vadd.f32 %v4503, %v4962
      %v4964 = vpop.f32.mrf.mxu0
      %v4965 = vadd.f32 %v4499, %v4964
      %v4966 = vpop.f32.mrf.mxu0
      %v4967 = vadd.f32 %v4503, %v4966
      %4968 = vmatprep.mubr.bf16.mxu0 %v4625
      %4969 = vmatmul.mubr.bf16.gmra.mxu0 %v4624
      %v4970 = vpop.f32.mrf.mxu0
      %v4971 = vadd.f32 %v4499, %v4970
      %v4972 = vpop.f32.mrf.mxu0
      %v4973 = vadd.f32 %v4503, %v4972
      %v4974 = vpop.f32.mrf.mxu0
      %v4975 = vadd.f32 %v4499, %v4974
      %v4976 = vpop.f32.mrf.mxu0
      %v4977 = vadd.f32 %v4503, %v4976
      %4978 = vmatprep.mubr.bf16.mxu0 %v4627
      %4979 = vmatmul.mubr.bf16.gmra.mxu0 %v4626
      %v4980 = vpop.f32.mrf.mxu0
      %v4981 = vadd.f32 %v4499, %v4980
      %v4982 = vpop.f32.mrf.mxu0
      %v4983 = vadd.f32 %v4503, %v4982
      %v4984 = vpop.f32.mrf.mxu0
      %v4985 = vadd.f32 %v4499, %v4984
      %v4986 = vpop.f32.mrf.mxu0
      %v4987 = vadd.f32 %v4503, %v4986
      %4988 = vmatprep.mubr.bf16.mxu0 %v4629
      %4989 = vmatmul.mubr.bf16.gmra.mxu0 %v4628
      %v4990 = vpop.f32.mrf.mxu0
      %v4991 = vadd.f32 %v4499, %v4990
      %v4992 = vpop.f32.mrf.mxu0
      %v4993 = vadd.f32 %v4503, %v4992
      %v4994 = vpop.f32.mrf.mxu0
      %v4995 = vadd.f32 %v4499, %v4994
      %v4996 = vpop.f32.mrf.mxu0
      %v4997 = vadd.f32 %v4503, %v4996
      %4998 = vmatprep.mubr.bf16.mxu0 %v4631
      %4999 = vmatmul.mubr.bf16.gmra.mxu0 %v4630
      %v5000 = vpop.f32.mrf.mxu0
      %v5001 = vadd.f32 %v4499, %v5000
      %v5002 = vpop.f32.mrf.mxu0
      %v5003 = vadd.f32 %v4503, %v5002
      %v5004 = vpop.f32.mrf.mxu0
      %v5005 = vadd.f32 %v4499, %v5004
      %v5006 = vpop.f32.mrf.mxu0
      %v5007 = vadd.f32 %v4503, %v5006
      %5008 = vmatprep.mubr.bf16.mxu0 %v4633
      %5009 = vmatmul.mubr.bf16.gmra.mxu0 %v4632
      %v5010 = vpop.f32.mrf.mxu0
      %v5011 = vadd.f32 %v4499, %v5010
      %v5012 = vpop.f32.mrf.mxu0
      %v5013 = vadd.f32 %v4503, %v5012
      %v5014 = vpop.f32.mrf.mxu0
      %v5015 = vadd.f32 %v4499, %v5014
      %v5016 = vpop.f32.mrf.mxu0
      %v5017 = vadd.f32 %v4503, %v5016
      %5018 = vdwg.mxu0
      %v5019 = vpack.c.bf16 %v4865, %v4861
      %v5020 = vpack.c.bf16 %v4867, %v4863
      %v5021 = vpack.c.bf16 %v4875, %v4871
      %v5022 = vpack.c.bf16 %v4877, %v4873
      %v5023 = vpack.c.bf16 %v4885, %v4881
      %v5024 = vpack.c.bf16 %v4887, %v4883
      %v5025 = vpack.c.bf16 %v4895, %v4891
      %v5026 = vpack.c.bf16 %v4897, %v4893
      %v5027 = vpack.c.bf16 %v4905, %v4901
      %v5028 = vpack.c.bf16 %v4907, %v4903
      %v5029 = vpack.c.bf16 %v4915, %v4911
      %v5030 = vpack.c.bf16 %v4917, %v4913
      %v5031 = vpack.c.bf16 %v4925, %v4921
      %v5032 = vpack.c.bf16 %v4927, %v4923
      %v5033 = vpack.c.bf16 %v4935, %v4931
      %v5034 = vpack.c.bf16 %v4937, %v4933
      %v5035 = vpack.c.bf16 %v4945, %v4941
      %v5036 = vpack.c.bf16 %v4947, %v4943
      %v5037 = vpack.c.bf16 %v4955, %v4951
      %v5038 = vpack.c.bf16 %v4957, %v4953
      %v5039 = vpack.c.bf16 %v4965, %v4961
      %v5040 = vpack.c.bf16 %v4967, %v4963
      %v5041 = vpack.c.bf16 %v4975, %v4971
      %v5042 = vpack.c.bf16 %v4977, %v4973
      %v5043 = vpack.c.bf16 %v4985, %v4981
      %v5044 = vpack.c.bf16 %v4987, %v4983
      %v5045 = vpack.c.bf16 %v4995, %v4991
      %v5046 = vpack.c.bf16 %v4997, %v4993
      %v5047 = vpack.c.bf16 %v5005, %v5001
      %v5048 = vpack.c.bf16 %v5007, %v5003
      %v5049 = vpack.c.bf16 %v5015, %v5011
      %v5050 = vpack.c.bf16 %v5017, %v5013
      %v5051 = vld [vmem:[#allocation3] sm:$0xff]
      %v5052 = vld [vmem:[#allocation3 + $0x8] sm:$0xff]
      %v5053 = vld [vmem:[#allocation3 + $0x10] sm:$0xff]
      %v5054 = vld [vmem:[#allocation3 + $0x18] sm:$0xff]
      %v5055 = vld [vmem:[#allocation3 + $0x20] sm:$0xff]
      %v5056 = vld [vmem:[#allocation3 + $0x28] sm:$0xff]
      %v5057 = vld [vmem:[#allocation3 + $0x30] sm:$0xff]
      %v5058 = vld [vmem:[#allocation3 + $0x38] sm:$0xff]
      %v5059 = vld [vmem:[#allocation3 + $0x40] sm:$0xff]
      %v5060 = vld [vmem:[#allocation3 + $0x48] sm:$0xff]
      %v5061 = vld [vmem:[#allocation3 + $0x50] sm:$0xff]
      %v5062 = vld [vmem:[#allocation3 + $0x58] sm:$0xff]
      %v5063 = vld [vmem:[#allocation3 + $0x60] sm:$0xff]
      %v5064 = vld [vmem:[#allocation3 + $0x68] sm:$0xff]
      %v5065 = vld [vmem:[#allocation3 + $0x70] sm:$0xff]
      %v5066 = vld [vmem:[#allocation3 + $0x78] sm:$0xff]
      %v5067 = vld [vmem:[#allocation3 + $0x80] sm:$0xff]
      %v5068 = vld [vmem:[#allocation3 + $0x88] sm:$0xff]
      %v5069 = vld [vmem:[#allocation3 + $0x90] sm:$0xff]
      %v5070 = vld [vmem:[#allocation3 + $0x98] sm:$0xff]
      %v5071 = vld [vmem:[#allocation3 + $0xa0] sm:$0xff]
      %v5072 = vld [vmem:[#allocation3 + $0xa8] sm:$0xff]
      %v5073 = vld [vmem:[#allocation3 + $0xb0] sm:$0xff]
      %v5074 = vld [vmem:[#allocation3 + $0xb8] sm:$0xff]
      %v5075 = vld [vmem:[#allocation3 + $0xc0] sm:$0xff]
      %v5076 = vld [vmem:[#allocation3 + $0xc8] sm:$0xff]
      %v5077 = vld [vmem:[#allocation3 + $0xd0] sm:$0xff]
      %v5078 = vld [vmem:[#allocation3 + $0xd8] sm:$0xff]
      %v5079 = vld [vmem:[#allocation3 + $0xe0] sm:$0xff]
      %v5080 = vld [vmem:[#allocation3 + $0xe8] sm:$0xff]
      %v5081 = vld [vmem:[#allocation3 + $0xf0] sm:$0xff]
      %v5082 = vld [vmem:[#allocation3 + $0xf8] sm:$0xff]
      %v5083 = vld [vmem:[#allocation3 + $0x100] sm:$0xff]
      %v5084 = vld [vmem:[#allocation3 + $0x108] sm:$0xff]
      %v5085 = vld [vmem:[#allocation3 + $0x110] sm:$0xff]
      %v5086 = vld [vmem:[#allocation3 + $0x118] sm:$0xff]
      %v5087 = vld [vmem:[#allocation3 + $0x120] sm:$0xff]
      %v5088 = vld [vmem:[#allocation3 + $0x128] sm:$0xff]
      %v5089 = vld [vmem:[#allocation3 + $0x130] sm:$0xff]
      %v5090 = vld [vmem:[#allocation3 + $0x138] sm:$0xff]
      %v5091 = vld [vmem:[#allocation3 + $0x140] sm:$0xff]
      %v5092 = vld [vmem:[#allocation3 + $0x148] sm:$0xff]
      %v5093 = vld [vmem:[#allocation3 + $0x150] sm:$0xff]
      %v5094 = vld [vmem:[#allocation3 + $0x158] sm:$0xff]
      %v5095 = vld [vmem:[#allocation3 + $0x160] sm:$0xff]
      %v5096 = vld [vmem:[#allocation3 + $0x168] sm:$0xff]
      %v5097 = vld [vmem:[#allocation3 + $0x170] sm:$0xff]
      %v5098 = vld [vmem:[#allocation3 + $0x178] sm:$0xff]
      %v5099 = vld [vmem:[#allocation3 + $0x180] sm:$0xff]
      %v5100 = vld [vmem:[#allocation3 + $0x188] sm:$0xff]
      %v5101 = vld [vmem:[#allocation3 + $0x190] sm:$0xff]
      %v5102 = vld [vmem:[#allocation3 + $0x198] sm:$0xff]
      %v5103 = vld [vmem:[#allocation3 + $0x1a0] sm:$0xff]
      %v5104 = vld [vmem:[#allocation3 + $0x1a8] sm:$0xff]
      %v5105 = vld [vmem:[#allocation3 + $0x1b0] sm:$0xff]
      %v5106 = vld [vmem:[#allocation3 + $0x1b8] sm:$0xff]
      %v5107 = vld [vmem:[#allocation3 + $0x1c0] sm:$0xff]
      %v5108 = vld [vmem:[#allocation3 + $0x1c8] sm:$0xff]
      %v5109 = vld [vmem:[#allocation3 + $0x1d0] sm:$0xff]
      %v5110 = vld [vmem:[#allocation3 + $0x1d8] sm:$0xff]
      %v5111 = vld [vmem:[#allocation3 + $0x1e0] sm:$0xff]
      %v5112 = vld [vmem:[#allocation3 + $0x1e8] sm:$0xff]
      %v5113 = vld [vmem:[#allocation3 + $0x1f0] sm:$0xff]
      %v5114 = vld [vmem:[#allocation3 + $0x1f8] sm:$0xff]
      %v5115 = vpack.c.bf16 %v5053, %v5051
      %v5116 = vpack.c.bf16 %v5054, %v5052
      %v5117 = vpack.c.bf16 %v5057, %v5055
      %v5118 = vpack.c.bf16 %v5058, %v5056
      %v5119 = vpack.c.bf16 %v5061, %v5059
      %v5120 = vpack.c.bf16 %v5062, %v5060
      %v5121 = vpack.c.bf16 %v5065, %v5063
      %v5122 = vpack.c.bf16 %v5066, %v5064
      %v5123 = vpack.c.bf16 %v5069, %v5067
      %v5124 = vpack.c.bf16 %v5070, %v5068
      %v5125 = vpack.c.bf16 %v5073, %v5071
      %v5126 = vpack.c.bf16 %v5074, %v5072
      %v5127 = vpack.c.bf16 %v5077, %v5075
      %v5128 = vpack.c.bf16 %v5078, %v5076
      %v5129 = vpack.c.bf16 %v5081, %v5079
      %v5130 = vpack.c.bf16 %v5082, %v5080
      %v5131 = vpack.c.bf16 %v5085, %v5083
      %v5132 = vpack.c.bf16 %v5086, %v5084
      %v5133 = vpack.c.bf16 %v5089, %v5087
      %v5134 = vpack.c.bf16 %v5090, %v5088
      %v5135 = vpack.c.bf16 %v5093, %v5091
      %v5136 = vpack.c.bf16 %v5094, %v5092
      %v5137 = vpack.c.bf16 %v5097, %v5095
      %v5138 = vpack.c.bf16 %v5098, %v5096
      %v5139 = vpack.c.bf16 %v5101, %v5099
      %v5140 = vpack.c.bf16 %v5102, %v5100
      %v5141 = vpack.c.bf16 %v5105, %v5103
      %v5142 = vpack.c.bf16 %v5106, %v5104
      %v5143 = vpack.c.bf16 %v5109, %v5107
      %v5144 = vpack.c.bf16 %v5110, %v5108
      %v5145 = vpack.c.bf16 %v5113, %v5111
      %v5146 = vpack.c.bf16 %v5114, %v5112
      %5147 = vmatprep.subr.bf16.mxu0 %v5130
      %5148 = vmatpush1.bf16.msra.mxu0 %v5129
      %5149 = vmatprep.subr.bf16.mxu0 %v5128
      %5150 = vmatpush1.bf16.msra.mxu0 %v5127
      %5151 = vmatprep.subr.bf16.mxu0 %v5126
      %5152 = vmatpush1.bf16.msra.mxu0 %v5125
      %5153 = vmatprep.subr.bf16.mxu0 %v5124
      %5154 = vmatpush1.bf16.msra.mxu0 %v5123
      %5155 = vmatprep.subr.bf16.mxu0 %v5122
      %5156 = vmatpush1.bf16.msra.mxu0 %v5121
      %5157 = vmatprep.subr.bf16.mxu0 %v5120
      %5158 = vmatpush1.bf16.msra.mxu0 %v5119
      %5159 = vmatprep.subr.bf16.mxu0 %v5118
      %5160 = vmatpush1.bf16.msra.mxu0 %v5117
      %5161 = vmatprep.subr.bf16.mxu0 %v5116
      %5162 = vmatpush1.bf16.msra.mxu0 %v5115
      %5163 = vmatprep.subr.bf16.mxu0 %v5146
      %5164 = vmatpush2.bf16.msra.mxu0 %v5145
      %5165 = vmatprep.subr.bf16.mxu0 %v5144
      %5166 = vmatpush2.bf16.msra.mxu0 %v5143
      %5167 = vmatprep.subr.bf16.mxu0 %v5142
      %5168 = vmatpush2.bf16.msra.mxu0 %v5141
      %5169 = vmatprep.subr.bf16.mxu0 %v5140
      %5170 = vmatpush2.bf16.msra.mxu0 %v5139
      %5171 = vmatprep.subr.bf16.mxu0 %v5138
      %5172 = vmatpush2.bf16.msra.mxu0 %v5137
      %5173 = vmatprep.subr.bf16.mxu0 %v5136
      %5174 = vmatpush2.bf16.msra.mxu0 %v5135
      %5175 = vmatprep.subr.bf16.mxu0 %v5134
      %5176 = vmatpush2.bf16.msra.mxu0 %v5133
      %5177 = vmatprep.subr.bf16.mxu0 %v5132
      %5178 = vmatpush2.bf16.msra.mxu0 %v5131
      %5179 = vmatprep.mubr.bf16.mxu0 %v5020
      %5180 = vmatmul.mubr.bf16.gmra.mxu0 %v5019
      %v5181 = vpop.f32.mrf.mxu0
      %v5182 = vadd.f32 0.0, %v5181
      %v5183 = vpop.f32.mrf.mxu0
      %v5184 = vadd.f32 0.0, %v5183
      %v5185 = vpop.f32.mrf.mxu0
      %v5186 = vadd.f32 0.0, %v5185
      %v5187 = vpop.f32.mrf.mxu0
      %v5188 = vadd.f32 0.0, %v5187
      %5189 = vmatprep.mubr.bf16.mxu0 %v5022
      %5190 = vmatmul.mubr.bf16.gmra.mxu0 %v5021
      %v5191 = vpop.f32.mrf.mxu0
      %v5192 = vadd.f32 0.0, %v5191
      %v5193 = vpop.f32.mrf.mxu0
      %v5194 = vadd.f32 0.0, %v5193
      %v5195 = vpop.f32.mrf.mxu0
      %v5196 = vadd.f32 0.0, %v5195
      %v5197 = vpop.f32.mrf.mxu0
      %v5198 = vadd.f32 0.0, %v5197
      %5199 = vmatprep.mubr.bf16.mxu0 %v5024
      %5200 = vmatmul.mubr.bf16.gmra.mxu0 %v5023
      %v5201 = vpop.f32.mrf.mxu0
      %v5202 = vadd.f32 0.0, %v5201
      %v5203 = vpop.f32.mrf.mxu0
      %v5204 = vadd.f32 0.0, %v5203
      %v5205 = vpop.f32.mrf.mxu0
      %v5206 = vadd.f32 0.0, %v5205
      %v5207 = vpop.f32.mrf.mxu0
      %v5208 = vadd.f32 0.0, %v5207
      %5209 = vmatprep.mubr.bf16.mxu0 %v5026
      %5210 = vmatmul.mubr.bf16.gmra.mxu0 %v5025
      %v5211 = vpop.f32.mrf.mxu0
      %v5212 = vadd.f32 0.0, %v5211
      %v5213 = vpop.f32.mrf.mxu0
      %v5214 = vadd.f32 0.0, %v5213
      %v5215 = vpop.f32.mrf.mxu0
      %v5216 = vadd.f32 0.0, %v5215
      %v5217 = vpop.f32.mrf.mxu0
      %v5218 = vadd.f32 0.0, %v5217
      %5219 = vmatprep.mubr.bf16.mxu0 %v5028
      %5220 = vmatmul.mubr.bf16.gmra.mxu0 %v5027
      %v5221 = vpop.f32.mrf.mxu0
      %v5222 = vadd.f32 0.0, %v5221
      %v5223 = vpop.f32.mrf.mxu0
      %v5224 = vadd.f32 0.0, %v5223
      %v5225 = vpop.f32.mrf.mxu0
      %v5226 = vadd.f32 0.0, %v5225
      %v5227 = vpop.f32.mrf.mxu0
      %v5228 = vadd.f32 0.0, %v5227
      %5229 = vmatprep.mubr.bf16.mxu0 %v5030
      %5230 = vmatmul.mubr.bf16.gmra.mxu0 %v5029
      %v5231 = vpop.f32.mrf.mxu0
      %v5232 = vadd.f32 0.0, %v5231
      %v5233 = vpop.f32.mrf.mxu0
      %v5234 = vadd.f32 0.0, %v5233
      %v5235 = vpop.f32.mrf.mxu0
      %v5236 = vadd.f32 0.0, %v5235
      %v5237 = vpop.f32.mrf.mxu0
      %v5238 = vadd.f32 0.0, %v5237
      %5239 = vmatprep.mubr.bf16.mxu0 %v5032
      %5240 = vmatmul.mubr.bf16.gmra.mxu0 %v5031
      %v5241 = vpop.f32.mrf.mxu0
      %v5242 = vadd.f32 0.0, %v5241
      %v5243 = vpop.f32.mrf.mxu0
      %v5244 = vadd.f32 0.0, %v5243
      %v5245 = vpop.f32.mrf.mxu0
      %v5246 = vadd.f32 0.0, %v5245
      %v5247 = vpop.f32.mrf.mxu0
      %v5248 = vadd.f32 0.0, %v5247
      %5249 = vmatprep.mubr.bf16.mxu0 %v5034
      %5250 = vmatmul.mubr.bf16.gmra.mxu0 %v5033
      %v5251 = vpop.f32.mrf.mxu0
      %v5252 = vadd.f32 0.0, %v5251
      %v5253 = vpop.f32.mrf.mxu0
      %v5254 = vadd.f32 0.0, %v5253
      %v5255 = vpop.f32.mrf.mxu0
      %v5256 = vadd.f32 0.0, %v5255
      %v5257 = vpop.f32.mrf.mxu0
      %v5258 = vadd.f32 0.0, %v5257
      %5259 = vmatprep.mubr.bf16.mxu0 %v5036
      %5260 = vmatmul.mubr.bf16.gmra.mxu0 %v5035
      %v5261 = vpop.f32.mrf.mxu0
      %v5262 = vadd.f32 0.0, %v5261
      %v5263 = vpop.f32.mrf.mxu0
      %v5264 = vadd.f32 0.0, %v5263
      %v5265 = vpop.f32.mrf.mxu0
      %v5266 = vadd.f32 0.0, %v5265
      %v5267 = vpop.f32.mrf.mxu0
      %v5268 = vadd.f32 0.0, %v5267
      %5269 = vmatprep.mubr.bf16.mxu0 %v5038
      %5270 = vmatmul.mubr.bf16.gmra.mxu0 %v5037
      %v5271 = vpop.f32.mrf.mxu0
      %v5272 = vadd.f32 0.0, %v5271
      %v5273 = vpop.f32.mrf.mxu0
      %v5274 = vadd.f32 0.0, %v5273
      %v5275 = vpop.f32.mrf.mxu0
      %v5276 = vadd.f32 0.0, %v5275
      %v5277 = vpop.f32.mrf.mxu0
      %v5278 = vadd.f32 0.0, %v5277
      %5279 = vmatprep.mubr.bf16.mxu0 %v5040
      %5280 = vmatmul.mubr.bf16.gmra.mxu0 %v5039
      %v5281 = vpop.f32.mrf.mxu0
      %v5282 = vadd.f32 0.0, %v5281
      %v5283 = vpop.f32.mrf.mxu0
      %v5284 = vadd.f32 0.0, %v5283
      %v5285 = vpop.f32.mrf.mxu0
      %v5286 = vadd.f32 0.0, %v5285
      %v5287 = vpop.f32.mrf.mxu0
      %v5288 = vadd.f32 0.0, %v5287
      %5289 = vmatprep.mubr.bf16.mxu0 %v5042
      %5290 = vmatmul.mubr.bf16.gmra.mxu0 %v5041
      %v5291 = vpop.f32.mrf.mxu0
      %v5292 = vadd.f32 0.0, %v5291
      %v5293 = vpop.f32.mrf.mxu0
      %v5294 = vadd.f32 0.0, %v5293
      %v5295 = vpop.f32.mrf.mxu0
      %v5296 = vadd.f32 0.0, %v5295
      %v5297 = vpop.f32.mrf.mxu0
      %v5298 = vadd.f32 0.0, %v5297
      %5299 = vmatprep.mubr.bf16.mxu0 %v5044
      %5300 = vmatmul.mubr.bf16.gmra.mxu0 %v5043
      %v5301 = vpop.f32.mrf.mxu0
      %v5302 = vadd.f32 0.0, %v5301
      %v5303 = vpop.f32.mrf.mxu0
      %v5304 = vadd.f32 0.0, %v5303
      %v5305 = vpop.f32.mrf.mxu0
      %v5306 = vadd.f32 0.0, %v5305
      %v5307 = vpop.f32.mrf.mxu0
      %v5308 = vadd.f32 0.0, %v5307
      %5309 = vmatprep.mubr.bf16.mxu0 %v5046
      %5310 = vmatmul.mubr.bf16.gmra.mxu0 %v5045
      %v5311 = vpop.f32.mrf.mxu0
      %v5312 = vadd.f32 0.0, %v5311
      %v5313 = vpop.f32.mrf.mxu0
      %v5314 = vadd.f32 0.0, %v5313
      %v5315 = vpop.f32.mrf.mxu0
      %v5316 = vadd.f32 0.0, %v5315
      %v5317 = vpop.f32.mrf.mxu0
      %v5318 = vadd.f32 0.0, %v5317
      %5319 = vmatprep.mubr.bf16.mxu0 %v5048
      %5320 = vmatmul.mubr.bf16.gmra.mxu0 %v5047
      %v5321 = vpop.f32.mrf.mxu0
      %v5322 = vadd.f32 0.0, %v5321
      %v5323 = vpop.f32.mrf.mxu0
      %v5324 = vadd.f32 0.0, %v5323
      %v5325 = vpop.f32.mrf.mxu0
      %v5326 = vadd.f32 0.0, %v5325
      %v5327 = vpop.f32.mrf.mxu0
      %v5328 = vadd.f32 0.0, %v5327
      %5329 = vmatprep.mubr.bf16.mxu0 %v5050
      %5330 = vmatmul.mubr.bf16.gmra.mxu0 %v5049
      %v5331 = vpop.f32.mrf.mxu0
      %v5332 = vadd.f32 0.0, %v5331
      %v5333 = vpop.f32.mrf.mxu0
      %v5334 = vadd.f32 0.0, %v5333
      %v5335 = vpop.f32.mrf.mxu0
      %v5336 = vadd.f32 0.0, %v5335
      %v5337 = vpop.f32.mrf.mxu0
      %v5338 = vadd.f32 0.0, %v5337
      %5339 = vdwg.mxu0
      %5340 = vst [vmem:[%s312] sm:$0xff] %v5182
      %5341 = vst [vmem:[%s312 + $0x8] sm:$0xff] %v5184
      %5342 = vst [vmem:[%s312 + $0x10] sm:$0xff] %v5186
      %5343 = vst [vmem:[%s312 + $0x18] sm:$0xff] %v5188
      %5344 = vst [vmem:[%s312 + $0x20] sm:$0xff] %v5192
      %5345 = vst [vmem:[%s312 + $0x28] sm:$0xff] %v5194
      %5346 = vst [vmem:[%s312 + $0x30] sm:$0xff] %v5196
      %5347 = vst [vmem:[%s312 + $0x38] sm:$0xff] %v5198
      %5348 = vst [vmem:[%s312 + $0x40] sm:$0xff] %v5202
      %5349 = vst [vmem:[%s312 + $0x48] sm:$0xff] %v5204
      %5350 = vst [vmem:[%s312 + $0x50] sm:$0xff] %v5206
      %5351 = vst [vmem:[%s312 + $0x58] sm:$0xff] %v5208
      %5352 = vst [vmem:[%s312 + $0x60] sm:$0xff] %v5212
      %5353 = vst [vmem:[%s312 + $0x68] sm:$0xff] %v5214
      %5354 = vst [vmem:[%s312 + $0x70] sm:$0xff] %v5216
      %5355 = vst [vmem:[%s312 + $0x78] sm:$0xff] %v5218
      %5356 = vst [vmem:[%s312 + $0x80] sm:$0xff] %v5222
      %5357 = vst [vmem:[%s312 + $0x88] sm:$0xff] %v5224
      %5358 = vst [vmem:[%s312 + $0x90] sm:$0xff] %v5226
      %5359 = vst [vmem:[%s312 + $0x98] sm:$0xff] %v5228
      %5360 = vst [vmem:[%s312 + $0xa0] sm:$0xff] %v5232
      %5361 = vst [vmem:[%s312 + $0xa8] sm:$0xff] %v5234
      %5362 = vst [vmem:[%s312 + $0xb0] sm:$0xff] %v5236
      %5363 = vst [vmem:[%s312 + $0xb8] sm:$0xff] %v5238
      %5364 = vst [vmem:[%s312 + $0xc0] sm:$0xff] %v5242
      %5365 = vst [vmem:[%s312 + $0xc8] sm:$0xff] %v5244
      %5366 = vst [vmem:[%s312 + $0xd0] sm:$0xff] %v5246
      %5367 = vst [vmem:[%s312 + $0xd8] sm:$0xff] %v5248
      %5368 = vst [vmem:[%s312 + $0xe0] sm:$0xff] %v5252
      %5369 = vst [vmem:[%s312 + $0xe8] sm:$0xff] %v5254
      %5370 = vst [vmem:[%s312 + $0xf0] sm:$0xff] %v5256
      %5371 = vst [vmem:[%s312 + $0xf8] sm:$0xff] %v5258
      %5372 = vst [vmem:[%s312 + $0x100] sm:$0xff] %v5262
      %5373 = vst [vmem:[%s312 + $0x108] sm:$0xff] %v5264
      %5374 = vst [vmem:[%s312 + $0x110] sm:$0xff] %v5266
      %5375 = vst [vmem:[%s312 + $0x118] sm:$0xff] %v5268
      %5376 = vst [vmem:[%s312 + $0x120] sm:$0xff] %v5272
      %5377 = vst [vmem:[%s312 + $0x128] sm:$0xff] %v5274
      %5378 = vst [vmem:[%s312 + $0x130] sm:$0xff] %v5276
      %5379 = vst [vmem:[%s312 + $0x138] sm:$0xff] %v5278
      %5380 = vst [vmem:[%s312 + $0x140] sm:$0xff] %v5282
      %5381 = vst [vmem:[%s312 + $0x148] sm:$0xff] %v5284
      %5382 = vst [vmem:[%s312 + $0x150] sm:$0xff] %v5286
      %5383 = vst [vmem:[%s312 + $0x158] sm:$0xff] %v5288
      %5384 = vst [vmem:[%s312 + $0x160] sm:$0xff] %v5292
      %5385 = vst [vmem:[%s312 + $0x168] sm:$0xff] %v5294
      %5386 = vst [vmem:[%s312 + $0x170] sm:$0xff] %v5296
      %5387 = vst [vmem:[%s312 + $0x178] sm:$0xff] %v5298
      %5388 = vst [vmem:[%s312 + $0x180] sm:$0xff] %v5302
      %5389 = vst [vmem:[%s312 + $0x188] sm:$0xff] %v5304
      %5390 = vst [vmem:[%s312 + $0x190] sm:$0xff] %v5306
      %5391 = vst [vmem:[%s312 + $0x198] sm:$0xff] %v5308
      %5392 = vst [vmem:[%s312 + $0x1a0] sm:$0xff] %v5312
      %5393 = vst [vmem:[%s312 + $0x1a8] sm:$0xff] %v5314
      %5394 = vst [vmem:[%s312 + $0x1b0] sm:$0xff] %v5316
      %5395 = vst [vmem:[%s312 + $0x1b8] sm:$0xff] %v5318
      %5396 = vst [vmem:[%s312 + $0x1c0] sm:$0xff] %v5322
      %5397 = vst [vmem:[%s312 + $0x1c8] sm:$0xff] %v5324
      %5398 = vst [vmem:[%s312 + $0x1d0] sm:$0xff] %v5326
      %5399 = vst [vmem:[%s312 + $0x1d8] sm:$0xff] %v5328
      %5400 = vst [vmem:[%s312 + $0x1e0] sm:$0xff] %v5332
      %5401 = vst [vmem:[%s312 + $0x1e8] sm:$0xff] %v5334
      %5402 = vst [vmem:[%s312 + $0x1f0] sm:$0xff] %v5336
      %5403 = vst [vmem:[%s312 + $0x1f8] sm:$0xff] %v5338
      %p5404 = scmp.lt.s32.totalorder %s20, 1
      %s5405 = scalar_select %p5404, %s20, 1
      %s5406 = smul.addr %s5405, 64
      %s5407 = smul.addr %s5406, 8
      %s5408 = scalar_lea.vmem %s9, %s5407
      // Predicated region
      $region61: #{temblock_forward.1} parent=55 // pred_check
        %p5409 = pneg %p227
      $region62: #{temblock_forward.1} parent=55 // pred_check_branch
        %5411 = sbr.rel (%p5409) target = $region64
      $region63: #{temblock_forward.1} parent=55 // pred_region
        _
      $region64: #{temblock_forward.1} parent=55 // pred_fallthru
        _
    $region56: #{temblock_forward.1} parent=5 // pred_fallthru
      _
    %p5412 = scmp.le.s32.totalorder 2, %s15
    // Predicated region
    $region65: #{temblock_forward.1} parent=5 // pred_check
      %p5413 = pneg %p5412
    $region66: #{temblock_forward.1} parent=5 // pred_check_branch
      %5415 = sbr.rel (%p5413) target = $region68
    $region67: #{temblock_forward.1} parent=5 // pred_region
      %s5416 = ssub.s32 %s15, 2
      // Predicated region
      $region69: #{temblock_forward.1} parent=67 // pred_check
        %p5417 = pneg %p233
      $region70: #{temblock_forward.1} parent=67 // pred_check_branch
        %5419 = sbr.rel (%p5417) target = $region72
      $region71: #{temblock_forward.1} parent=67 // pred_region
        %p5420 = scmp.lt.s32.totalorder %s21, 1
        %s5421 = scalar_select %p5420, %s21, 1
        %s5422 = smul.addr %s5421, 64
        %s5423 = smul.addr %s5422, 8
        %s5424 = scalar_lea.vmem %s9, %s5423
      $region72: #{temblock_forward.1} parent=67 // pred_fallthru
        _
    $region68: #{temblock_forward.1} parent=5 // pred_fallthru
      _
  $region6: #{temblock_forward.1} parent=0 // loop_footer
    %s19 = sadd.s32 1, %s15
  $region7: #{temblock_forward.1} parent=0 // loop_footer_branch
    %14 = sbr.rel target = $region3
  $region8: #{temblock_forward.1} parent=0 // loop_exit
    _

</llo_original>
